<compile_context>
chip_gen: v5e
topology: v5e:2x2
jax: 0.10.0
libtpu: 0.0.40
codegen_flags: <defaults>
</compile_context>

<pallas_src>
import jax
import jax.numpy as jnp
from jax import lax
from jax.experimental import pallas as pl
from jax.experimental.pallas import tpu as pltpu


def hsi_prior_kernel(x_hwc_ref, x_cm_ref, w1_ref, b1_ref, w23t_ref, w3t_ref,
                     bf_ref, out_ref, xpad_ref, h1pad_ref):
    # x_hwc_ref : (1, H, W, Cin)   channel-minor view (padded conv input build)
    # x_cm_ref  : (1, Cin, H*W)    channel-major, lane-dense (residual path)
    # w1_ref    : (9*Cp, F)        conv1 weights, tap-major, Cin zero-padded to Cp
    # b1_ref    : (1, F)
    # w23t_ref  : (Cin, 9*Fp)      (W2 @ W3) folded weights, transposed, F->Fp pad
    # w3t_ref   : (Cin, Cout)      W3^T (residual path)
    # bf_ref    : (Cin, 1)         folded bias  b2 @ W3 + b3
    # out_ref   : (1, Cin, H*W)    lane-dense output block (flattened NCHW)
    _, H, W, Cin = x_hwc_ref.shape
    F = w1_ref.shape[1]
    Cp = xpad_ref.shape[-1]
    Fp = h1pad_ref.shape[-1]
    Cout = w3t_ref.shape[1]
    HW = H * W
    f32 = jnp.float32
    dn_bt = (((1,), (1,)), ((), ()))          # A contracted with B's last dim (A @ B^T)

    # ---- zero SAME-padding (pad=1) built in VMEM ---------------------------
    # Full-buffer zero each step: the per-tap dots read all Cp lanes, so the
    # padded channel lanes must be zero (and finite) before every step.
    xpad_ref[...] = jnp.zeros_like(xpad_ref)
    xpad_ref[1:1 + H, 1:1 + W, 0:Cin] = x_hwc_ref[0].astype(f32)

    # ---- spatial_1: 3x3 conv (Cin -> F) as 9 accumulating MXU dots ----------
    # Shifted slices of xpad are fed straight into the dot (no im2col buffer).
    acc1 = jnp.zeros((HW, F), f32)
    for k in range(9):
        ky, kx = divmod(k, 3)
        patch = xpad_ref[ky:ky + H, kx:kx + W, :].reshape(HW, Cp)
        w1_k = w1_ref[k * Cp:(k + 1) * Cp, :]                  # (Cp, F)
        acc1 = acc1 + jnp.dot(patch, w1_k, preferred_element_type=f32)
    h1 = jnp.maximum(acc1 + b1_ref[...], 0.0)                  # bias + relu

    # ---- zero-padded h1 for spatial_2 ---------------------------------------
    h1pad_ref[...] = jnp.zeros_like(h1pad_ref)
    h1pad_ref[1:1 + H, 1:1 + W, 0:F] = h1.reshape(H, W, F)

    # ---- spatial_2 folded with the 1x1 spectral conv ------------------------
    # Computed transposed, (Cin, HW), so the final store is lane-dense.
    acc2 = jnp.zeros((Cin, HW), f32)
    for k in range(9):
        ky, kx = divmod(k, 3)
        patch = h1pad_ref[ky:ky + H, kx:kx + W, :].reshape(HW, Fp)
        wk = w23t_ref[:, k * Fp:(k + 1) * Fp]                  # (Cin, Fp), lane-dense
        acc2 = acc2 + lax.dot_general(wk, patch, dn_bt,
                                      preferred_element_type=f32)

    # residual path through the 1x1 conv on the VPU (K = Cout = 4):
    #   res[d, p] = sum_c W3[c, d] * x[c, p]
    x_cm = x_cm_ref[0].astype(f32)                             # (Cout, HW)
    res = jnp.zeros((Cin, HW), f32)
    for c in range(Cout):
        res = res + w3t_ref[:, c:c + 1] * x_cm[c:c + 1, :]     # (Cin,1)*(1,HW)

    y_t = acc2 + res + bf_ref[...]                             # (Cin, HW)
    out_ref[0] = y_t.astype(out_ref.dtype)


def _round_up(v, m):
    return (v + m - 1) // m * m


def hsi_prior_block(x, params):
    """x: (N, Cin, H, W) NCHW (PyTorch layout).

    params = (w1, b1, w2, b2, w3, b3) in HWIO:
      w1: (3,3,Cin,F)   b1: (F,)
      w2: (3,3,F,Cout)  b2: (Cout,)
      w3: (1,1,Cout,Cin) b3: (Cin,)
    Returns y: (N, Cin, H, W).
    """
    w1, b1, w2, b2, w3, b3 = params
    N, Cin, H, W = x.shape
    F = w1.shape[-1]
    Cout = w2.shape[-1]
    assert Cout == Cin, "residual add requires output_ch == input_ch"

    lane = 128
    Cp = _round_up(Cin, lane)
    Fp = _round_up(F, lane)
    HW = H * W
    f32 = jnp.float32

    # conv1 weights: zero-pad Cin->Cp, tap-major rows (k = ky*3 + kx).
    w1p = jnp.pad(w1.astype(f32),
                  ((0, 0), (0, 0), (0, Cp - Cin), (0, 0))).reshape(9 * Cp, F)
    # fold conv2 with the 1x1 spectral conv: w23[ky,kx,f,d] = sum_c w2*w3.
    w3m = w3.reshape(Cout, Cin).astype(f32)
    w23 = jnp.einsum('hwfc,cd->hwfd', w2.astype(f32), w3m)          # (3,3,F,Cin)
    w23p = jnp.pad(w23, ((0, 0), (0, 0), (0, Fp - F), (0, 0)))      # (3,3,Fp,Cin)
    w23t = jnp.transpose(w23p, (3, 0, 1, 2)).reshape(Cin, 9 * Fp)   # lane-dense
    w3t = w3m.T                                                     # (Cin, Cout)
    bf = (b2.astype(f32) @ w3m + b3.astype(f32)).reshape(Cin, 1)    # folded bias
    b1r = b1.astype(f32).reshape(1, F)

    # Two views of x: channel-major (lane-dense, free reshape of NCHW) and the
    # small channel-minor NHWC view used to build the padded conv input.
    x_cm = x.reshape(N, Cin, HW)
    x_hwc = jnp.transpose(x, (0, 2, 3, 1))

    # True (de-padded) work for the XLA scheduler.
    flops = N * (2 * HW * 9 * Cin * F          # conv1
                 + 2 * HW * 9 * F * Cout       # conv2 (folded)
                 + 2 * HW * Cout * Cin)        # residual @ W3
    bytes_accessed = 4 * (2 * N * HW * Cin       # x (both views)
                          + N * Cin * HW         # y
                          + w1p.size + w23t.size + w3t.size + bf.size + F)

    y_cm = pl.pallas_call(
        hsi_prior_kernel,
        out_shape=jax.ShapeDtypeStruct((N, Cin, HW), x.dtype),
        grid_spec=pltpu.PrefetchScalarGridSpec(
            num_scalar_prefetch=0,
            grid=(N,),
            in_specs=[
                pl.BlockSpec((1, H, W, Cin), lambda n: (n, 0, 0, 0)),
                pl.BlockSpec((1, Cin, HW), lambda n: (n, 0, 0)),
                pl.BlockSpec((9 * Cp, F), lambda n: (0, 0)),
                pl.BlockSpec((1, F), lambda n: (0, 0)),
                pl.BlockSpec((Cin, 9 * Fp), lambda n: (0, 0)),
                pl.BlockSpec((Cin, Cout), lambda n: (0, 0)),
                pl.BlockSpec((Cin, 1), lambda n: (0, 0)),
            ],
            out_specs=pl.BlockSpec((1, Cin, HW), lambda n: (n, 0, 0)),
            scratch_shapes=[
                pltpu.VMEM((H + 2, W + 2, Cp), jnp.float32),   # zero-padded x
                pltpu.VMEM((H + 2, W + 2, Fp), jnp.float32),   # zero-padded h1
            ],
        ),
        compiler_params=pltpu.CompilerParams(
            dimension_semantics=("parallel",)),
        cost_estimate=pl.CostEstimate(
            flops=flops, transcendentals=0, bytes_accessed=bytes_accessed),
    )(x_hwc, x_cm, w1p, b1r, w23t, w3t, bf)

    return y_cm.reshape(N, Cin, H, W)


def reference_forward(x, params):
    """Pure-JAX reference matching the PyTorch module (activation='relu')."""
    w1, b1, w2, b2, w3, b3 = params
    xh = jnp.transpose(x, (0, 2, 3, 1))          # NCHW -> NHWC
    dn = ("NHWC", "HWIO", "NHWC")
    h = lax.conv_general_dilated(xh, w1, (1, 1), "SAME", dimension_numbers=dn) + b1
    h = jnp.maximum(h, 0.0)
    h = lax.conv_general_dilated(h, w2, (1, 1), "SAME", dimension_numbers=dn) + b2
    s = h + xh
    y = lax.conv_general_dilated(s, w3, (1, 1), "SAME", dimension_numbers=dn) + b3
    return jnp.transpose(y, (0, 3, 1, 2))        # NHWC -> NCHW


def make_params(key, input_ch, output_ch, feature):
    ks = jax.random.split(key, 6)
    w1 = jax.random.normal(ks[0], (3, 3, input_ch, feature), jnp.float32) * 0.1
    b1 = jax.random.normal(ks[1], (feature,), jnp.float32) * 0.05
    w2 = jax.random.normal(ks[2], (3, 3, feature, output_ch), jnp.float32) * 0.1
    b2 = jax.random.normal(ks[3], (output_ch,), jnp.float32) * 0.05
    w3 = jax.random.normal(ks[4], (1, 1, output_ch, input_ch), jnp.float32) * 0.1
    b3 = jax.random.normal(ks[5], (input_ch,), jnp.float32) * 0.05
    return (w1, b1, w2, b2, w3, b3)


if __name__ == "__main__":
    N, H, W = 2, 16, 16
    input_ch = output_ch = 4     # residual add requires input_ch == output_ch
    feature = 64                 # module default

    key = jax.random.PRNGKey(0)
    kx, kp = jax.random.split(key)
    x = jax.random.normal(kx, (N, input_ch, H, W), jnp.float32)   # NCHW
    params = make_params(kp, input_ch, output_ch, feature)

    y = hsi_prior_block(x, params)
    y = jax.block_until_ready(y)

    y_ref = jax.block_until_ready(reference_forward(x, params))
    assert y.shape == (N, input_ch, H, W)
    assert jnp.allclose(y, y_ref, atol=1e-4, rtol=1e-4), (
        float(jnp.max(jnp.abs(y - y_ref))))

    print("KERNEL_OK")
</pallas_src>

<mosaic_0001>
module attributes {stable_mosaic.version = 11 : i64} {
  func.func @hsi_prior_kernel(%arg0: i32, %arg1: memref<1x16x16x4xf32, #tpu.memory_space<vmem>>, %arg2: memref<1x4x256xf32, #tpu.memory_space<vmem>>, %arg3: memref<1152x64xf32, #tpu.memory_space<vmem>>, %arg4: memref<1x64xf32, #tpu.memory_space<vmem>>, %arg5: memref<4x1152xf32, #tpu.memory_space<vmem>>, %arg6: memref<4x4xf32, #tpu.memory_space<vmem>>, %arg7: memref<4x1xf32, #tpu.memory_space<vmem>>, %arg8: memref<1x4x256xf32, #tpu.memory_space<vmem>>, %arg9: memref<18x18x128xf32, #tpu.memory_space<vmem>>, %arg10: memref<18x18x128xf32, #tpu.memory_space<vmem>>) attributes {dimension_semantics = [#tpu.dimension_semantics<parallel>], iteration_bounds = array<i64: 2>, scalar_prefetch = 0 : i64, scratch_operands = 2 : i64, tpu.core_type = #tpu.core_type<tc>, window_params = [{transform_indices = @transform_0, window_bounds = array<i64: 1, 16, 16, 4>}, {transform_indices = @transform_1, window_bounds = array<i64: 1, 4, 256>}, {pipeline_mode = #tpu.pipeline_mode<synchronous>, transform_indices = @transform_2, window_bounds = array<i64: 1152, 64>}, {pipeline_mode = #tpu.pipeline_mode<synchronous>, transform_indices = @transform_3, window_bounds = array<i64: 1, 64>}, {pipeline_mode = #tpu.pipeline_mode<synchronous>, transform_indices = @transform_4, window_bounds = array<i64: 4, 1152>}, {pipeline_mode = #tpu.pipeline_mode<synchronous>, transform_indices = @transform_5, window_bounds = array<i64: 4, 4>}, {pipeline_mode = #tpu.pipeline_mode<synchronous>, transform_indices = @transform_6, window_bounds = array<i64: 4, 1>}, {transform_indices = @transform_7, window_bounds = array<i64: 1, 4, 256>}]} {
    %cst = arith.constant 0.000000e+00 : f32
    %0 = vector.broadcast %cst : f32 to vector<18x18x128xf32>
    %c0 = arith.constant 0 : index
    %c0_0 = arith.constant 0 : index
    %c0_1 = arith.constant 0 : index
    %1 = vector.load %arg9[%c0, %c0_0, %c0_1] : memref<18x18x128xf32, #tpu.memory_space<vmem>>, vector<18x18x128xf32>
    tpu.vector_store %arg9[%c0, %c0_0, %c0_1], %0 {strides = array<i32>} : memref<18x18x128xf32, #tpu.memory_space<vmem>>, vector<18x18x128xf32>,
    %c0_2 = arith.constant 0 : index
    %c0_3 = arith.constant 0 : index
    %c0_4 = arith.constant 0 : index
    %c0_5 = arith.constant 0 : index
    %2 = vector.load %arg1[%c0_2, %c0_3, %c0_4, %c0_5] : memref<1x16x16x4xf32, #tpu.memory_space<vmem>>, vector<1x16x16x4xf32>
    %3 = vector.shape_cast %2 : vector<1x16x16x4xf32> to vector<16x16x4xf32>
    %c1 = arith.constant 1 : index
    %c1_6 = arith.constant 1 : index
    %c0_7 = arith.constant 0 : index
    %4 = vector.load %arg9[%c1, %c1_6, %c0_7] : memref<18x18x128xf32, #tpu.memory_space<vmem>>, vector<16x16x4xf32>
    tpu.vector_store %arg9[%c1, %c1_6, %c0_7], %3 {strides = array<i32>} : memref<18x18x128xf32, #tpu.memory_space<vmem>>, vector<16x16x4xf32>,
    %cst_8 = arith.constant 0.000000e+00 : f32
    %5 = vector.broadcast %cst_8 : f32 to vector<256x64xf32>
    %c0_9 = arith.constant 0 : index
    %c0_10 = arith.constant 0 : index
    %c0_11 = arith.constant 0 : index
    %6 = vector.load %arg9[%c0_9, %c0_10, %c0_11] : memref<18x18x128xf32, #tpu.memory_space<vmem>>, vector<16x16x128xf32>
    %7 = vector.shape_cast %6 : vector<16x16x128xf32> to vector<256x128xf32>
    %c0_12 = arith.constant 0 : index
    %c0_13 = arith.constant 0 : index
    %8 = vector.load %arg3[%c0_12, %c0_13] : memref<1152x64xf32, #tpu.memory_space<vmem>>, vector<128x64xf32>
    %cst_14 = arith.constant dense<0.000000e+00> : vector<256x64xf32>
    %9 = tpu.matmul %7, %8, %cst_14 {dimension_numbers = #tpu.dot_dimension_numbers<[1], [0], [0], [1], [0, 0, 1, 1], [], []>} : vector<256x128xf32>, vector<128x64xf32>, vector<256x64xf32> -> vector<256x64xf32>
    %10 = arith.addf %5, %9 : vector<256x64xf32>
    %c0_15 = arith.constant 0 : index
    %c1_16 = arith.constant 1 : index
    %c0_17 = arith.constant 0 : index
    %11 = vector.load %arg9[%c0_15, %c1_16, %c0_17] : memref<18x18x128xf32, #tpu.memory_space<vmem>>, vector<16x16x128xf32>
    %12 = vector.shape_cast %11 : vector<16x16x128xf32> to vector<256x128xf32>
    %c128 = arith.constant 128 : index
    %c0_18 = arith.constant 0 : index
    %13 = vector.load %arg3[%c128, %c0_18] : memref<1152x64xf32, #tpu.memory_space<vmem>>, vector<128x64xf32>
    %cst_19 = arith.constant dense<0.000000e+00> : vector<256x64xf32>
    %14 = tpu.matmul %12, %13, %cst_19 {dimension_numbers = #tpu.dot_dimension_numbers<[1], [0], [0], [1], [0, 0, 1, 1], [], []>} : vector<256x128xf32>, vector<128x64xf32>, vector<256x64xf32> -> vector<256x64xf32>
    %15 = arith.addf %10, %14 : vector<256x64xf32>
    %c0_20 = arith.constant 0 : index
    %c2 = arith.constant 2 : index
    %c0_21 = arith.constant 0 : index
    %16 = vector.load %arg9[%c0_20, %c2, %c0_21] : memref<18x18x128xf32, #tpu.memory_space<vmem>>, vector<16x16x128xf32>
    %17 = vector.shape_cast %16 : vector<16x16x128xf32> to vector<256x128xf32>
    %c256 = arith.constant 256 : index
    %c0_22 = arith.constant 0 : index
    %18 = vector.load %arg3[%c256, %c0_22] : memref<1152x64xf32, #tpu.memory_space<vmem>>, vector<128x64xf32>
    %cst_23 = arith.constant dense<0.000000e+00> : vector<256x64xf32>
    %19 = tpu.matmul %17, %18, %cst_23 {dimension_numbers = #tpu.dot_dimension_numbers<[1], [0], [0], [1], [0, 0, 1, 1], [], []>} : vector<256x128xf32>, vector<128x64xf32>, vector<256x64xf32> -> vector<256x64xf32>
    %20 = arith.addf %15, %19 : vector<256x64xf32>
    %c1_24 = arith.constant 1 : index
    %c0_25 = arith.constant 0 : index
    %c0_26 = arith.constant 0 : index
    %21 = vector.load %arg9[%c1_24, %c0_25, %c0_26] : memref<18x18x128xf32, #tpu.memory_space<vmem>>, vector<16x16x128xf32>
    %22 = vector.shape_cast %21 : vector<16x16x128xf32> to vector<256x128xf32>
    %c384 = arith.constant 384 : index
    %c0_27 = arith.constant 0 : index
    %23 = vector.load %arg3[%c384, %c0_27] : memref<1152x64xf32, #tpu.memory_space<vmem>>, vector<128x64xf32>
    %cst_28 = arith.constant dense<0.000000e+00> : vector<256x64xf32>
    %24 = tpu.matmul %22, %23, %cst_28 {dimension_numbers = #tpu.dot_dimension_numbers<[1], [0], [0], [1], [0, 0, 1, 1], [], []>} : vector<256x128xf32>, vector<128x64xf32>, vector<256x64xf32> -> vector<256x64xf32>
    %25 = arith.addf %20, %24 : vector<256x64xf32>
    %c1_29 = arith.constant 1 : index
    %c1_30 = arith.constant 1 : index
    %c0_31 = arith.constant 0 : index
    %26 = vector.load %arg9[%c1_29, %c1_30, %c0_31] : memref<18x18x128xf32, #tpu.memory_space<vmem>>, vector<16x16x128xf32>
    %27 = vector.shape_cast %26 : vector<16x16x128xf32> to vector<256x128xf32>
    %c512 = arith.constant 512 : index
    %c0_32 = arith.constant 0 : index
    %28 = vector.load %arg3[%c512, %c0_32] : memref<1152x64xf32, #tpu.memory_space<vmem>>, vector<128x64xf32>
    %cst_33 = arith.constant dense<0.000000e+00> : vector<256x64xf32>
    %29 = tpu.matmul %27, %28, %cst_33 {dimension_numbers = #tpu.dot_dimension_numbers<[1], [0], [0], [1], [0, 0, 1, 1], [], []>} : vector<256x128xf32>, vector<128x64xf32>, vector<256x64xf32> -> vector<256x64xf32>
    %30 = arith.addf %25, %29 : vector<256x64xf32>
    %c1_34 = arith.constant 1 : index
    %c2_35 = arith.constant 2 : index
    %c0_36 = arith.constant 0 : index
    %31 = vector.load %arg9[%c1_34, %c2_35, %c0_36] : memref<18x18x128xf32, #tpu.memory_space<vmem>>, vector<16x16x128xf32>
    %32 = vector.shape_cast %31 : vector<16x16x128xf32> to vector<256x128xf32>
    %c640 = arith.constant 640 : index
    %c0_37 = arith.constant 0 : index
    %33 = vector.load %arg3[%c640, %c0_37] : memref<1152x64xf32, #tpu.memory_space<vmem>>, vector<128x64xf32>
    %cst_38 = arith.constant dense<0.000000e+00> : vector<256x64xf32>
    %34 = tpu.matmul %32, %33, %cst_38 {dimension_numbers = #tpu.dot_dimension_numbers<[1], [0], [0], [1], [0, 0, 1, 1], [], []>} : vector<256x128xf32>, vector<128x64xf32>, vector<256x64xf32> -> vector<256x64xf32>
    %35 = arith.addf %30, %34 : vector<256x64xf32>
    %c2_39 = arith.constant 2 : index
    %c0_40 = arith.constant 0 : index
    %c0_41 = arith.constant 0 : index
    %36 = vector.load %arg9[%c2_39, %c0_40, %c0_41] : memref<18x18x128xf32, #tpu.memory_space<vmem>>, vector<16x16x128xf32>
    %37 = vector.shape_cast %36 : vector<16x16x128xf32> to vector<256x128xf32>
    %c768 = arith.constant 768 : index
    %c0_42 = arith.constant 0 : index
    %38 = vector.load %arg3[%c768, %c0_42] : memref<1152x64xf32, #tpu.memory_space<vmem>>, vector<128x64xf32>
    %cst_43 = arith.constant dense<0.000000e+00> : vector<256x64xf32>
    %39 = tpu.matmul %37, %38, %cst_43 {dimension_numbers = #tpu.dot_dimension_numbers<[1], [0], [0], [1], [0, 0, 1, 1], [], []>} : vector<256x128xf32>, vector<128x64xf32>, vector<256x64xf32> -> vector<256x64xf32>
    %40 = arith.addf %35, %39 : vector<256x64xf32>
    %c2_44 = arith.constant 2 : index
    %c1_45 = arith.constant 1 : index
    %c0_46 = arith.constant 0 : index
    %41 = vector.load %arg9[%c2_44, %c1_45, %c0_46] : memref<18x18x128xf32, #tpu.memory_space<vmem>>, vector<16x16x128xf32>
    %42 = vector.shape_cast %41 : vector<16x16x128xf32> to vector<256x128xf32>
    %c896 = arith.constant 896 : index
    %c0_47 = arith.constant 0 : index
    %43 = vector.load %arg3[%c896, %c0_47] : memref<1152x64xf32, #tpu.memory_space<vmem>>, vector<128x64xf32>
    %cst_48 = arith.constant dense<0.000000e+00> : vector<256x64xf32>
    %44 = tpu.matmul %42, %43, %cst_48 {dimension_numbers = #tpu.dot_dimension_numbers<[1], [0], [0], [1], [0, 0, 1, 1], [], []>} : vector<256x128xf32>, vector<128x64xf32>, vector<256x64xf32> -> vector<256x64xf32>
    %45 = arith.addf %40, %44 : vector<256x64xf32>
    %c2_49 = arith.constant 2 : index
    %c2_50 = arith.constant 2 : index
    %c0_51 = arith.constant 0 : index
    %46 = vector.load %arg9[%c2_49, %c2_50, %c0_51] : memref<18x18x128xf32, #tpu.memory_space<vmem>>, vector<16x16x128xf32>
    %47 = vector.shape_cast %46 : vector<16x16x128xf32> to vector<256x128xf32>
    %c1024 = arith.constant 1024 : index
    %c0_52 = arith.constant 0 : index
    %48 = vector.load %arg3[%c1024, %c0_52] : memref<1152x64xf32, #tpu.memory_space<vmem>>, vector<128x64xf32>
    %cst_53 = arith.constant dense<0.000000e+00> : vector<256x64xf32>
    %49 = tpu.matmul %47, %48, %cst_53 {dimension_numbers = #tpu.dot_dimension_numbers<[1], [0], [0], [1], [0, 0, 1, 1], [], []>} : vector<256x128xf32>, vector<128x64xf32>, vector<256x64xf32> -> vector<256x64xf32>
    %50 = arith.addf %45, %49 : vector<256x64xf32>
    %c0_54 = arith.constant 0 : index
    %c0_55 = arith.constant 0 : index
    %51 = vector.load %arg4[%c0_54, %c0_55] : memref<1x64xf32, #tpu.memory_space<vmem>>, vector<1x64xf32>
    %52 = vector.broadcast %51 : vector<1x64xf32> to vector<256x64xf32>
    %53 = arith.addf %50, %52 : vector<256x64xf32>
    %cst_56 = arith.constant 0.000000e+00 : f32
    %54 = vector.broadcast %cst_56 : f32 to vector<256x64xf32>
    %55 = arith.maximumf %53, %54 : vector<256x64xf32>
    %cst_57 = arith.constant 0.000000e+00 : f32
    %56 = vector.broadcast %cst_57 : f32 to vector<18x18x128xf32>
    %c0_58 = arith.constant 0 : index
    %c0_59 = arith.constant 0 : index
    %c0_60 = arith.constant 0 : index
    %57 = vector.load %arg10[%c0_58, %c0_59, %c0_60] : memref<18x18x128xf32, #tpu.memory_space<vmem>>, vector<18x18x128xf32>
    tpu.vector_store %arg10[%c0_58, %c0_59, %c0_60], %56 {strides = array<i32>} : memref<18x18x128xf32, #tpu.memory_space<vmem>>, vector<18x18x128xf32>,
    %58 = vector.shape_cast %55 : vector<256x64xf32> to vector<16x16x64xf32>
    %c1_61 = arith.constant 1 : index
    %c1_62 = arith.constant 1 : index
    %c0_63 = arith.constant 0 : index
    %59 = vector.load %arg10[%c1_61, %c1_62, %c0_63] : memref<18x18x128xf32, #tpu.memory_space<vmem>>, vector<16x16x64xf32>
    tpu.vector_store %arg10[%c1_61, %c1_62, %c0_63], %58 {strides = array<i32>} : memref<18x18x128xf32, #tpu.memory_space<vmem>>, vector<16x16x64xf32>,
    %cst_64 = arith.constant 0.000000e+00 : f32
    %60 = vector.broadcast %cst_64 : f32 to vector<4x256xf32>
    %c0_65 = arith.constant 0 : index
    %c0_66 = arith.constant 0 : index
    %c0_67 = arith.constant 0 : index
    %61 = vector.load %arg10[%c0_65, %c0_66, %c0_67] : memref<18x18x128xf32, #tpu.memory_space<vmem>>, vector<16x16x128xf32>
    %62 = vector.shape_cast %61 : vector<16x16x128xf32> to vector<256x128xf32>
    %c0_68 = arith.constant 0 : index
    %c0_69 = arith.constant 0 : index
    %63 = vector.load %arg5[%c0_68, %c0_69] : memref<4x1152xf32, #tpu.memory_space<vmem>>, vector<4x128xf32>
    %cst_70 = arith.constant dense<0.000000e+00> : vector<4x256xf32>
    %64 = tpu.matmul %63, %62, %cst_70 {dimension_numbers = #tpu.dot_dimension_numbers<[1], [1], [0], [0], [0, 0, 1, 0], [], []>} : vector<4x128xf32>, vector<256x128xf32>, vector<4x256xf32> -> vector<4x256xf32>
    %65 = arith.addf %60, %64 : vector<4x256xf32>
    %c0_71 = arith.constant 0 : index
    %c1_72 = arith.constant 1 : index
    %c0_73 = arith.constant 0 : index
    %66 = vector.load %arg10[%c0_71, %c1_72, %c0_73] : memref<18x18x128xf32, #tpu.memory_space<vmem>>, vector<16x16x128xf32>
    %67 = vector.shape_cast %66 : vector<16x16x128xf32> to vector<256x128xf32>
    %c0_74 = arith.constant 0 : index
    %c128_75 = arith.constant 128 : index
    %68 = vector.load %arg5[%c0_74, %c128_75] : memref<4x1152xf32, #tpu.memory_space<vmem>>, vector<4x128xf32>
    %cst_76 = arith.constant dense<0.000000e+00> : vector<4x256xf32>
    %69 = tpu.matmul %68, %67, %cst_76 {dimension_numbers = #tpu.dot_dimension_numbers<[1], [1], [0], [0], [0, 0, 1, 0], [], []>} : vector<4x128xf32>, vector<256x128xf32>, vector<4x256xf32> -> vector<4x256xf32>
    %70 = arith.addf %65, %69 : vector<4x256xf32>
    %c0_77 = arith.constant 0 : index
    %c2_78 = arith.constant 2 : index
    %c0_79 = arith.constant 0 : index
    %71 = vector.load %arg10[%c0_77, %c2_78, %c0_79] : memref<18x18x128xf32, #tpu.memory_space<vmem>>, vector<16x16x128xf32>
    %72 = vector.shape_cast %71 : vector<16x16x128xf32> to vector<256x128xf32>
    %c0_80 = arith.constant 0 : index
    %c256_81 = arith.constant 256 : index
    %73 = vector.load %arg5[%c0_80, %c256_81] : memref<4x1152xf32, #tpu.memory_space<vmem>>, vector<4x128xf32>
    %cst_82 = arith.constant dense<0.000000e+00> : vector<4x256xf32>
    %74 = tpu.matmul %73, %72, %cst_82 {dimension_numbers = #tpu.dot_dimension_numbers<[1], [1], [0], [0], [0, 0, 1, 0], [], []>} : vector<4x128xf32>, vector<256x128xf32>, vector<4x256xf32> -> vector<4x256xf32>
    %75 = arith.addf %70, %74 : vector<4x256xf32>
    %c1_83 = arith.constant 1 : index
    %c0_84 = arith.constant 0 : index
    %c0_85 = arith.constant 0 : index
    %76 = vector.load %arg10[%c1_83, %c0_84, %c0_85] : memref<18x18x128xf32, #tpu.memory_space<vmem>>, vector<16x16x128xf32>
    %77 = vector.shape_cast %76 : vector<16x16x128xf32> to vector<256x128xf32>
    %c0_86 = arith.constant 0 : index
    %c384_87 = arith.constant 384 : index
    %78 = vector.load %arg5[%c0_86, %c384_87] : memref<4x1152xf32, #tpu.memory_space<vmem>>, vector<4x128xf32>
    %cst_88 = arith.constant dense<0.000000e+00> : vector<4x256xf32>
    %79 = tpu.matmul %78, %77, %cst_88 {dimension_numbers = #tpu.dot_dimension_numbers<[1], [1], [0], [0], [0, 0, 1, 0], [], []>} : vector<4x128xf32>, vector<256x128xf32>, vector<4x256xf32> -> vector<4x256xf32>
    %80 = arith.addf %75, %79 : vector<4x256xf32>
    %c1_89 = arith.constant 1 : index
    %c1_90 = arith.constant 1 : index
    %c0_91 = arith.constant 0 : index
    %81 = vector.load %arg10[%c1_89, %c1_90, %c0_91] : memref<18x18x128xf32, #tpu.memory_space<vmem>>, vector<16x16x128xf32>
    %82 = vector.shape_cast %81 : vector<16x16x128xf32> to vector<256x128xf32>
    %c0_92 = arith.constant 0 : index
    %c512_93 = arith.constant 512 : index
    %83 = vector.load %arg5[%c0_92, %c512_93] : memref<4x1152xf32, #tpu.memory_space<vmem>>, vector<4x128xf32>
    %cst_94 = arith.constant dense<0.000000e+00> : vector<4x256xf32>
    %84 = tpu.matmul %83, %82, %cst_94 {dimension_numbers = #tpu.dot_dimension_numbers<[1], [1], [0], [0], [0, 0, 1, 0], [], []>} : vector<4x128xf32>, vector<256x128xf32>, vector<4x256xf32> -> vector<4x256xf32>
    %85 = arith.addf %80, %84 : vector<4x256xf32>
    %c1_95 = arith.constant 1 : index
    %c2_96 = arith.constant 2 : index
    %c0_97 = arith.constant 0 : index
    %86 = vector.load %arg10[%c1_95, %c2_96, %c0_97] : memref<18x18x128xf32, #tpu.memory_space<vmem>>, vector<16x16x128xf32>
    %87 = vector.shape_cast %86 : vector<16x16x128xf32> to vector<256x128xf32>
    %c0_98 = arith.constant 0 : index
    %c640_99 = arith.constant 640 : index
    %88 = vector.load %arg5[%c0_98, %c640_99] : memref<4x1152xf32, #tpu.memory_space<vmem>>, vector<4x128xf32>
    %cst_100 = arith.constant dense<0.000000e+00> : vector<4x256xf32>
    %89 = tpu.matmul %88, %87, %cst_100 {dimension_numbers = #tpu.dot_dimension_numbers<[1], [1], [0], [0], [0, 0, 1, 0], [], []>} : vector<4x128xf32>, vector<256x128xf32>, vector<4x256xf32> -> vector<4x256xf32>
    %90 = arith.addf %85, %89 : vector<4x256xf32>
    %c2_101 = arith.constant 2 : index
    %c0_102 = arith.constant 0 : index
    %c0_103 = arith.constant 0 : index
    %91 = vector.load %arg10[%c2_101, %c0_102, %c0_103] : memref<18x18x128xf32, #tpu.memory_space<vmem>>, vector<16x16x128xf32>
    %92 = vector.shape_cast %91 : vector<16x16x128xf32> to vector<256x128xf32>
    %c0_104 = arith.constant 0 : index
    %c768_105 = arith.constant 768 : index
    %93 = vector.load %arg5[%c0_104, %c768_105] : memref<4x1152xf32, #tpu.memory_space<vmem>>, vector<4x128xf32>
    %cst_106 = arith.constant dense<0.000000e+00> : vector<4x256xf32>
    %94 = tpu.matmul %93, %92, %cst_106 {dimension_numbers = #tpu.dot_dimension_numbers<[1], [1], [0], [0], [0, 0, 1, 0], [], []>} : vector<4x128xf32>, vector<256x128xf32>, vector<4x256xf32> -> vector<4x256xf32>
    %95 = arith.addf %90, %94 : vector<4x256xf32>
    %c2_107 = arith.constant 2 : index
    %c1_108 = arith.constant 1 : index
    %c0_109 = arith.constant 0 : index
    %96 = vector.load %arg10[%c2_107, %c1_108, %c0_109] : memref<18x18x128xf32, #tpu.memory_space<vmem>>, vector<16x16x128xf32>
    %97 = vector.shape_cast %96 : vector<16x16x128xf32> to vector<256x128xf32>
    %c0_110 = arith.constant 0 : index
    %c896_111 = arith.constant 896 : index
    %98 = vector.load %arg5[%c0_110, %c896_111] : memref<4x1152xf32, #tpu.memory_space<vmem>>, vector<4x128xf32>
    %cst_112 = arith.constant dense<0.000000e+00> : vector<4x256xf32>
    %99 = tpu.matmul %98, %97, %cst_112 {dimension_numbers = #tpu.dot_dimension_numbers<[1], [1], [0], [0], [0, 0, 1, 0], [], []>} : vector<4x128xf32>, vector<256x128xf32>, vector<4x256xf32> -> vector<4x256xf32>
    %100 = arith.addf %95, %99 : vector<4x256xf32>
    %c2_113 = arith.constant 2 : index
    %c2_114 = arith.constant 2 : index
    %c0_115 = arith.constant 0 : index
    %101 = vector.load %arg10[%c2_113, %c2_114, %c0_115] : memref<18x18x128xf32, #tpu.memory_space<vmem>>, vector<16x16x128xf32>
    %102 = vector.shape_cast %101 : vector<16x16x128xf32> to vector<256x128xf32>
    %c0_116 = arith.constant 0 : index
    %c1024_117 = arith.constant 1024 : index
    %103 = vector.load %arg5[%c0_116, %c1024_117] : memref<4x1152xf32, #tpu.memory_space<vmem>>, vector<4x128xf32>
    %cst_118 = arith.constant dense<0.000000e+00> : vector<4x256xf32>
    %104 = tpu.matmul %103, %102, %cst_118 {dimension_numbers = #tpu.dot_dimension_numbers<[1], [1], [0], [0], [0, 0, 1, 0], [], []>} : vector<4x128xf32>, vector<256x128xf32>, vector<4x256xf32> -> vector<4x256xf32>
    %105 = arith.addf %100, %104 : vector<4x256xf32>
    %c0_119 = arith.constant 0 : index
    %c0_120 = arith.constant 0 : index
    %c0_121 = arith.constant 0 : index
    %106 = vector.load %arg2[%c0_119, %c0_120, %c0_121] : memref<1x4x256xf32, #tpu.memory_space<vmem>>, vector<1x4x256xf32>
    %107 = vector.shape_cast %106 : vector<1x4x256xf32> to vector<4x256xf32>
    %cst_122 = arith.constant 0.000000e+00 : f32
    %108 = vector.broadcast %cst_122 : f32 to vector<4x256xf32>
    %c0_123 = arith.constant 0 : index
    %c0_124 = arith.constant 0 : index
    %109 = vector.load %arg6[%c0_123, %c0_124] : memref<4x4xf32, #tpu.memory_space<vmem>>, vector<4x1xf32>
    %110 = vector.extract_strided_slice %107 {offsets = [0, 0], sizes = [1, 256], strides = [1, 1]} : vector<4x256xf32> to vector<1x256xf32>
    %111 = vector.broadcast %109 : vector<4x1xf32> to vector<4x256xf32>
    %112 = vector.broadcast %110 : vector<1x256xf32> to vector<4x256xf32>
    %113 = arith.mulf %111, %112 : vector<4x256xf32>
    %114 = arith.addf %108, %113 : vector<4x256xf32>
    %c0_125 = arith.constant 0 : index
    %c1_126 = arith.constant 1 : index
    %115 = vector.load %arg6[%c0_125, %c1_126] : memref<4x4xf32, #tpu.memory_space<vmem>>, vector<4x1xf32>
    %116 = vector.extract_strided_slice %107 {offsets = [1, 0], sizes = [1, 256], strides = [1, 1]} : vector<4x256xf32> to vector<1x256xf32>
    %117 = vector.broadcast %115 : vector<4x1xf32> to vector<4x256xf32>
    %118 = vector.broadcast %116 : vector<1x256xf32> to vector<4x256xf32>
    %119 = arith.mulf %117, %118 : vector<4x256xf32>
    %120 = arith.addf %114, %119 : vector<4x256xf32>
    %c0_127 = arith.constant 0 : index
    %c2_128 = arith.constant 2 : index
    %121 = vector.load %arg6[%c0_127, %c2_128] : memref<4x4xf32, #tpu.memory_space<vmem>>, vector<4x1xf32>
    %122 = vector.extract_strided_slice %107 {offsets = [2, 0], sizes = [1, 256], strides = [1, 1]} : vector<4x256xf32> to vector<1x256xf32>
    %123 = vector.broadcast %121 : vector<4x1xf32> to vector<4x256xf32>
    %124 = vector.broadcast %122 : vector<1x256xf32> to vector<4x256xf32>
    %125 = arith.mulf %123, %124 : vector<4x256xf32>
    %126 = arith.addf %120, %125 : vector<4x256xf32>
    %c0_129 = arith.constant 0 : index
    %c3 = arith.constant 3 : index
    %127 = vector.load %arg6[%c0_129, %c3] : memref<4x4xf32, #tpu.memory_space<vmem>>, vector<4x1xf32>
    %128 = vector.extract_strided_slice %107 {offsets = [3, 0], sizes = [1, 256], strides = [1, 1]} : vector<4x256xf32> to vector<1x256xf32>
    %129 = vector.broadcast %127 : vector<4x1xf32> to vector<4x256xf32>
    %130 = vector.broadcast %128 : vector<1x256xf32> to vector<4x256xf32>
    %131 = arith.mulf %129, %130 : vector<4x256xf32>
    %132 = arith.addf %126, %131 : vector<4x256xf32>
    %133 = arith.addf %105, %132 : vector<4x256xf32>
    %c0_130 = arith.constant 0 : index
    %c0_131 = arith.constant 0 : index
    %134 = vector.load %arg7[%c0_130, %c0_131] : memref<4x1xf32, #tpu.memory_space<vmem>>, vector<4x1xf32>
    %135 = vector.broadcast %134 : vector<4x1xf32> to vector<4x256xf32>
    %136 = arith.addf %133, %135 : vector<4x256xf32>
    %c0_132 = arith.constant 0 : index
    %c0_133 = arith.constant 0 : index
    %c0_134 = arith.constant 0 : index
    %137 = vector.load %arg8[%c0_132, %c0_133, %c0_134] : memref<1x4x256xf32, #tpu.memory_space<vmem>>, vector<1x4x256xf32>
    %138 = vector.shape_cast %137 : vector<1x4x256xf32> to vector<4x256xf32>
    %139 = vector.shape_cast %136 : vector<4x256xf32> to vector<1x4x256xf32>
    tpu.vector_store %arg8[%c0_132, %c0_133, %c0_134], %139 {strides = array<i32>} : memref<1x4x256xf32, #tpu.memory_space<vmem>>, vector<1x4x256xf32>,
    return
  }
  func.func @transform_0(%arg0: i32) -> (i32, i32, i32, i32) {
    %c0_i32 = arith.constant 0 : i32
    %c0_i32_0 = arith.constant 0 : i32
    %c0_i32_1 = arith.constant 0 : i32
    %c0_i32_2 = arith.constant 0 : i32
    return %arg0, %c0_i32, %c0_i32_0, %c0_i32_1 : i32, i32, i32, i32
  }
  func.func @transform_1(%arg0: i32) -> (i32, i32, i32) {
    %c0_i32 = arith.constant 0 : i32
    %c0_i32_0 = arith.constant 0 : i32
    %c0_i32_1 = arith.constant 0 : i32
    return %arg0, %c0_i32, %c0_i32_0 : i32, i32, i32
  }
  func.func @transform_2(%arg0: i32) -> (i32, i32) {
    %c0_i32 = arith.constant 0 : i32
    %c0_i32_0 = arith.constant 0 : i32
    %c0_i32_1 = arith.constant 0 : i32
    return %c0_i32, %c0_i32_0 : i32, i32
  }
  func.func @transform_3(%arg0: i32) -> (i32, i32) {
    %c0_i32 = arith.constant 0 : i32
    %c0_i32_0 = arith.constant 0 : i32
    %c0_i32_1 = arith.constant 0 : i32
    return %c0_i32, %c0_i32_0 : i32, i32
  }
  func.func @transform_4(%arg0: i32) -> (i32, i32) {
    %c0_i32 = arith.constant 0 : i32
    %c0_i32_0 = arith.constant 0 : i32
    %c0_i32_1 = arith.constant 0 : i32
    return %c0_i32, %c0_i32_0 : i32, i32
  }
  func.func @transform_5(%arg0: i32) -> (i32, i32) {
    %c0_i32 = arith.constant 0 : i32
    %c0_i32_0 = arith.constant 0 : i32
    %c0_i32_1 = arith.constant 0 : i32
    return %c0_i32, %c0_i32_0 : i32, i32
  }
  func.func @transform_6(%arg0: i32) -> (i32, i32) {
    %c0_i32 = arith.constant 0 : i32
    %c0_i32_0 = arith.constant 0 : i32
    %c0_i32_1 = arith.constant 0 : i32
    return %c0_i32, %c0_i32_0 : i32, i32
  }
  func.func @transform_7(%arg0: i32) -> (i32, i32, i32) {
    %c0_i32 = arith.constant 0 : i32
    %c0_i32_0 = arith.constant 0 : i32
    %c0_i32_1 = arith.constant 0 : i32
    return %arg0, %c0_i32, %c0_i32_0 : i32, i32, i32
  }
}

</mosaic_0001>

<llo_original>
// kernel: tpu_custom_call.1
$region0: #{tpu_custom_call.1}
  #allocation0 [shape = 'u32[]', space=smem, size = 0x4, offset = 0x4, fixed_abs, tag = 'smem constant byte address 0x4 - core index']
  #allocation1 [shape = 'u32[72,128]{1,0:T(1,128)}', space=vmem, size = 0x9000, scoped, tag = 'internal scratch']
  #allocation2 [shape = 'f32[18,18,128]{2,1,0:T(8,128)}', space=vmem, size = 0x36000, scoped, tag = 'scratch operand']
  #allocation3 [shape = 'f32[18,18,128]{2,1,0:T(8,128)}', space=vmem, size = 0x36000, scoped, tag = 'scratch operand']
  %s0 = inlined_call_operand.vmem [shape: f32[2,16,16,4], index: 0, kind: input, shape index: {}]
  %s1 = inlined_call_operand.vmem [shape: f32[2,4,256], index: 1, kind: input, shape index: {}]
  %s2 = inlined_call_operand.vmem [shape: f32[1152,64], index: 2, kind: input, shape index: {}]
  %s3 = inlined_call_operand.vmem [shape: f32[1,64], index: 3, kind: input, shape index: {}]
  %s4 = inlined_call_operand.vmem [shape: f32[4,1152], index: 4, kind: input, shape index: {}]
  %s5 = inlined_call_operand.vmem [shape: f32[4,4], index: 5, kind: input, shape index: {}]
  %s6 = inlined_call_operand.vmem [shape: f32[4,1], index: 6, kind: input, shape index: {}]
  %s7 = inlined_call_operand.hbm [shape: f32[2,4,256], index: 7, kind: output, shape index: {}]
  %s8 = sld [smem:[#allocation0]]
  $region61: #{tpu_custom_call.1} parent=0
    _
  %s10 = ssub.s32 1, %s8
  %s11 = scalar_select 0, %s10, %s8
  $region1: #{tpu_custom_call.1} parent=0
    #allocation4 [shape = 'u8[8192]{0}', space=vmem, size = 0x2000, scoped, tag = 'output window, operand 0']
    #allocation5 [shape = 's32[2]{0}', space=sflag, size = 0x8, scoped, tag = 'scoped memory for tpu_custom_call.1']
    %12 = vsyncpa [#allocation5], 0
    %s13 = scalar_lea.sflag [#allocation5], 1
    %14 = vsyncpa %s13, 0
    loop: start=0, step=1, limit=4
    $region2: #{tpu_custom_call.1} parent=1 // loop_pre_header
      _
    $region3: #{tpu_custom_call.1} parent=1 // loop_header
      %s16 = sphi 0, %s20
      %p17 = scmp.ge.s32.totalorder %s16, 4
      %s26 = sphi 0, %s28
      %s29 = sphi 0, %s26
      %s30 = sphi 0, %s29
      %s46 = sphi 0, %s30
      %s52 = sphi 0, %s54
      %s55 = sphi 0, %s52
      %s56 = sphi 0, %s55
      %s72 = sphi 0, %s56
      %s76 = sphi 0, %s76
      %s78 = sphi 0, %s76
      %s79 = sphi 0, %s78
      %s93 = sphi 0, %s79
      %s97 = sphi 0, %s97
      %s99 = sphi 0, %s97
      %s100 = sphi 0, %s99
      %s114 = sphi 0, %s100
      %s118 = sphi 0, %s118
      %s120 = sphi 0, %s118
      %s121 = sphi 0, %s120
      %s135 = sphi 0, %s121
      %s139 = sphi 0, %s139
      %s141 = sphi 0, %s139
      %s142 = sphi 0, %s141
      %s156 = sphi 0, %s142
      %s160 = sphi 0, %s160
      %s162 = sphi 0, %s160
      %s163 = sphi 0, %s162
      %s177 = sphi 0, %s163
      %s183 = sphi 0, %s185
      %s186 = sphi 0, %s183
      %s187 = sphi 0, %s186
      %s203 = sphi 0, %s187
    $region4: #{tpu_custom_call.1} parent=1 // loop_header_branch
      %19 = sbr.rel (%p17) target = $region8
    $region5: #{tpu_custom_call.1} parent=1 // loop_body
      %s21 = ssub.s32 %s16, 1
      %s22 = ssub.s32 %s16, 2
      %s23 = sadd.s32 %s16, 1
      %s24 = ssub.s32 %s16, %s23
      %p25 = scmp.eq.s32.totalorder %s24, 0
      %s27 = sadd.s32 %s26, 1
      %s28 = scalar_select %p25, %s26, %s27
      %p31 = pneg %p25
      %p32 = scmp.eq.s32.totalorder %s16, 1
      %p33 = por %p31, %p32
      %p34 = scmp.ne.s32.totalorder %s26, %s29
      %p35 = scmp.eq.s32.totalorder %s16, 0
      %p36 = por %p34, %p35
      %p37 = scmp.ne.s32.totalorder %s26, %s29
      %p38 = scmp.eq.s32.totalorder %s21, 1
      %p39 = por %p37, %p38
      %p40 = scmp.ne.s32.totalorder %s29, %s30
      %p41 = scmp.eq.s32.totalorder %s21, 0
      %p42 = por %p40, %p41
      %p43 = scmp.ne.s32.totalorder %s29, %s30
      %p44 = scmp.eq.s32.totalorder %s22, 1
      %p45 = por %p43, %p44
      %p47 = scmp.ne.s32.totalorder %s30, %s46
      %p48 = scmp.eq.s32.totalorder %s22, 0
      %p49 = por %p47, %p48
      %s50 = ssub.s32 %s16, %s23
      %p51 = scmp.eq.s32.totalorder %s50, 0
      %s53 = sadd.s32 %s52, 1
      %s54 = scalar_select %p51, %s52, %s53
      %p57 = pneg %p51
      %p58 = scmp.eq.s32.totalorder %s16, 1
      %p59 = por %p57, %p58
      %p60 = scmp.ne.s32.totalorder %s52, %s55
      %p61 = scmp.eq.s32.totalorder %s16, 0
      %p62 = por %p60, %p61
      %p63 = scmp.ne.s32.totalorder %s52, %s55
      %p64 = scmp.eq.s32.totalorder %s21, 1
      %p65 = por %p63, %p64
      %p66 = scmp.ne.s32.totalorder %s55, %s56
      %p67 = scmp.eq.s32.totalorder %s21, 0
      %p68 = por %p66, %p67
      %p69 = scmp.ne.s32.totalorder %s55, %s56
      %p70 = scmp.eq.s32.totalorder %s22, 1
      %p71 = por %p69, %p70
      %p73 = scmp.ne.s32.totalorder %s56, %s72
      %p74 = scmp.eq.s32.totalorder %s22, 0
      %p75 = por %p73, %p74
      %s77 = sadd.s32 %s76, 1
      %p80 = scmp.eq.s32.totalorder %s16, 1
      %p81 = scmp.ne.s32.totalorder %s76, %s78
      %p82 = scmp.eq.s32.totalorder %s16, 0
      %p83 = por %p81, %p82
      %p84 = scmp.ne.s32.totalorder %s76, %s78
      %p85 = scmp.eq.s32.totalorder %s21, 1
      %p86 = por %p84, %p85
      %p87 = scmp.ne.s32.totalorder %s78, %s79
      %p88 = scmp.eq.s32.totalorder %s21, 0
      %p89 = por %p87, %p88
      %p90 = scmp.ne.s32.totalorder %s78, %s79
      %p91 = scmp.eq.s32.totalorder %s22, 1
      %p92 = por %p90, %p91
      %p94 = scmp.ne.s32.totalorder %s79, %s93
      %p95 = scmp.eq.s32.totalorder %s22, 0
      %p96 = por %p94, %p95
      %s98 = sadd.s32 %s97, 1
      %p101 = scmp.eq.s32.totalorder %s16, 1
      %p102 = scmp.ne.s32.totalorder %s97, %s99
      %p103 = scmp.eq.s32.totalorder %s16, 0
      %p104 = por %p102, %p103
      %p105 = scmp.ne.s32.totalorder %s97, %s99
      %p106 = scmp.eq.s32.totalorder %s21, 1
      %p107 = por %p105, %p106
      %p108 = scmp.ne.s32.totalorder %s99, %s100
      %p109 = scmp.eq.s32.totalorder %s21, 0
      %p110 = por %p108, %p109
      %p111 = scmp.ne.s32.totalorder %s99, %s100
      %p112 = scmp.eq.s32.totalorder %s22, 1
      %p113 = por %p111, %p112
      %p115 = scmp.ne.s32.totalorder %s100, %s114
      %p116 = scmp.eq.s32.totalorder %s22, 0
      %p117 = por %p115, %p116
      %s119 = sadd.s32 %s118, 1
      %p122 = scmp.eq.s32.totalorder %s16, 1
      %p123 = scmp.ne.s32.totalorder %s118, %s120
      %p124 = scmp.eq.s32.totalorder %s16, 0
      %p125 = por %p123, %p124
      %p126 = scmp.ne.s32.totalorder %s118, %s120
      %p127 = scmp.eq.s32.totalorder %s21, 1
      %p128 = por %p126, %p127
      %p129 = scmp.ne.s32.totalorder %s120, %s121
      %p130 = scmp.eq.s32.totalorder %s21, 0
      %p131 = por %p129, %p130
      %p132 = scmp.ne.s32.totalorder %s120, %s121
      %p133 = scmp.eq.s32.totalorder %s22, 1
      %p134 = por %p132, %p133
      %p136 = scmp.ne.s32.totalorder %s121, %s135
      %p137 = scmp.eq.s32.totalorder %s22, 0
      %p138 = por %p136, %p137
      %s140 = sadd.s32 %s139, 1
      %p143 = scmp.eq.s32.totalorder %s16, 1
      %p144 = scmp.ne.s32.totalorder %s139, %s141
      %p145 = scmp.eq.s32.totalorder %s16, 0
      %p146 = por %p144, %p145
      %p147 = scmp.ne.s32.totalorder %s139, %s141
      %p148 = scmp.eq.s32.totalorder %s21, 1
      %p149 = por %p147, %p148
      %p150 = scmp.ne.s32.totalorder %s141, %s142
      %p151 = scmp.eq.s32.totalorder %s21, 0
      %p152 = por %p150, %p151
      %p153 = scmp.ne.s32.totalorder %s141, %s142
      %p154 = scmp.eq.s32.totalorder %s22, 1
      %p155 = por %p153, %p154
      %p157 = scmp.ne.s32.totalorder %s142, %s156
      %p158 = scmp.eq.s32.totalorder %s22, 0
      %p159 = por %p157, %p158
      %s161 = sadd.s32 %s160, 1
      %p164 = scmp.eq.s32.totalorder %s16, 1
      %p165 = scmp.ne.s32.totalorder %s160, %s162
      %p166 = scmp.eq.s32.totalorder %s16, 0
      %p167 = por %p165, %p166
      %p168 = scmp.ne.s32.totalorder %s160, %s162
      %p169 = scmp.eq.s32.totalorder %s21, 1
      %p170 = por %p168, %p169
      %p171 = scmp.ne.s32.totalorder %s162, %s163
      %p172 = scmp.eq.s32.totalorder %s21, 0
      %p173 = por %p171, %p172
      %p174 = scmp.ne.s32.totalorder %s162, %s163
      %p175 = scmp.eq.s32.totalorder %s22, 1
      %p176 = por %p174, %p175
      %p178 = scmp.ne.s32.totalorder %s163, %s177
      %p179 = scmp.eq.s32.totalorder %s22, 0
      %p180 = por %p178, %p179
      %s181 = ssub.s32 %s16, %s23
      %p182 = scmp.eq.s32.totalorder %s181, 0
      %s184 = sadd.s32 %s183, 1
      %s185 = scalar_select %p182, %s183, %s184
      %p188 = pneg %p182
      %p189 = scmp.eq.s32.totalorder %s16, 1
      %p190 = por %p188, %p189
      %p191 = scmp.ne.s32.totalorder %s183, %s186
      %p192 = scmp.eq.s32.totalorder %s16, 0
      %p193 = por %p191, %p192
      %p194 = scmp.ne.s32.totalorder %s183, %s186
      %p195 = scmp.eq.s32.totalorder %s21, 1
      %p196 = por %p194, %p195
      %p197 = scmp.ne.s32.totalorder %s186, %s187
      %p198 = scmp.eq.s32.totalorder %s21, 0
      %p199 = por %p197, %p198
      %p200 = scmp.ne.s32.totalorder %s186, %s187
      %p201 = scmp.eq.s32.totalorder %s22, 1
      %p202 = por %p200, %p201
      %p204 = scmp.ne.s32.totalorder %s187, %s203
      %p205 = scmp.eq.s32.totalorder %s22, 0
      %p206 = por %p204, %p205
      %p207 = scmp.le.s32.totalorder 1, %s16
      %p208 = scmp.lt.s32.totalorder %s16, 3
      %p209 = pnand %p207, %p208
      %p210 = pneg %p209
      // Predicated region
      $region9: #{tpu_custom_call.1} parent=5 // pred_check
        _
      $region10: #{tpu_custom_call.1} parent=5 // pred_check_branch
        %212 = sbr.rel (%p209) target = $region12
      $region11: #{tpu_custom_call.1} parent=5 // pred_region
        %s213 = ssub.s32 %s16, 1
        // Predicated region
        $region13: #{tpu_custom_call.1} parent=11 // pred_check
          %p214 = pneg %p89
        $region14: #{tpu_custom_call.1} parent=11 // pred_check_branch
          %216 = sbr.rel (%p214) target = $region16
        $region15: #{tpu_custom_call.1} parent=11 // pred_region
          _
        $region16: #{tpu_custom_call.1} parent=11 // pred_fallthru
          _
        // Predicated region
        $region17: #{tpu_custom_call.1} parent=11 // pred_check
          %p217 = pneg %p110
        $region18: #{tpu_custom_call.1} parent=11 // pred_check_branch
          %219 = sbr.rel (%p217) target = $region20
        $region19: #{tpu_custom_call.1} parent=11 // pred_region
          _
        $region20: #{tpu_custom_call.1} parent=11 // pred_fallthru
          _
        // Predicated region
        $region21: #{tpu_custom_call.1} parent=11 // pred_check
          %p220 = pneg %p131
        $region22: #{tpu_custom_call.1} parent=11 // pred_check_branch
          %222 = sbr.rel (%p220) target = $region24
        $region23: #{tpu_custom_call.1} parent=11 // pred_region
          _
        $region24: #{tpu_custom_call.1} parent=11 // pred_fallthru
          _
        // Predicated region
        $region25: #{tpu_custom_call.1} parent=11 // pred_check
          %p223 = pneg %p152
        $region26: #{tpu_custom_call.1} parent=11 // pred_check_branch
          %225 = sbr.rel (%p223) target = $region28
        $region27: #{tpu_custom_call.1} parent=11 // pred_region
          _
        $region28: #{tpu_custom_call.1} parent=11 // pred_fallthru
          _
        // Predicated region
        $region29: #{tpu_custom_call.1} parent=11 // pred_check
          %p226 = pneg %p173
        $region30: #{tpu_custom_call.1} parent=11 // pred_check_branch
          %228 = sbr.rel (%p226) target = $region32
        $region31: #{tpu_custom_call.1} parent=11 // pred_region
          _
        $region32: #{tpu_custom_call.1} parent=11 // pred_fallthru
          _
      $region12: #{tpu_custom_call.1} parent=5 // pred_fallthru
        _
      %p229 = scmp.lt.s32.totalorder %s16, 2
      // Predicated region
      $region33: #{tpu_custom_call.1} parent=5 // pred_check
        %p230 = pneg %p229
      $region34: #{tpu_custom_call.1} parent=5 // pred_check_branch
        %232 = sbr.rel (%p230) target = $region36
      $region35: #{tpu_custom_call.1} parent=5 // pred_region
        // Predicated region
        $region37: #{tpu_custom_call.1} parent=35 // pred_check
          %p233 = pneg %p36
        $region38: #{tpu_custom_call.1} parent=35 // pred_check_branch
          %235 = sbr.rel (%p233) target = $region40
        $region39: #{tpu_custom_call.1} parent=35 // pred_region
          %p236 = scmp.lt.s32.totalorder %s16, 1
          %s237 = scalar_select %p236, %s16, 1
          %s238 = smul.addr %s237, 32
          %s239 = smul.addr %s238, 8
          %s240 = scalar_lea.vmem %s0, %s239
        $region40: #{tpu_custom_call.1} parent=35 // pred_fallthru
          _
        // Predicated region
        $region41: #{tpu_custom_call.1} parent=35 // pred_check
          %p241 = pneg %p62
        $region42: #{tpu_custom_call.1} parent=35 // pred_check_branch
          %243 = sbr.rel (%p241) target = $region44
        $region43: #{tpu_custom_call.1} parent=35 // pred_region
          %p244 = scmp.lt.s32.totalorder %s16, 1
          %s245 = scalar_select %p244, %s16, 1
          %s246 = smul.addr %s245, 2
          %s247 = smul.addr %s246, 4
          %s248 = scalar_lea.vmem %s1, %s247
        $region44: #{tpu_custom_call.1} parent=35 // pred_fallthru
          _
      $region36: #{tpu_custom_call.1} parent=5 // pred_fallthru
        _
      %p249 = scmp.le.s32.totalorder 1, %s16
      %p250 = scmp.lt.s32.totalorder %s16, 3
      %p251 = pnand %p249, %p250
      %p252 = pneg %p251
      // Predicated region
      $region45: #{tpu_custom_call.1} parent=5 // pred_check
        _
      $region46: #{tpu_custom_call.1} parent=5 // pred_check_branch
        %254 = sbr.rel (%p251) target = $region48
      $region47: #{tpu_custom_call.1} parent=5 // pred_region
        %s255 = ssub.s32 %s16, 1
        %p256 = scmp.lt.s32.totalorder %s21, 1
        %s257 = scalar_select %p256, %s21, 1
        %s258 = smul.addr %s257, 32
        %s259 = smul.addr %s258, 8
        %s260 = scalar_lea.vmem %s0, %s259
        %p261 = pneg %p42
        %p262 = pneg %p39
        %p263 = scmp.lt.s32.totalorder %s21, 1
        %s264 = scalar_select %p263, %s21, 1
        %s265 = smul.addr %s264, 2
        %s266 = smul.addr %s265, 4
        %s267 = scalar_lea.vmem %s1, %s266
        %p268 = pneg %p68
        %p269 = pneg %p65
        %p270 = pneg %p89
        %p271 = pneg %p86
        %p272 = pneg %p110
        %p273 = pneg %p107
        %p274 = pneg %p131
        %p275 = pneg %p128
        %p276 = pneg %p152
        %p277 = pneg %p149
        %p278 = pneg %p173
        %p279 = pneg %p170
        %p280 = pneg %p199
        %p281 = pneg %p196
        %s282 = sand.u32 %s186, 1
        %s283 = scalar_lea.sflag [#allocation5], %s282
        %s284 = sand.u32 %s186, 1
        %s285 = smul.addr %s284, 8
        %s286 = scalar_lea.vmem [#allocation4], %s285
        %p287 = scmp.lt.s32.totalorder %s21, 1
        %s288 = scalar_select %p287, %s21, 1
        %s289 = smul.addr %s288, 32
        %s290 = smul.addr %s289, 8
        %s291 = scalar_lea.vmem %s0, %s290
        %p292 = scmp.lt.s32.totalorder %s21, 1
        %s293 = scalar_select %p292, %s21, 1
        %s294 = smul.addr %s293, 2
        %s295 = smul.addr %s294, 4
        %s296 = scalar_lea.vmem %s1, %s295
        %297 = vst [vmem:[#allocation2] sm:$0xff] 0.0
        %298 = vst [vmem:[#allocation2 + $0x8] sm:$0xff] 0.0
        %299 = vst [vmem:[#allocation2 + $0x10] sm:$0x3] 0.0
        %300 = vst [vmem:[#allocation2 + $0x18] sm:$0xff] 0.0
        %301 = vst [vmem:[#allocation2 + $0x20] sm:$0xff] 0.0
        %302 = vst [vmem:[#allocation2 + $0x28] sm:$0x3] 0.0
        %303 = vst [vmem:[#allocation2 + $0x30] sm:$0xff] 0.0
        %304 = vst [vmem:[#allocation2 + $0x38] sm:$0xff] 0.0
        %305 = vst [vmem:[#allocation2 + $0x40] sm:$0x3] 0.0
        %306 = vst [vmem:[#allocation2 + $0x48] sm:$0xff] 0.0
        %307 = vst [vmem:[#allocation2 + $0x50] sm:$0xff] 0.0
        %308 = vst [vmem:[#allocation2 + $0x58] sm:$0x3] 0.0
        %309 = vst [vmem:[#allocation2 + $0x60] sm:$0xff] 0.0
        %310 = vst [vmem:[#allocation2 + $0x68] sm:$0xff] 0.0
        %311 = vst [vmem:[#allocation2 + $0x70] sm:$0x3] 0.0
        %312 = vst [vmem:[#allocation2 + $0x78] sm:$0xff] 0.0
        %313 = vst [vmem:[#allocation2 + $0x80] sm:$0xff] 0.0
        %314 = vst [vmem:[#allocation2 + $0x88] sm:$0x3] 0.0
        %315 = vst [vmem:[#allocation2 + $0x90] sm:$0xff] 0.0
        %316 = vst [vmem:[#allocation2 + $0x98] sm:$0xff] 0.0
        %317 = vst [vmem:[#allocation2 + $0xa0] sm:$0x3] 0.0
        %318 = vst [vmem:[#allocation2 + $0xa8] sm:$0xff] 0.0
        %319 = vst [vmem:[#allocation2 + $0xb0] sm:$0xff] 0.0
        %320 = vst [vmem:[#allocation2 + $0xb8] sm:$0x3] 0.0
        %321 = vst [vmem:[#allocation2 + $0xc0] sm:$0xff] 0.0
        %322 = vst [vmem:[#allocation2 + $0xc8] sm:$0xff] 0.0
        %323 = vst [vmem:[#allocation2 + $0xd0] sm:$0x3] 0.0
        %324 = vst [vmem:[#allocation2 + $0xd8] sm:$0xff] 0.0
        %325 = vst [vmem:[#allocation2 + $0xe0] sm:$0xff] 0.0
        %326 = vst [vmem:[#allocation2 + $0xe8] sm:$0x3] 0.0
        %327 = vst [vmem:[#allocation2 + $0xf0] sm:$0xff] 0.0
        %328 = vst [vmem:[#allocation2 + $0xf8] sm:$0xff] 0.0
        %329 = vst [vmem:[#allocation2 + $0x100] sm:$0x3] 0.0
        %330 = vst [vmem:[#allocation2 + $0x108] sm:$0xff] 0.0
        %331 = vst [vmem:[#allocation2 + $0x110] sm:$0xff] 0.0
        %332 = vst [vmem:[#allocation2 + $0x118] sm:$0x3] 0.0
        %333 = vst [vmem:[#allocation2 + $0x120] sm:$0xff] 0.0
        %334 = vst [vmem:[#allocation2 + $0x128] sm:$0xff] 0.0
        %335 = vst [vmem:[#allocation2 + $0x130] sm:$0x3] 0.0
        %336 = vst [vmem:[#allocation2 + $0x138] sm:$0xff] 0.0
        %337 = vst [vmem:[#allocation2 + $0x140] sm:$0xff] 0.0
        %338 = vst [vmem:[#allocation2 + $0x148] sm:$0x3] 0.0
        %339 = vst [vmem:[#allocation2 + $0x150] sm:$0xff] 0.0
        %340 = vst [vmem:[#allocation2 + $0x158] sm:$0xff] 0.0
        %341 = vst [vmem:[#allocation2 + $0x160] sm:$0x3] 0.0
        %342 = vst [vmem:[#allocation2 + $0x168] sm:$0xff] 0.0
        %343 = vst [vmem:[#allocation2 + $0x170] sm:$0xff] 0.0
        %344 = vst [vmem:[#allocation2 + $0x178] sm:$0x3] 0.0
        %345 = vst [vmem:[#allocation2 + $0x180] sm:$0xff] 0.0
        %346 = vst [vmem:[#allocation2 + $0x188] sm:$0xff] 0.0
        %347 = vst [vmem:[#allocation2 + $0x190] sm:$0x3] 0.0
        %348 = vst [vmem:[#allocation2 + $0x198] sm:$0xff] 0.0
        %349 = vst [vmem:[#allocation2 + $0x1a0] sm:$0xff] 0.0
        %350 = vst [vmem:[#allocation2 + $0x1a8] sm:$0x3] 0.0
        %v351 = vld [vmem:[%s291] sm:$0xff]
        %v352 = vld [vmem:[%s291 + $0x8] sm:$0xff]
        %v353 = vld [vmem:[%s291 + $0x10] sm:$0xff]
        %v354 = vld [vmem:[%s291 + $0x18] sm:$0xff]
        %v355 = vld [vmem:[%s291 + $0x20] sm:$0xff]
        %v356 = vld [vmem:[%s291 + $0x28] sm:$0xff]
        %v357 = vld [vmem:[%s291 + $0x30] sm:$0xff]
        %v358 = vld [vmem:[%s291 + $0x38] sm:$0xff]
        %v359 = vld [vmem:[%s291 + $0x40] sm:$0xff]
        %v360 = vld [vmem:[%s291 + $0x48] sm:$0xff]
        %v361 = vld [vmem:[%s291 + $0x50] sm:$0xff]
        %v362 = vld [vmem:[%s291 + $0x58] sm:$0xff]
        %v363 = vld [vmem:[%s291 + $0x60] sm:$0xff]
        %v364 = vld [vmem:[%s291 + $0x68] sm:$0xff]
        %v365 = vld [vmem:[%s291 + $0x70] sm:$0xff]
        %v366 = vld [vmem:[%s291 + $0x78] sm:$0xff]
        %v367 = vld [vmem:[%s291 + $0x80] sm:$0xff]
        %v368 = vld [vmem:[%s291 + $0x88] sm:$0xff]
        %v369 = vld [vmem:[%s291 + $0x90] sm:$0xff]
        %v370 = vld [vmem:[%s291 + $0x98] sm:$0xff]
        %v371 = vld [vmem:[%s291 + $0xa0] sm:$0xff]
        %v372 = vld [vmem:[%s291 + $0xa8] sm:$0xff]
        %v373 = vld [vmem:[%s291 + $0xb0] sm:$0xff]
        %v374 = vld [vmem:[%s291 + $0xb8] sm:$0xff]
        %v375 = vld [vmem:[%s291 + $0xc0] sm:$0xff]
        %v376 = vld [vmem:[%s291 + $0xc8] sm:$0xff]
        %v377 = vld [vmem:[%s291 + $0xd0] sm:$0xff]
        %v378 = vld [vmem:[%s291 + $0xd8] sm:$0xff]
        %v379 = vld [vmem:[%s291 + $0xe0] sm:$0xff]
        %v380 = vld [vmem:[%s291 + $0xe8] sm:$0xff]
        %v381 = vld [vmem:[%s291 + $0xf0] sm:$0xff]
        %v382 = vld [vmem:[%s291 + $0xf8] sm:$0xff]
        %s383 = scalar_lea.vmem [#allocation2], 24
        %vm384 = vcmask 31744
        %385 = vst.msk [vmem:[%s383 + $0x1] sm:$0xff] %vm384, %v351
        %386 = vst.msk [vmem:[%s383 + $0x9] sm:$0xff] %vm384, %v352
        %387 = vst.msk [vmem:[%s383 + $0x19] sm:$0xff] %vm384, %v353
        %388 = vst.msk [vmem:[%s383 + $0x21] sm:$0xff] %vm384, %v354
        %389 = vst.msk [vmem:[%s383 + $0x31] sm:$0xff] %vm384, %v355
        %390 = vst.msk [vmem:[%s383 + $0x39] sm:$0xff] %vm384, %v356
        %391 = vst.msk [vmem:[%s383 + $0x49] sm:$0xff] %vm384, %v357
        %392 = vst.msk [vmem:[%s383 + $0x51] sm:$0xff] %vm384, %v358
        %393 = vst.msk [vmem:[%s383 + $0x61] sm:$0xff] %vm384, %v359
        %394 = vst.msk [vmem:[%s383 + $0x69] sm:$0xff] %vm384, %v360
        %395 = vst.msk [vmem:[%s383 + $0x79] sm:$0xff] %vm384, %v361
        %396 = vst.msk [vmem:[%s383 + $0x81] sm:$0xff] %vm384, %v362
        %397 = vst.msk [vmem:[%s383 + $0x91] sm:$0xff] %vm384, %v363
        %398 = vst.msk [vmem:[%s383 + $0x99] sm:$0xff] %vm384, %v364
        %399 = vst.msk [vmem:[%s383 + $0xa9] sm:$0xff] %vm384, %v365
        %400 = vst.msk [vmem:[%s383 + $0xb1] sm:$0xff] %vm384, %v366
        %401 = vst.msk [vmem:[%s383 + $0xc1] sm:$0xff] %vm384, %v367
        %402 = vst.msk [vmem:[%s383 + $0xc9] sm:$0xff] %vm384, %v368
        %403 = vst.msk [vmem:[%s383 + $0xd9] sm:$0xff] %vm384, %v369
        %404 = vst.msk [vmem:[%s383 + $0xe1] sm:$0xff] %vm384, %v370
        %405 = vst.msk [vmem:[%s383 + $0xf1] sm:$0xff] %vm384, %v371
        %406 = vst.msk [vmem:[%s383 + $0xf9] sm:$0xff] %vm384, %v372
        %407 = vst.msk [vmem:[%s383 + $0x109] sm:$0xff] %vm384, %v373
        %408 = vst.msk [vmem:[%s383 + $0x111] sm:$0xff] %vm384, %v374
        %409 = vst.msk [vmem:[%s383 + $0x121] sm:$0xff] %vm384, %v375
        %410 = vst.msk [vmem:[%s383 + $0x129] sm:$0xff] %vm384, %v376
        %411 = vst.msk [vmem:[%s383 + $0x139] sm:$0xff] %vm384, %v377
        %412 = vst.msk [vmem:[%s383 + $0x141] sm:$0xff] %vm384, %v378
        %413 = vst.msk [vmem:[%s383 + $0x151] sm:$0xff] %vm384, %v379
        %414 = vst.msk [vmem:[%s383 + $0x159] sm:$0xff] %vm384, %v380
        %415 = vst.msk [vmem:[%s383 + $0x169] sm:$0xff] %vm384, %v381
        %416 = vst.msk [vmem:[%s383 + $0x171] sm:$0xff] %vm384, %v382
        %v417 = vld [vmem:[#allocation2] sm:$0xff]
        %v418 = vld [vmem:[#allocation2 + $0x8] sm:$0xff]
        %v419 = vld [vmem:[#allocation2 + $0x18] sm:$0xff]
        %v420 = vld [vmem:[#allocation2 + $0x20] sm:$0xff]
        %v421 = vld [vmem:[#allocation2 + $0x30] sm:$0xff]
        %v422 = vld [vmem:[#allocation2 + $0x38] sm:$0xff]
        %v423 = vld [vmem:[#allocation2 + $0x48] sm:$0xff]
        %v424 = vld [vmem:[#allocation2 + $0x50] sm:$0xff]
        %v425 = vld [vmem:[#allocation2 + $0x60] sm:$0xff]
        %v426 = vld [vmem:[#allocation2 + $0x68] sm:$0xff]
        %v427 = vld [vmem:[#allocation2 + $0x78] sm:$0xff]
        %v428 = vld [vmem:[#allocation2 + $0x80] sm:$0xff]
        %v429 = vld [vmem:[#allocation2 + $0x90] sm:$0xff]
        %v430 = vld [vmem:[#allocation2 + $0x98] sm:$0xff]
        %v431 = vld [vmem:[#allocation2 + $0xa8] sm:$0xff]
        %v432 = vld [vmem:[#allocation2 + $0xb0] sm:$0xff]
        %v433 = vld [vmem:[#allocation2 + $0xc0] sm:$0xff]
        %v434 = vld [vmem:[#allocation2 + $0xc8] sm:$0xff]
        %v435 = vld [vmem:[#allocation2 + $0xd8] sm:$0xff]
        %v436 = vld [vmem:[#allocation2 + $0xe0] sm:$0xff]
        %v437 = vld [vmem:[#allocation2 + $0xf0] sm:$0xff]
        %v438 = vld [vmem:[#allocation2 + $0xf8] sm:$0xff]
        %v439 = vld [vmem:[#allocation2 + $0x108] sm:$0xff]
        %v440 = vld [vmem:[#allocation2 + $0x110] sm:$0xff]
        %v441 = vld [vmem:[#allocation2 + $0x120] sm:$0xff]
        %v442 = vld [vmem:[#allocation2 + $0x128] sm:$0xff]
        %v443 = vld [vmem:[#allocation2 + $0x138] sm:$0xff]
        %v444 = vld [vmem:[#allocation2 + $0x140] sm:$0xff]
        %v445 = vld [vmem:[#allocation2 + $0x150] sm:$0xff]
        %v446 = vld [vmem:[#allocation2 + $0x158] sm:$0xff]
        %v447 = vld [vmem:[#allocation2 + $0x168] sm:$0xff]
        %v448 = vld [vmem:[#allocation2 + $0x170] sm:$0xff]
        %v449 = vld [vmem:[%s2] sm:$0xff]
        %v450 = vld [vmem:[%s2 + $0x8] sm:$0xff]
        %v451 = vld [vmem:[%s2 + $0x10] sm:$0xff]
        %v452 = vld [vmem:[%s2 + $0x18] sm:$0xff]
        %v453 = vld [vmem:[%s2 + $0x20] sm:$0xff]
        %v454 = vld [vmem:[%s2 + $0x28] sm:$0xff]
        %v455 = vld [vmem:[%s2 + $0x30] sm:$0xff]
        %v456 = vld [vmem:[%s2 + $0x38] sm:$0xff]
        %v457 = vld [vmem:[%s2 + $0x40] sm:$0xff]
        %v458 = vld [vmem:[%s2 + $0x48] sm:$0xff]
        %v459 = vld [vmem:[%s2 + $0x50] sm:$0xff]
        %v460 = vld [vmem:[%s2 + $0x58] sm:$0xff]
        %v461 = vld [vmem:[%s2 + $0x60] sm:$0xff]
        %v462 = vld [vmem:[%s2 + $0x68] sm:$0xff]
        %v463 = vld [vmem:[%s2 + $0x70] sm:$0xff]
        %v464 = vld [vmem:[%s2 + $0x78] sm:$0xff]
        %v465 = vld [vmem:[#allocation2 + $0x1] sm:$0xff]
        %v466 = vld [vmem:[#allocation2 + $0x9] sm:$0xff]
        %v467 = vld [vmem:[#allocation2 + $0x19] sm:$0xff]
        %v468 = vld [vmem:[#allocation2 + $0x21] sm:$0xff]
        %v469 = vld [vmem:[#allocation2 + $0x31] sm:$0xff]
        %v470 = vld [vmem:[#allocation2 + $0x39] sm:$0xff]
        %v471 = vld [vmem:[#allocation2 + $0x49] sm:$0xff]
        %v472 = vld [vmem:[#allocation2 + $0x51] sm:$0xff]
        %v473 = vld [vmem:[#allocation2 + $0x61] sm:$0xff]
        %v474 = vld [vmem:[#allocation2 + $0x69] sm:$0xff]
        %v475 = vld [vmem:[#allocation2 + $0x79] sm:$0xff]
        %v476 = vld [vmem:[#allocation2 + $0x81] sm:$0xff]
        %v477 = vld [vmem:[#allocation2 + $0x91] sm:$0xff]
        %v478 = vld [vmem:[#allocation2 + $0x99] sm:$0xff]
        %v479 = vld [vmem:[#allocation2 + $0xa9] sm:$0xff]
        %v480 = vld [vmem:[#allocation2 + $0xb1] sm:$0xff]
        %v481 = vld [vmem:[#allocation2 + $0xc1] sm:$0xff]
        %v482 = vld [vmem:[#allocation2 + $0xc9] sm:$0xff]
        %v483 = vld [vmem:[#allocation2 + $0xd9] sm:$0xff]
        %v484 = vld [vmem:[#allocation2 + $0xe1] sm:$0xff]
        %v485 = vld [vmem:[#allocation2 + $0xf1] sm:$0xff]
        %v486 = vld [vmem:[#allocation2 + $0xf9] sm:$0xff]
        %v487 = vld [vmem:[#allocation2 + $0x109] sm:$0xff]
        %v488 = vld [vmem:[#allocation2 + $0x111] sm:$0xff]
        %v489 = vld [vmem:[#allocation2 + $0x121] sm:$0xff]
        %v490 = vld [vmem:[#allocation2 + $0x129] sm:$0xff]
        %v491 = vld [vmem:[#allocation2 + $0x139] sm:$0xff]
        %v492 = vld [vmem:[#allocation2 + $0x141] sm:$0xff]
        %v493 = vld [vmem:[#allocation2 + $0x151] sm:$0xff]
        %v494 = vld [vmem:[#allocation2 + $0x159] sm:$0xff]
        %v495 = vld [vmem:[#allocation2 + $0x169] sm:$0xff]
        %v496 = vld [vmem:[#allocation2 + $0x171] sm:$0xff]
        %v497 = vld [vmem:[%s2 + $0x80] sm:$0xff]
        %v498 = vld [vmem:[%s2 + $0x88] sm:$0xff]
        %v499 = vld [vmem:[%s2 + $0x90] sm:$0xff]
        %v500 = vld [vmem:[%s2 + $0x98] sm:$0xff]
        %v501 = vld [vmem:[%s2 + $0xa0] sm:$0xff]
        %v502 = vld [vmem:[%s2 + $0xa8] sm:$0xff]
        %v503 = vld [vmem:[%s2 + $0xb0] sm:$0xff]
        %v504 = vld [vmem:[%s2 + $0xb8] sm:$0xff]
        %v505 = vld [vmem:[%s2 + $0xc0] sm:$0xff]
        %v506 = vld [vmem:[%s2 + $0xc8] sm:$0xff]
        %v507 = vld [vmem:[%s2 + $0xd0] sm:$0xff]
        %v508 = vld [vmem:[%s2 + $0xd8] sm:$0xff]
        %v509 = vld [vmem:[%s2 + $0xe0] sm:$0xff]
        %v510 = vld [vmem:[%s2 + $0xe8] sm:$0xff]
        %v511 = vld [vmem:[%s2 + $0xf0] sm:$0xff]
        %v512 = vld [vmem:[%s2 + $0xf8] sm:$0xff]
        %513 = vmatpush.msra.mxu0 %v512
        %514 = vmatpush.msra.mxu0 %v511
        %515 = vmatpush.msra.mxu0 %v510
        %516 = vmatpush.msra.mxu0 %v509
        %517 = vmatpush.msra.mxu0 %v508
        %518 = vmatpush.msra.mxu0 %v507
        %519 = vmatpush.msra.mxu0 %v506
        %520 = vmatpush.msra.mxu0 %v505
        %521 = vmatpush.msra.mxu0 %v504
        %522 = vmatpush.msra.mxu0 %v503
        %523 = vmatpush.msra.mxu0 %v502
        %524 = vmatpush.msra.mxu0 %v501
        %525 = vmatpush.msra.mxu0 %v500
        %526 = vmatpush.msra.mxu0 %v499
        %527 = vmatpush.msra.mxu0 %v498
        %528 = vmatpush.msra.mxu0 %v497
        %529 = vmatmul.f32.gmra.mxu0 %v465
        %v530 = vpop.f32.mrf.mxu0
        %v531 = vadd.f32 0.0, %v530
        %532 = vmatmul.f32.gmra.mxu0 %v466
        %v533 = vpop.f32.mrf.mxu0
        %v534 = vadd.f32 0.0, %v533
        %535 = vmatmul.f32.gmra.mxu0 %v467
        %v536 = vpop.f32.mrf.mxu0
        %v537 = vadd.f32 0.0, %v536
        %538 = vmatmul.f32.gmra.mxu0 %v468
        %v539 = vpop.f32.mrf.mxu0
        %v540 = vadd.f32 0.0, %v539
        %541 = vmatmul.f32.gmra.mxu0 %v469
        %v542 = vpop.f32.mrf.mxu0
        %v543 = vadd.f32 0.0, %v542
        %544 = vmatmul.f32.gmra.mxu0 %v470
        %v545 = vpop.f32.mrf.mxu0
        %v546 = vadd.f32 0.0, %v545
        %547 = vmatmul.f32.gmra.mxu0 %v471
        %v548 = vpop.f32.mrf.mxu0
        %v549 = vadd.f32 0.0, %v548
        %550 = vmatmul.f32.gmra.mxu0 %v472
        %v551 = vpop.f32.mrf.mxu0
        %v552 = vadd.f32 0.0, %v551
        %553 = vmatmul.f32.gmra.mxu0 %v473
        %v554 = vpop.f32.mrf.mxu0
        %v555 = vadd.f32 0.0, %v554
        %556 = vmatmul.f32.gmra.mxu0 %v474
        %v557 = vpop.f32.mrf.mxu0
        %v558 = vadd.f32 0.0, %v557
        %559 = vmatmul.f32.gmra.mxu0 %v475
        %v560 = vpop.f32.mrf.mxu0
        %v561 = vadd.f32 0.0, %v560
        %562 = vmatmul.f32.gmra.mxu0 %v476
        %v563 = vpop.f32.mrf.mxu0
        %v564 = vadd.f32 0.0, %v563
        %565 = vmatmul.f32.gmra.mxu0 %v477
        %v566 = vpop.f32.mrf.mxu0
        %v567 = vadd.f32 0.0, %v566
        %568 = vmatmul.f32.gmra.mxu0 %v478
        %v569 = vpop.f32.mrf.mxu0
        %v570 = vadd.f32 0.0, %v569
        %571 = vmatmul.f32.gmra.mxu0 %v479
        %v572 = vpop.f32.mrf.mxu0
        %v573 = vadd.f32 0.0, %v572
        %574 = vmatmul.f32.gmra.mxu0 %v480
        %v575 = vpop.f32.mrf.mxu0
        %v576 = vadd.f32 0.0, %v575
        %577 = vmatmul.f32.gmra.mxu0 %v481
        %v578 = vpop.f32.mrf.mxu0
        %v579 = vadd.f32 0.0, %v578
        %580 = vmatmul.f32.gmra.mxu0 %v482
        %v581 = vpop.f32.mrf.mxu0
        %v582 = vadd.f32 0.0, %v581
        %583 = vmatmul.f32.gmra.mxu0 %v483
        %v584 = vpop.f32.mrf.mxu0
        %v585 = vadd.f32 0.0, %v584
        %586 = vmatmul.f32.gmra.mxu0 %v484
        %v587 = vpop.f32.mrf.mxu0
        %v588 = vadd.f32 0.0, %v587
        %589 = vmatmul.f32.gmra.mxu0 %v485
        %v590 = vpop.f32.mrf.mxu0
        %v591 = vadd.f32 0.0, %v590
        %592 = vmatmul.f32.gmra.mxu0 %v486
        %v593 = vpop.f32.mrf.mxu0
        %v594 = vadd.f32 0.0, %v593
        %595 = vmatmul.f32.gmra.mxu0 %v487
        %v596 = vpop.f32.mrf.mxu0
        %v597 = vadd.f32 0.0, %v596
        %598 = vmatmul.f32.gmra.mxu0 %v488
        %v599 = vpop.f32.mrf.mxu0
        %v600 = vadd.f32 0.0, %v599
        %601 = vmatmul.f32.gmra.mxu0 %v489
        %v602 = vpop.f32.mrf.mxu0
        %v603 = vadd.f32 0.0, %v602
        %604 = vmatmul.f32.gmra.mxu0 %v490
        %v605 = vpop.f32.mrf.mxu0
        %v606 = vadd.f32 0.0, %v605
        %607 = vmatmul.f32.gmra.mxu0 %v491
        %v608 = vpop.f32.mrf.mxu0
        %v609 = vadd.f32 0.0, %v608
        %610 = vmatmul.f32.gmra.mxu0 %v492
        %v611 = vpop.f32.mrf.mxu0
        %v612 = vadd.f32 0.0, %v611
        %613 = vmatmul.f32.gmra.mxu0 %v493
        %v614 = vpop.f32.mrf.mxu0
        %v615 = vadd.f32 0.0, %v614
        %616 = vmatmul.f32.gmra.mxu0 %v494
        %v617 = vpop.f32.mrf.mxu0
        %v618 = vadd.f32 0.0, %v617
        %619 = vmatmul.f32.gmra.mxu0 %v495
        %v620 = vpop.f32.mrf.mxu0
        %v621 = vadd.f32 0.0, %v620
        %622 = vmatmul.f32.gmra.mxu0 %v496
        %v623 = vpop.f32.mrf.mxu0
        %v624 = vadd.f32 0.0, %v623
        %625 = vdwg.mxu0
        %626 = vmatpush.msra.mxu0 %v464
        %627 = vmatpush.msra.mxu0 %v463
        %628 = vmatpush.msra.mxu0 %v462
        %629 = vmatpush.msra.mxu0 %v461
        %630 = vmatpush.msra.mxu0 %v460
        %631 = vmatpush.msra.mxu0 %v459
        %632 = vmatpush.msra.mxu0 %v458
        %633 = vmatpush.msra.mxu0 %v457
        %634 = vmatpush.msra.mxu0 %v456
        %635 = vmatpush.msra.mxu0 %v455
        %636 = vmatpush.msra.mxu0 %v454
        %637 = vmatpush.msra.mxu0 %v453
        %638 = vmatpush.msra.mxu0 %v452
        %639 = vmatpush.msra.mxu0 %v451
        %640 = vmatpush.msra.mxu0 %v450
        %641 = vmatpush.msra.mxu0 %v449
        %642 = vmatmul.f32.gmra.mxu0 %v417
        %v643 = vpop.f32.mrf.mxu0
        %v644 = vadd.f32 %v531, %v643
        %645 = vmatmul.f32.gmra.mxu0 %v418
        %v646 = vpop.f32.mrf.mxu0
        %v647 = vadd.f32 %v534, %v646
        %648 = vmatmul.f32.gmra.mxu0 %v419
        %v649 = vpop.f32.mrf.mxu0
        %v650 = vadd.f32 %v537, %v649
        %651 = vmatmul.f32.gmra.mxu0 %v420
        %v652 = vpop.f32.mrf.mxu0
        %v653 = vadd.f32 %v540, %v652
        %654 = vmatmul.f32.gmra.mxu0 %v421
        %v655 = vpop.f32.mrf.mxu0
        %v656 = vadd.f32 %v543, %v655
        %657 = vmatmul.f32.gmra.mxu0 %v422
        %v658 = vpop.f32.mrf.mxu0
        %v659 = vadd.f32 %v546, %v658
        %660 = vmatmul.f32.gmra.mxu0 %v423
        %v661 = vpop.f32.mrf.mxu0
        %v662 = vadd.f32 %v549, %v661
        %663 = vmatmul.f32.gmra.mxu0 %v424
        %v664 = vpop.f32.mrf.mxu0
        %v665 = vadd.f32 %v552, %v664
        %666 = vmatmul.f32.gmra.mxu0 %v425
        %v667 = vpop.f32.mrf.mxu0
        %v668 = vadd.f32 %v555, %v667
        %669 = vmatmul.f32.gmra.mxu0 %v426
        %v670 = vpop.f32.mrf.mxu0
        %v671 = vadd.f32 %v558, %v670
        %672 = vmatmul.f32.gmra.mxu0 %v427
        %v673 = vpop.f32.mrf.mxu0
        %v674 = vadd.f32 %v561, %v673
        %675 = vmatmul.f32.gmra.mxu0 %v428
        %v676 = vpop.f32.mrf.mxu0
        %v677 = vadd.f32 %v564, %v676
        %678 = vmatmul.f32.gmra.mxu0 %v429
        %v679 = vpop.f32.mrf.mxu0
        %v680 = vadd.f32 %v567, %v679
        %681 = vmatmul.f32.gmra.mxu0 %v430
        %v682 = vpop.f32.mrf.mxu0
        %v683 = vadd.f32 %v570, %v682
        %684 = vmatmul.f32.gmra.mxu0 %v431
        %v685 = vpop.f32.mrf.mxu0
        %v686 = vadd.f32 %v573, %v685
        %687 = vmatmul.f32.gmra.mxu0 %v432
        %v688 = vpop.f32.mrf.mxu0
        %v689 = vadd.f32 %v576, %v688
        %690 = vmatmul.f32.gmra.mxu0 %v433
        %v691 = vpop.f32.mrf.mxu0
        %v692 = vadd.f32 %v579, %v691
        %693 = vmatmul.f32.gmra.mxu0 %v434
        %v694 = vpop.f32.mrf.mxu0
        %v695 = vadd.f32 %v582, %v694
        %696 = vmatmul.f32.gmra.mxu0 %v435
        %v697 = vpop.f32.mrf.mxu0
        %v698 = vadd.f32 %v585, %v697
        %699 = vmatmul.f32.gmra.mxu0 %v436
        %v700 = vpop.f32.mrf.mxu0
        %v701 = vadd.f32 %v588, %v700
        %702 = vmatmul.f32.gmra.mxu0 %v437
        %v703 = vpop.f32.mrf.mxu0
        %v704 = vadd.f32 %v591, %v703
        %705 = vmatmul.f32.gmra.mxu0 %v438
        %v706 = vpop.f32.mrf.mxu0
        %v707 = vadd.f32 %v594, %v706
        %708 = vmatmul.f32.gmra.mxu0 %v439
        %v709 = vpop.f32.mrf.mxu0
        %v710 = vadd.f32 %v597, %v709
        %711 = vmatmul.f32.gmra.mxu0 %v440
        %v712 = vpop.f32.mrf.mxu0
        %v713 = vadd.f32 %v600, %v712
        %714 = vmatmul.f32.gmra.mxu0 %v441
        %v715 = vpop.f32.mrf.mxu0
        %v716 = vadd.f32 %v603, %v715
        %717 = vmatmul.f32.gmra.mxu0 %v442
        %v718 = vpop.f32.mrf.mxu0
        %v719 = vadd.f32 %v606, %v718
        %720 = vmatmul.f32.gmra.mxu0 %v443
        %v721 = vpop.f32.mrf.mxu0
        %v722 = vadd.f32 %v609, %v721
        %723 = vmatmul.f32.gmra.mxu0 %v444
        %v724 = vpop.f32.mrf.mxu0
        %v725 = vadd.f32 %v612, %v724
        %726 = vmatmul.f32.gmra.mxu0 %v445
        %v727 = vpop.f32.mrf.mxu0
        %v728 = vadd.f32 %v615, %v727
        %729 = vmatmul.f32.gmra.mxu0 %v446
        %v730 = vpop.f32.mrf.mxu0
        %v731 = vadd.f32 %v618, %v730
        %732 = vmatmul.f32.gmra.mxu0 %v447
        %v733 = vpop.f32.mrf.mxu0
        %v734 = vadd.f32 %v621, %v733
        %735 = vmatmul.f32.gmra.mxu0 %v448
        %v736 = vpop.f32.mrf.mxu0
        %v737 = vadd.f32 %v624, %v736
        %738 = vdwg.mxu0
        %v739 = vld [vmem:[#allocation2 + $0x2] sm:$0xff]
        %v740 = vld [vmem:[#allocation2 + $0xa] sm:$0xff]
        %v741 = vld [vmem:[#allocation2 + $0x1a] sm:$0xff]
        %v742 = vld [vmem:[#allocation2 + $0x22] sm:$0xff]
        %v743 = vld [vmem:[#allocation2 + $0x32] sm:$0xff]
        %v744 = vld [vmem:[#allocation2 + $0x3a] sm:$0xff]
        %v745 = vld [vmem:[#allocation2 + $0x4a] sm:$0xff]
        %v746 = vld [vmem:[#allocation2 + $0x52] sm:$0xff]
        %v747 = vld [vmem:[#allocation2 + $0x62] sm:$0xff]
        %v748 = vld [vmem:[#allocation2 + $0x6a] sm:$0xff]
        %v749 = vld [vmem:[#allocation2 + $0x7a] sm:$0xff]
        %v750 = vld [vmem:[#allocation2 + $0x82] sm:$0xff]
        %v751 = vld [vmem:[#allocation2 + $0x92] sm:$0xff]
        %v752 = vld [vmem:[#allocation2 + $0x9a] sm:$0xff]
        %v753 = vld [vmem:[#allocation2 + $0xaa] sm:$0xff]
        %v754 = vld [vmem:[#allocation2 + $0xb2] sm:$0xff]
        %v755 = vld [vmem:[#allocation2 + $0xc2] sm:$0xff]
        %v756 = vld [vmem:[#allocation2 + $0xca] sm:$0xff]
        %v757 = vld [vmem:[#allocation2 + $0xda] sm:$0xff]
        %v758 = vld [vmem:[#allocation2 + $0xe2] sm:$0xff]
        %v759 = vld [vmem:[#allocation2 + $0xf2] sm:$0xff]
        %v760 = vld [vmem:[#allocation2 + $0xfa] sm:$0xff]
        %v761 = vld [vmem:[#allocation2 + $0x10a] sm:$0xff]
        %v762 = vld [vmem:[#allocation2 + $0x112] sm:$0xff]
        %v763 = vld [vmem:[#allocation2 + $0x122] sm:$0xff]
        %v764 = vld [vmem:[#allocation2 + $0x12a] sm:$0xff]
        %v765 = vld [vmem:[#allocation2 + $0x13a] sm:$0xff]
        %v766 = vld [vmem:[#allocation2 + $0x142] sm:$0xff]
        %v767 = vld [vmem:[#allocation2 + $0x152] sm:$0xff]
        %v768 = vld [vmem:[#allocation2 + $0x15a] sm:$0xff]
        %v769 = vld [vmem:[#allocation2 + $0x16a] sm:$0xff]
        %v770 = vld [vmem:[#allocation2 + $0x172] sm:$0xff]
        %v771 = vld [vmem:[%s2 + $0x100] sm:$0xff]
        %v772 = vld [vmem:[%s2 + $0x108] sm:$0xff]
        %v773 = vld [vmem:[%s2 + $0x110] sm:$0xff]
        %v774 = vld [vmem:[%s2 + $0x118] sm:$0xff]
        %v775 = vld [vmem:[%s2 + $0x120] sm:$0xff]
        %v776 = vld [vmem:[%s2 + $0x128] sm:$0xff]
        %v777 = vld [vmem:[%s2 + $0x130] sm:$0xff]
        %v778 = vld [vmem:[%s2 + $0x138] sm:$0xff]
        %v779 = vld [vmem:[%s2 + $0x140] sm:$0xff]
        %v780 = vld [vmem:[%s2 + $0x148] sm:$0xff]
        %v781 = vld [vmem:[%s2 + $0x150] sm:$0xff]
        %v782 = vld [vmem:[%s2 + $0x158] sm:$0xff]
        %v783 = vld [vmem:[%s2 + $0x160] sm:$0xff]
        %v784 = vld [vmem:[%s2 + $0x168] sm:$0xff]
        %v785 = vld [vmem:[%s2 + $0x170] sm:$0xff]
        %v786 = vld [vmem:[%s2 + $0x178] sm:$0xff]
        %787 = vmatpush.msra.mxu0 %v786
        %788 = vmatpush.msra.mxu0 %v785
        %789 = vmatpush.msra.mxu0 %v784
        %790 = vmatpush.msra.mxu0 %v783
        %791 = vmatpush.msra.mxu0 %v782
        %792 = vmatpush.msra.mxu0 %v781
        %793 = vmatpush.msra.mxu0 %v780
        %794 = vmatpush.msra.mxu0 %v779
        %795 = vmatpush.msra.mxu0 %v778
        %796 = vmatpush.msra.mxu0 %v777
        %797 = vmatpush.msra.mxu0 %v776
        %798 = vmatpush.msra.mxu0 %v775
        %799 = vmatpush.msra.mxu0 %v774
        %800 = vmatpush.msra.mxu0 %v773
        %801 = vmatpush.msra.mxu0 %v772
        %802 = vmatpush.msra.mxu0 %v771
        %803 = vmatmul.f32.gmra.mxu0 %v739
        %v804 = vpop.f32.mrf.mxu0
        %v805 = vadd.f32 0.0, %v804
        %806 = vmatmul.f32.gmra.mxu0 %v740
        %v807 = vpop.f32.mrf.mxu0
        %v808 = vadd.f32 0.0, %v807
        %809 = vmatmul.f32.gmra.mxu0 %v741
        %v810 = vpop.f32.mrf.mxu0
        %v811 = vadd.f32 0.0, %v810
        %812 = vmatmul.f32.gmra.mxu0 %v742
        %v813 = vpop.f32.mrf.mxu0
        %v814 = vadd.f32 0.0, %v813
        %815 = vmatmul.f32.gmra.mxu0 %v743
        %v816 = vpop.f32.mrf.mxu0
        %v817 = vadd.f32 0.0, %v816
        %818 = vmatmul.f32.gmra.mxu0 %v744
        %v819 = vpop.f32.mrf.mxu0
        %v820 = vadd.f32 0.0, %v819
        %821 = vmatmul.f32.gmra.mxu0 %v745
        %v822 = vpop.f32.mrf.mxu0
        %v823 = vadd.f32 0.0, %v822
        %824 = vmatmul.f32.gmra.mxu0 %v746
        %v825 = vpop.f32.mrf.mxu0
        %v826 = vadd.f32 0.0, %v825
        %827 = vmatmul.f32.gmra.mxu0 %v747
        %v828 = vpop.f32.mrf.mxu0
        %v829 = vadd.f32 0.0, %v828
        %830 = vmatmul.f32.gmra.mxu0 %v748
        %v831 = vpop.f32.mrf.mxu0
        %v832 = vadd.f32 0.0, %v831
        %833 = vmatmul.f32.gmra.mxu0 %v749
        %v834 = vpop.f32.mrf.mxu0
        %v835 = vadd.f32 0.0, %v834
        %836 = vmatmul.f32.gmra.mxu0 %v750
        %v837 = vpop.f32.mrf.mxu0
        %v838 = vadd.f32 0.0, %v837
        %839 = vmatmul.f32.gmra.mxu0 %v751
        %v840 = vpop.f32.mrf.mxu0
        %v841 = vadd.f32 0.0, %v840
        %842 = vmatmul.f32.gmra.mxu0 %v752
        %v843 = vpop.f32.mrf.mxu0
        %v844 = vadd.f32 0.0, %v843
        %845 = vmatmul.f32.gmra.mxu0 %v753
        %v846 = vpop.f32.mrf.mxu0
        %v847 = vadd.f32 0.0, %v846
        %848 = vmatmul.f32.gmra.mxu0 %v754
        %v849 = vpop.f32.mrf.mxu0
        %v850 = vadd.f32 0.0, %v849
        %851 = vmatmul.f32.gmra.mxu0 %v755
        %v852 = vpop.f32.mrf.mxu0
        %v853 = vadd.f32 0.0, %v852
        %854 = vmatmul.f32.gmra.mxu0 %v756
        %v855 = vpop.f32.mrf.mxu0
        %v856 = vadd.f32 0.0, %v855
        %857 = vmatmul.f32.gmra.mxu0 %v757
        %v858 = vpop.f32.mrf.mxu0
        %v859 = vadd.f32 0.0, %v858
        %860 = vmatmul.f32.gmra.mxu0 %v758
        %v861 = vpop.f32.mrf.mxu0
        %v862 = vadd.f32 0.0, %v861
        %863 = vmatmul.f32.gmra.mxu0 %v759
        %v864 = vpop.f32.mrf.mxu0
        %v865 = vadd.f32 0.0, %v864
        %866 = vmatmul.f32.gmra.mxu0 %v760
        %v867 = vpop.f32.mrf.mxu0
        %v868 = vadd.f32 0.0, %v867
        %869 = vmatmul.f32.gmra.mxu0 %v761
        %v870 = vpop.f32.mrf.mxu0
        %v871 = vadd.f32 0.0, %v870
        %872 = vmatmul.f32.gmra.mxu0 %v762
        %v873 = vpop.f32.mrf.mxu0
        %v874 = vadd.f32 0.0, %v873
        %875 = vmatmul.f32.gmra.mxu0 %v763
        %v876 = vpop.f32.mrf.mxu0
        %v877 = vadd.f32 0.0, %v876
        %878 = vmatmul.f32.gmra.mxu0 %v764
        %v879 = vpop.f32.mrf.mxu0
        %v880 = vadd.f32 0.0, %v879
        %881 = vmatmul.f32.gmra.mxu0 %v765
        %v882 = vpop.f32.mrf.mxu0
        %v883 = vadd.f32 0.0, %v882
        %884 = vmatmul.f32.gmra.mxu0 %v766
        %v885 = vpop.f32.mrf.mxu0
        %v886 = vadd.f32 0.0, %v885
        %887 = vmatmul.f32.gmra.mxu0 %v767
        %v888 = vpop.f32.mrf.mxu0
        %v889 = vadd.f32 0.0, %v888
        %890 = vmatmul.f32.gmra.mxu0 %v768
        %v891 = vpop.f32.mrf.mxu0
        %v892 = vadd.f32 0.0, %v891
        %893 = vmatmul.f32.gmra.mxu0 %v769
        %v894 = vpop.f32.mrf.mxu0
        %v895 = vadd.f32 0.0, %v894
        %896 = vmatmul.f32.gmra.mxu0 %v770
        %v897 = vpop.f32.mrf.mxu0
        %v898 = vadd.f32 0.0, %v897
        %899 = vdwg.mxu0
        %v900 = vadd.f32 %v644, %v805
        %v901 = vadd.f32 %v647, %v808
        %v902 = vadd.f32 %v650, %v811
        %v903 = vadd.f32 %v653, %v814
        %v904 = vadd.f32 %v656, %v817
        %v905 = vadd.f32 %v659, %v820
        %v906 = vadd.f32 %v662, %v823
        %v907 = vadd.f32 %v665, %v826
        %v908 = vadd.f32 %v668, %v829
        %v909 = vadd.f32 %v671, %v832
        %v910 = vadd.f32 %v674, %v835
        %v911 = vadd.f32 %v677, %v838
        %v912 = vadd.f32 %v680, %v841
        %v913 = vadd.f32 %v683, %v844
        %v914 = vadd.f32 %v686, %v847
        %v915 = vadd.f32 %v689, %v850
        %v916 = vadd.f32 %v692, %v853
        %v917 = vadd.f32 %v695, %v856
        %v918 = vadd.f32 %v698, %v859
        %v919 = vadd.f32 %v701, %v862
        %v920 = vadd.f32 %v704, %v865
        %v921 = vadd.f32 %v707, %v868
        %v922 = vadd.f32 %v710, %v871
        %v923 = vadd.f32 %v713, %v874
        %v924 = vadd.f32 %v716, %v877
        %v925 = vadd.f32 %v719, %v880
        %v926 = vadd.f32 %v722, %v883
        %v927 = vadd.f32 %v725, %v886
        %v928 = vadd.f32 %v728, %v889
        %v929 = vadd.f32 %v731, %v892
        %v930 = vadd.f32 %v734, %v895
        %v931 = vadd.f32 %v737, %v898
        %v932 = vld [vmem:[%s383] sm:$0xff]
        %v933 = vld [vmem:[%s383 + $0x8] sm:$0xff]
        %v934 = vld [vmem:[%s383 + $0x18] sm:$0xff]
        %v935 = vld [vmem:[%s383 + $0x20] sm:$0xff]
        %v936 = vld [vmem:[%s383 + $0x30] sm:$0xff]
        %v937 = vld [vmem:[%s383 + $0x38] sm:$0xff]
        %v938 = vld [vmem:[%s383 + $0x48] sm:$0xff]
        %v939 = vld [vmem:[%s383 + $0x50] sm:$0xff]
        %v940 = vld [vmem:[%s383 + $0x60] sm:$0xff]
        %v941 = vld [vmem:[%s383 + $0x68] sm:$0xff]
        %v942 = vld [vmem:[%s383 + $0x78] sm:$0xff]
        %v943 = vld [vmem:[%s383 + $0x80] sm:$0xff]
        %v944 = vld [vmem:[%s383 + $0x90] sm:$0xff]
        %v945 = vld [vmem:[%s383 + $0x98] sm:$0xff]
        %v946 = vld [vmem:[%s383 + $0xa8] sm:$0xff]
        %v947 = vld [vmem:[%s383 + $0xb0] sm:$0xff]
        %v948 = vld [vmem:[%s383 + $0xc0] sm:$0xff]
        %v949 = vld [vmem:[%s383 + $0xc8] sm:$0xff]
        %v950 = vld [vmem:[%s383 + $0xd8] sm:$0xff]
        %v951 = vld [vmem:[%s383 + $0xe0] sm:$0xff]
        %v952 = vld [vmem:[%s383 + $0xf0] sm:$0xff]
        %v953 = vld [vmem:[%s383 + $0xf8] sm:$0xff]
        %v954 = vld [vmem:[%s383 + $0x108] sm:$0xff]
        %v955 = vld [vmem:[%s383 + $0x110] sm:$0xff]
        %v956 = vld [vmem:[%s383 + $0x120] sm:$0xff]
        %v957 = vld [vmem:[%s383 + $0x128] sm:$0xff]
        %v958 = vld [vmem:[%s383 + $0x138] sm:$0xff]
        %v959 = vld [vmem:[%s383 + $0x140] sm:$0xff]
        %v960 = vld [vmem:[%s383 + $0x150] sm:$0xff]
        %v961 = vld [vmem:[%s383 + $0x158] sm:$0xff]
        %v962 = vld [vmem:[%s383 + $0x168] sm:$0xff]
        %v963 = vld [vmem:[%s383 + $0x170] sm:$0xff]
        %v964 = vld [vmem:[%s2 + $0x180] sm:$0xff]
        %v965 = vld [vmem:[%s2 + $0x188] sm:$0xff]
        %v966 = vld [vmem:[%s2 + $0x190] sm:$0xff]
        %v967 = vld [vmem:[%s2 + $0x198] sm:$0xff]
        %v968 = vld [vmem:[%s2 + $0x1a0] sm:$0xff]
        %v969 = vld [vmem:[%s2 + $0x1a8] sm:$0xff]
        %v970 = vld [vmem:[%s2 + $0x1b0] sm:$0xff]
        %v971 = vld [vmem:[%s2 + $0x1b8] sm:$0xff]
        %v972 = vld [vmem:[%s2 + $0x1c0] sm:$0xff]
        %v973 = vld [vmem:[%s2 + $0x1c8] sm:$0xff]
        %v974 = vld [vmem:[%s2 + $0x1d0] sm:$0xff]
        %v975 = vld [vmem:[%s2 + $0x1d8] sm:$0xff]
        %v976 = vld [vmem:[%s2 + $0x1e0] sm:$0xff]
        %v977 = vld [vmem:[%s2 + $0x1e8] sm:$0xff]
        %v978 = vld [vmem:[%s2 + $0x1f0] sm:$0xff]
        %v979 = vld [vmem:[%s2 + $0x1f8] sm:$0xff]
        %980 = vmatpush.msra.mxu0 %v979
        %981 = vmatpush.msra.mxu0 %v978
        %982 = vmatpush.msra.mxu0 %v977
        %983 = vmatpush.msra.mxu0 %v976
        %984 = vmatpush.msra.mxu0 %v975
        %985 = vmatpush.msra.mxu0 %v974
        %986 = vmatpush.msra.mxu0 %v973
        %987 = vmatpush.msra.mxu0 %v972
        %988 = vmatpush.msra.mxu0 %v971
        %989 = vmatpush.msra.mxu0 %v970
        %990 = vmatpush.msra.mxu0 %v969
        %991 = vmatpush.msra.mxu0 %v968
        %992 = vmatpush.msra.mxu0 %v967
        %993 = vmatpush.msra.mxu0 %v966
        %994 = vmatpush.msra.mxu0 %v965
        %995 = vmatpush.msra.mxu0 %v964
        %996 = vmatmul.f32.gmra.mxu0 %v932
        %v997 = vpop.f32.mrf.mxu0
        %v998 = vadd.f32 0.0, %v997
        %999 = vmatmul.f32.gmra.mxu0 %v933
        %v1000 = vpop.f32.mrf.mxu0
        %v1001 = vadd.f32 0.0, %v1000
        %1002 = vmatmul.f32.gmra.mxu0 %v934
        %v1003 = vpop.f32.mrf.mxu0
        %v1004 = vadd.f32 0.0, %v1003
        %1005 = vmatmul.f32.gmra.mxu0 %v935
        %v1006 = vpop.f32.mrf.mxu0
        %v1007 = vadd.f32 0.0, %v1006
        %1008 = vmatmul.f32.gmra.mxu0 %v936
        %v1009 = vpop.f32.mrf.mxu0
        %v1010 = vadd.f32 0.0, %v1009
        %1011 = vmatmul.f32.gmra.mxu0 %v937
        %v1012 = vpop.f32.mrf.mxu0
        %v1013 = vadd.f32 0.0, %v1012
        %1014 = vmatmul.f32.gmra.mxu0 %v938
        %v1015 = vpop.f32.mrf.mxu0
        %v1016 = vadd.f32 0.0, %v1015
        %1017 = vmatmul.f32.gmra.mxu0 %v939
        %v1018 = vpop.f32.mrf.mxu0
        %v1019 = vadd.f32 0.0, %v1018
        %1020 = vmatmul.f32.gmra.mxu0 %v940
        %v1021 = vpop.f32.mrf.mxu0
        %v1022 = vadd.f32 0.0, %v1021
        %1023 = vmatmul.f32.gmra.mxu0 %v941
        %v1024 = vpop.f32.mrf.mxu0
        %v1025 = vadd.f32 0.0, %v1024
        %1026 = vmatmul.f32.gmra.mxu0 %v942
        %v1027 = vpop.f32.mrf.mxu0
        %v1028 = vadd.f32 0.0, %v1027
        %1029 = vmatmul.f32.gmra.mxu0 %v943
        %v1030 = vpop.f32.mrf.mxu0
        %v1031 = vadd.f32 0.0, %v1030
        %1032 = vmatmul.f32.gmra.mxu0 %v944
        %v1033 = vpop.f32.mrf.mxu0
        %v1034 = vadd.f32 0.0, %v1033
        %1035 = vmatmul.f32.gmra.mxu0 %v945
        %v1036 = vpop.f32.mrf.mxu0
        %v1037 = vadd.f32 0.0, %v1036
        %1038 = vmatmul.f32.gmra.mxu0 %v946
        %v1039 = vpop.f32.mrf.mxu0
        %v1040 = vadd.f32 0.0, %v1039
        %1041 = vmatmul.f32.gmra.mxu0 %v947
        %v1042 = vpop.f32.mrf.mxu0
        %v1043 = vadd.f32 0.0, %v1042
        %1044 = vmatmul.f32.gmra.mxu0 %v948
        %v1045 = vpop.f32.mrf.mxu0
        %v1046 = vadd.f32 0.0, %v1045
        %1047 = vmatmul.f32.gmra.mxu0 %v949
        %v1048 = vpop.f32.mrf.mxu0
        %v1049 = vadd.f32 0.0, %v1048
        %1050 = vmatmul.f32.gmra.mxu0 %v950
        %v1051 = vpop.f32.mrf.mxu0
        %v1052 = vadd.f32 0.0, %v1051
        %1053 = vmatmul.f32.gmra.mxu0 %v951
        %v1054 = vpop.f32.mrf.mxu0
        %v1055 = vadd.f32 0.0, %v1054
        %1056 = vmatmul.f32.gmra.mxu0 %v952
        %v1057 = vpop.f32.mrf.mxu0
        %v1058 = vadd.f32 0.0, %v1057
        %1059 = vmatmul.f32.gmra.mxu0 %v953
        %v1060 = vpop.f32.mrf.mxu0
        %v1061 = vadd.f32 0.0, %v1060
        %1062 = vmatmul.f32.gmra.mxu0 %v954
        %v1063 = vpop.f32.mrf.mxu0
        %v1064 = vadd.f32 0.0, %v1063
        %1065 = vmatmul.f32.gmra.mxu0 %v955
        %v1066 = vpop.f32.mrf.mxu0
        %v1067 = vadd.f32 0.0, %v1066
        %1068 = vmatmul.f32.gmra.mxu0 %v956
        %v1069 = vpop.f32.mrf.mxu0
        %v1070 = vadd.f32 0.0, %v1069
        %1071 = vmatmul.f32.gmra.mxu0 %v957
        %v1072 = vpop.f32.mrf.mxu0
        %v1073 = vadd.f32 0.0, %v1072
        %1074 = vmatmul.f32.gmra.mxu0 %v958
        %v1075 = vpop.f32.mrf.mxu0
        %v1076 = vadd.f32 0.0, %v1075
        %1077 = vmatmul.f32.gmra.mxu0 %v959
        %v1078 = vpop.f32.mrf.mxu0
        %v1079 = vadd.f32 0.0, %v1078
        %1080 = vmatmul.f32.gmra.mxu0 %v960
        %v1081 = vpop.f32.mrf.mxu0
        %v1082 = vadd.f32 0.0, %v1081
        %1083 = vmatmul.f32.gmra.mxu0 %v961
        %v1084 = vpop.f32.mrf.mxu0
        %v1085 = vadd.f32 0.0, %v1084
        %1086 = vmatmul.f32.gmra.mxu0 %v962
        %v1087 = vpop.f32.mrf.mxu0
        %v1088 = vadd.f32 0.0, %v1087
        %1089 = vmatmul.f32.gmra.mxu0 %v963
        %v1090 = vpop.f32.mrf.mxu0
        %v1091 = vadd.f32 0.0, %v1090
        %1092 = vdwg.mxu0
        %v1093 = vadd.f32 %v900, %v998
        %v1094 = vadd.f32 %v901, %v1001
        %v1095 = vadd.f32 %v902, %v1004
        %v1096 = vadd.f32 %v903, %v1007
        %v1097 = vadd.f32 %v904, %v1010
        %v1098 = vadd.f32 %v905, %v1013
        %v1099 = vadd.f32 %v906, %v1016
        %v1100 = vadd.f32 %v907, %v1019
        %v1101 = vadd.f32 %v908, %v1022
        %v1102 = vadd.f32 %v909, %v1025
        %v1103 = vadd.f32 %v910, %v1028
        %v1104 = vadd.f32 %v911, %v1031
        %v1105 = vadd.f32 %v912, %v1034
        %v1106 = vadd.f32 %v913, %v1037
        %v1107 = vadd.f32 %v914, %v1040
        %v1108 = vadd.f32 %v915, %v1043
        %v1109 = vadd.f32 %v916, %v1046
        %v1110 = vadd.f32 %v917, %v1049
        %v1111 = vadd.f32 %v918, %v1052
        %v1112 = vadd.f32 %v919, %v1055
        %v1113 = vadd.f32 %v920, %v1058
        %v1114 = vadd.f32 %v921, %v1061
        %v1115 = vadd.f32 %v922, %v1064
        %v1116 = vadd.f32 %v923, %v1067
        %v1117 = vadd.f32 %v924, %v1070
        %v1118 = vadd.f32 %v925, %v1073
        %v1119 = vadd.f32 %v926, %v1076
        %v1120 = vadd.f32 %v927, %v1079
        %v1121 = vadd.f32 %v928, %v1082
        %v1122 = vadd.f32 %v929, %v1085
        %v1123 = vadd.f32 %v930, %v1088
        %v1124 = vadd.f32 %v931, %v1091
        %v1125 = vld [vmem:[%s383 + $0x1] sm:$0xff]
        %v1126 = vld [vmem:[%s383 + $0x9] sm:$0xff]
        %v1127 = vld [vmem:[%s383 + $0x19] sm:$0xff]
        %v1128 = vld [vmem:[%s383 + $0x21] sm:$0xff]
        %v1129 = vld [vmem:[%s383 + $0x31] sm:$0xff]
        %v1130 = vld [vmem:[%s383 + $0x39] sm:$0xff]
        %v1131 = vld [vmem:[%s383 + $0x49] sm:$0xff]
        %v1132 = vld [vmem:[%s383 + $0x51] sm:$0xff]
        %v1133 = vld [vmem:[%s383 + $0x61] sm:$0xff]
        %v1134 = vld [vmem:[%s383 + $0x69] sm:$0xff]
        %v1135 = vld [vmem:[%s383 + $0x79] sm:$0xff]
        %v1136 = vld [vmem:[%s383 + $0x81] sm:$0xff]
        %v1137 = vld [vmem:[%s383 + $0x91] sm:$0xff]
        %v1138 = vld [vmem:[%s383 + $0x99] sm:$0xff]
        %v1139 = vld [vmem:[%s383 + $0xa9] sm:$0xff]
        %v1140 = vld [vmem:[%s383 + $0xb1] sm:$0xff]
        %v1141 = vld [vmem:[%s383 + $0xc1] sm:$0xff]
        %v1142 = vld [vmem:[%s383 + $0xc9] sm:$0xff]
        %v1143 = vld [vmem:[%s383 + $0xd9] sm:$0xff]
        %v1144 = vld [vmem:[%s383 + $0xe1] sm:$0xff]
        %v1145 = vld [vmem:[%s383 + $0xf1] sm:$0xff]
        %v1146 = vld [vmem:[%s383 + $0xf9] sm:$0xff]
        %v1147 = vld [vmem:[%s383 + $0x109] sm:$0xff]
        %v1148 = vld [vmem:[%s383 + $0x111] sm:$0xff]
        %v1149 = vld [vmem:[%s383 + $0x121] sm:$0xff]
        %v1150 = vld [vmem:[%s383 + $0x129] sm:$0xff]
        %v1151 = vld [vmem:[%s383 + $0x139] sm:$0xff]
        %v1152 = vld [vmem:[%s383 + $0x141] sm:$0xff]
        %v1153 = vld [vmem:[%s383 + $0x151] sm:$0xff]
        %v1154 = vld [vmem:[%s383 + $0x159] sm:$0xff]
        %v1155 = vld [vmem:[%s383 + $0x169] sm:$0xff]
        %v1156 = vld [vmem:[%s383 + $0x171] sm:$0xff]
        %v1157 = vld [vmem:[%s2 + $0x200] sm:$0xff]
        %v1158 = vld [vmem:[%s2 + $0x208] sm:$0xff]
        %v1159 = vld [vmem:[%s2 + $0x210] sm:$0xff]
        %v1160 = vld [vmem:[%s2 + $0x218] sm:$0xff]
        %v1161 = vld [vmem:[%s2 + $0x220] sm:$0xff]
        %v1162 = vld [vmem:[%s2 + $0x228] sm:$0xff]
        %v1163 = vld [vmem:[%s2 + $0x230] sm:$0xff]
        %v1164 = vld [vmem:[%s2 + $0x238] sm:$0xff]
        %v1165 = vld [vmem:[%s2 + $0x240] sm:$0xff]
        %v1166 = vld [vmem:[%s2 + $0x248] sm:$0xff]
        %v1167 = vld [vmem:[%s2 + $0x250] sm:$0xff]
        %v1168 = vld [vmem:[%s2 + $0x258] sm:$0xff]
        %v1169 = vld [vmem:[%s2 + $0x260] sm:$0xff]
        %v1170 = vld [vmem:[%s2 + $0x268] sm:$0xff]
        %v1171 = vld [vmem:[%s2 + $0x270] sm:$0xff]
        %v1172 = vld [vmem:[%s2 + $0x278] sm:$0xff]
        %1173 = vmatpush.msra.mxu0 %v1172
        %1174 = vmatpush.msra.mxu0 %v1171
        %1175 = vmatpush.msra.mxu0 %v1170
        %1176 = vmatpush.msra.mxu0 %v1169
        %1177 = vmatpush.msra.mxu0 %v1168
        %1178 = vmatpush.msra.mxu0 %v1167
        %1179 = vmatpush.msra.mxu0 %v1166
        %1180 = vmatpush.msra.mxu0 %v1165
        %1181 = vmatpush.msra.mxu0 %v1164
        %1182 = vmatpush.msra.mxu0 %v1163
        %1183 = vmatpush.msra.mxu0 %v1162
        %1184 = vmatpush.msra.mxu0 %v1161
        %1185 = vmatpush.msra.mxu0 %v1160
        %1186 = vmatpush.msra.mxu0 %v1159
        %1187 = vmatpush.msra.mxu0 %v1158
        %1188 = vmatpush.msra.mxu0 %v1157
        %1189 = vmatmul.f32.gmra.mxu0 %v1125
        %v1190 = vpop.f32.mrf.mxu0
        %v1191 = vadd.f32 0.0, %v1190
        %1192 = vmatmul.f32.gmra.mxu0 %v1126
        %v1193 = vpop.f32.mrf.mxu0
        %v1194 = vadd.f32 0.0, %v1193
        %1195 = vmatmul.f32.gmra.mxu0 %v1127
        %v1196 = vpop.f32.mrf.mxu0
        %v1197 = vadd.f32 0.0, %v1196
        %1198 = vmatmul.f32.gmra.mxu0 %v1128
        %v1199 = vpop.f32.mrf.mxu0
        %v1200 = vadd.f32 0.0, %v1199
        %1201 = vmatmul.f32.gmra.mxu0 %v1129
        %v1202 = vpop.f32.mrf.mxu0
        %v1203 = vadd.f32 0.0, %v1202
        %1204 = vmatmul.f32.gmra.mxu0 %v1130
        %v1205 = vpop.f32.mrf.mxu0
        %v1206 = vadd.f32 0.0, %v1205
        %1207 = vmatmul.f32.gmra.mxu0 %v1131
        %v1208 = vpop.f32.mrf.mxu0
        %v1209 = vadd.f32 0.0, %v1208
        %1210 = vmatmul.f32.gmra.mxu0 %v1132
        %v1211 = vpop.f32.mrf.mxu0
        %v1212 = vadd.f32 0.0, %v1211
        %1213 = vmatmul.f32.gmra.mxu0 %v1133
        %v1214 = vpop.f32.mrf.mxu0
        %v1215 = vadd.f32 0.0, %v1214
        %1216 = vmatmul.f32.gmra.mxu0 %v1134
        %v1217 = vpop.f32.mrf.mxu0
        %v1218 = vadd.f32 0.0, %v1217
        %1219 = vmatmul.f32.gmra.mxu0 %v1135
        %v1220 = vpop.f32.mrf.mxu0
        %v1221 = vadd.f32 0.0, %v1220
        %1222 = vmatmul.f32.gmra.mxu0 %v1136
        %v1223 = vpop.f32.mrf.mxu0
        %v1224 = vadd.f32 0.0, %v1223
        %1225 = vmatmul.f32.gmra.mxu0 %v1137
        %v1226 = vpop.f32.mrf.mxu0
        %v1227 = vadd.f32 0.0, %v1226
        %1228 = vmatmul.f32.gmra.mxu0 %v1138
        %v1229 = vpop.f32.mrf.mxu0
        %v1230 = vadd.f32 0.0, %v1229
        %1231 = vmatmul.f32.gmra.mxu0 %v1139
        %v1232 = vpop.f32.mrf.mxu0
        %v1233 = vadd.f32 0.0, %v1232
        %1234 = vmatmul.f32.gmra.mxu0 %v1140
        %v1235 = vpop.f32.mrf.mxu0
        %v1236 = vadd.f32 0.0, %v1235
        %1237 = vmatmul.f32.gmra.mxu0 %v1141
        %v1238 = vpop.f32.mrf.mxu0
        %v1239 = vadd.f32 0.0, %v1238
        %1240 = vmatmul.f32.gmra.mxu0 %v1142
        %v1241 = vpop.f32.mrf.mxu0
        %v1242 = vadd.f32 0.0, %v1241
        %1243 = vmatmul.f32.gmra.mxu0 %v1143
        %v1244 = vpop.f32.mrf.mxu0
        %v1245 = vadd.f32 0.0, %v1244
        %1246 = vmatmul.f32.gmra.mxu0 %v1144
        %v1247 = vpop.f32.mrf.mxu0
        %v1248 = vadd.f32 0.0, %v1247
        %1249 = vmatmul.f32.gmra.mxu0 %v1145
        %v1250 = vpop.f32.mrf.mxu0
        %v1251 = vadd.f32 0.0, %v1250
        %1252 = vmatmul.f32.gmra.mxu0 %v1146
        %v1253 = vpop.f32.mrf.mxu0
        %v1254 = vadd.f32 0.0, %v1253
        %1255 = vmatmul.f32.gmra.mxu0 %v1147
        %v1256 = vpop.f32.mrf.mxu0
        %v1257 = vadd.f32 0.0, %v1256
        %1258 = vmatmul.f32.gmra.mxu0 %v1148
        %v1259 = vpop.f32.mrf.mxu0
        %v1260 = vadd.f32 0.0, %v1259
        %1261 = vmatmul.f32.gmra.mxu0 %v1149
        %v1262 = vpop.f32.mrf.mxu0
        %v1263 = vadd.f32 0.0, %v1262
        %1264 = vmatmul.f32.gmra.mxu0 %v1150
        %v1265 = vpop.f32.mrf.mxu0
        %v1266 = vadd.f32 0.0, %v1265
        %1267 = vmatmul.f32.gmra.mxu0 %v1151
        %v1268 = vpop.f32.mrf.mxu0
        %v1269 = vadd.f32 0.0, %v1268
        %1270 = vmatmul.f32.gmra.mxu0 %v1152
        %v1271 = vpop.f32.mrf.mxu0
        %v1272 = vadd.f32 0.0, %v1271
        %1273 = vmatmul.f32.gmra.mxu0 %v1153
        %v1274 = vpop.f32.mrf.mxu0
        %v1275 = vadd.f32 0.0, %v1274
        %1276 = vmatmul.f32.gmra.mxu0 %v1154
        %v1277 = vpop.f32.mrf.mxu0
        %v1278 = vadd.f32 0.0, %v1277
        %1279 = vmatmul.f32.gmra.mxu0 %v1155
        %v1280 = vpop.f32.mrf.mxu0
        %v1281 = vadd.f32 0.0, %v1280
        %1282 = vmatmul.f32.gmra.mxu0 %v1156
        %v1283 = vpop.f32.mrf.mxu0
        %v1284 = vadd.f32 0.0, %v1283
        %1285 = vdwg.mxu0
        %v1286 = vadd.f32 %v1093, %v1191
        %v1287 = vadd.f32 %v1094, %v1194
        %v1288 = vadd.f32 %v1095, %v1197
        %v1289 = vadd.f32 %v1096, %v1200
        %v1290 = vadd.f32 %v1097, %v1203
        %v1291 = vadd.f32 %v1098, %v1206
        %v1292 = vadd.f32 %v1099, %v1209
        %v1293 = vadd.f32 %v1100, %v1212
        %v1294 = vadd.f32 %v1101, %v1215
        %v1295 = vadd.f32 %v1102, %v1218
        %v1296 = vadd.f32 %v1103, %v1221
        %v1297 = vadd.f32 %v1104, %v1224
        %v1298 = vadd.f32 %v1105, %v1227
        %v1299 = vadd.f32 %v1106, %v1230
        %v1300 = vadd.f32 %v1107, %v1233
        %v1301 = vadd.f32 %v1108, %v1236
        %v1302 = vadd.f32 %v1109, %v1239
        %v1303 = vadd.f32 %v1110, %v1242
        %v1304 = vadd.f32 %v1111, %v1245
        %v1305 = vadd.f32 %v1112, %v1248
        %v1306 = vadd.f32 %v1113, %v1251
        %v1307 = vadd.f32 %v1114, %v1254
        %v1308 = vadd.f32 %v1115, %v1257
        %v1309 = vadd.f32 %v1116, %v1260
        %v1310 = vadd.f32 %v1117, %v1263
        %v1311 = vadd.f32 %v1118, %v1266
        %v1312 = vadd.f32 %v1119, %v1269
        %v1313 = vadd.f32 %v1120, %v1272
        %v1314 = vadd.f32 %v1121, %v1275
        %v1315 = vadd.f32 %v1122, %v1278
        %v1316 = vadd.f32 %v1123, %v1281
        %v1317 = vadd.f32 %v1124, %v1284
        %v1318 = vld [vmem:[%s383 + $0x2] sm:$0xff]
        %v1319 = vld [vmem:[%s383 + $0xa] sm:$0xff]
        %v1320 = vld [vmem:[%s383 + $0x1a] sm:$0xff]
        %v1321 = vld [vmem:[%s383 + $0x22] sm:$0xff]
        %v1322 = vld [vmem:[%s383 + $0x32] sm:$0xff]
        %v1323 = vld [vmem:[%s383 + $0x3a] sm:$0xff]
        %v1324 = vld [vmem:[%s383 + $0x4a] sm:$0xff]
        %v1325 = vld [vmem:[%s383 + $0x52] sm:$0xff]
        %v1326 = vld [vmem:[%s383 + $0x62] sm:$0xff]
        %v1327 = vld [vmem:[%s383 + $0x6a] sm:$0xff]
        %v1328 = vld [vmem:[%s383 + $0x7a] sm:$0xff]
        %v1329 = vld [vmem:[%s383 + $0x82] sm:$0xff]
        %v1330 = vld [vmem:[%s383 + $0x92] sm:$0xff]
        %v1331 = vld [vmem:[%s383 + $0x9a] sm:$0xff]
        %v1332 = vld [vmem:[%s383 + $0xaa] sm:$0xff]
        %v1333 = vld [vmem:[%s383 + $0xb2] sm:$0xff]
        %v1334 = vld [vmem:[%s383 + $0xc2] sm:$0xff]
        %v1335 = vld [vmem:[%s383 + $0xca] sm:$0xff]
        %v1336 = vld [vmem:[%s383 + $0xda] sm:$0xff]
        %v1337 = vld [vmem:[%s383 + $0xe2] sm:$0xff]
        %v1338 = vld [vmem:[%s383 + $0xf2] sm:$0xff]
        %v1339 = vld [vmem:[%s383 + $0xfa] sm:$0xff]
        %v1340 = vld [vmem:[%s383 + $0x10a] sm:$0xff]
        %v1341 = vld [vmem:[%s383 + $0x112] sm:$0xff]
        %v1342 = vld [vmem:[%s383 + $0x122] sm:$0xff]
        %v1343 = vld [vmem:[%s383 + $0x12a] sm:$0xff]
        %v1344 = vld [vmem:[%s383 + $0x13a] sm:$0xff]
        %v1345 = vld [vmem:[%s383 + $0x142] sm:$0xff]
        %v1346 = vld [vmem:[%s383 + $0x152] sm:$0xff]
        %v1347 = vld [vmem:[%s383 + $0x15a] sm:$0xff]
        %v1348 = vld [vmem:[%s383 + $0x16a] sm:$0xff]
        %v1349 = vld [vmem:[%s383 + $0x172] sm:$0xff]
        %v1350 = vld [vmem:[%s2 + $0x280] sm:$0xff]
        %v1351 = vld [vmem:[%s2 + $0x288] sm:$0xff]
        %v1352 = vld [vmem:[%s2 + $0x290] sm:$0xff]
        %v1353 = vld [vmem:[%s2 + $0x298] sm:$0xff]
        %v1354 = vld [vmem:[%s2 + $0x2a0] sm:$0xff]
        %v1355 = vld [vmem:[%s2 + $0x2a8] sm:$0xff]
        %v1356 = vld [vmem:[%s2 + $0x2b0] sm:$0xff]
        %v1357 = vld [vmem:[%s2 + $0x2b8] sm:$0xff]
        %v1358 = vld [vmem:[%s2 + $0x2c0] sm:$0xff]
        %v1359 = vld [vmem:[%s2 + $0x2c8] sm:$0xff]
        %v1360 = vld [vmem:[%s2 + $0x2d0] sm:$0xff]
        %v1361 = vld [vmem:[%s2 + $0x2d8] sm:$0xff]
        %v1362 = vld [vmem:[%s2 + $0x2e0] sm:$0xff]
        %v1363 = vld [vmem:[%s2 + $0x2e8] sm:$0xff]
        %v1364 = vld [vmem:[%s2 + $0x2f0] sm:$0xff]
        %v1365 = vld [vmem:[%s2 + $0x2f8] sm:$0xff]
        %1366 = vmatpush.msra.mxu0 %v1365
        %1367 = vmatpush.msra.mxu0 %v1364
        %1368 = vmatpush.msra.mxu0 %v1363
        %1369 = vmatpush.msra.mxu0 %v1362
        %1370 = vmatpush.msra.mxu0 %v1361
        %1371 = vmatpush.msra.mxu0 %v1360
        %1372 = vmatpush.msra.mxu0 %v1359
        %1373 = vmatpush.msra.mxu0 %v1358
        %1374 = vmatpush.msra.mxu0 %v1357
        %1375 = vmatpush.msra.mxu0 %v1356
        %1376 = vmatpush.msra.mxu0 %v1355
        %1377 = vmatpush.msra.mxu0 %v1354
        %1378 = vmatpush.msra.mxu0 %v1353
        %1379 = vmatpush.msra.mxu0 %v1352
        %1380 = vmatpush.msra.mxu0 %v1351
        %1381 = vmatpush.msra.mxu0 %v1350
        %1382 = vmatmul.f32.gmra.mxu0 %v1318
        %v1383 = vpop.f32.mrf.mxu0
        %v1384 = vadd.f32 0.0, %v1383
        %1385 = vmatmul.f32.gmra.mxu0 %v1319
        %v1386 = vpop.f32.mrf.mxu0
        %v1387 = vadd.f32 0.0, %v1386
        %1388 = vmatmul.f32.gmra.mxu0 %v1320
        %v1389 = vpop.f32.mrf.mxu0
        %v1390 = vadd.f32 0.0, %v1389
        %1391 = vmatmul.f32.gmra.mxu0 %v1321
        %v1392 = vpop.f32.mrf.mxu0
        %v1393 = vadd.f32 0.0, %v1392
        %1394 = vmatmul.f32.gmra.mxu0 %v1322
        %v1395 = vpop.f32.mrf.mxu0
        %v1396 = vadd.f32 0.0, %v1395
        %1397 = vmatmul.f32.gmra.mxu0 %v1323
        %v1398 = vpop.f32.mrf.mxu0
        %v1399 = vadd.f32 0.0, %v1398
        %1400 = vmatmul.f32.gmra.mxu0 %v1324
        %v1401 = vpop.f32.mrf.mxu0
        %v1402 = vadd.f32 0.0, %v1401
        %1403 = vmatmul.f32.gmra.mxu0 %v1325
        %v1404 = vpop.f32.mrf.mxu0
        %v1405 = vadd.f32 0.0, %v1404
        %1406 = vmatmul.f32.gmra.mxu0 %v1326
        %v1407 = vpop.f32.mrf.mxu0
        %v1408 = vadd.f32 0.0, %v1407
        %1409 = vmatmul.f32.gmra.mxu0 %v1327
        %v1410 = vpop.f32.mrf.mxu0
        %v1411 = vadd.f32 0.0, %v1410
        %1412 = vmatmul.f32.gmra.mxu0 %v1328
        %v1413 = vpop.f32.mrf.mxu0
        %v1414 = vadd.f32 0.0, %v1413
        %1415 = vmatmul.f32.gmra.mxu0 %v1329
        %v1416 = vpop.f32.mrf.mxu0
        %v1417 = vadd.f32 0.0, %v1416
        %1418 = vmatmul.f32.gmra.mxu0 %v1330
        %v1419 = vpop.f32.mrf.mxu0
        %v1420 = vadd.f32 0.0, %v1419
        %1421 = vmatmul.f32.gmra.mxu0 %v1331
        %v1422 = vpop.f32.mrf.mxu0
        %v1423 = vadd.f32 0.0, %v1422
        %1424 = vmatmul.f32.gmra.mxu0 %v1332
        %v1425 = vpop.f32.mrf.mxu0
        %v1426 = vadd.f32 0.0, %v1425
        %1427 = vmatmul.f32.gmra.mxu0 %v1333
        %v1428 = vpop.f32.mrf.mxu0
        %v1429 = vadd.f32 0.0, %v1428
        %1430 = vmatmul.f32.gmra.mxu0 %v1334
        %v1431 = vpop.f32.mrf.mxu0
        %v1432 = vadd.f32 0.0, %v1431
        %1433 = vmatmul.f32.gmra.mxu0 %v1335
        %v1434 = vpop.f32.mrf.mxu0
        %v1435 = vadd.f32 0.0, %v1434
        %1436 = vmatmul.f32.gmra.mxu0 %v1336
        %v1437 = vpop.f32.mrf.mxu0
        %v1438 = vadd.f32 0.0, %v1437
        %1439 = vmatmul.f32.gmra.mxu0 %v1337
        %v1440 = vpop.f32.mrf.mxu0
        %v1441 = vadd.f32 0.0, %v1440
        %1442 = vmatmul.f32.gmra.mxu0 %v1338
        %v1443 = vpop.f32.mrf.mxu0
        %v1444 = vadd.f32 0.0, %v1443
        %1445 = vmatmul.f32.gmra.mxu0 %v1339
        %v1446 = vpop.f32.mrf.mxu0
        %v1447 = vadd.f32 0.0, %v1446
        %1448 = vmatmul.f32.gmra.mxu0 %v1340
        %v1449 = vpop.f32.mrf.mxu0
        %v1450 = vadd.f32 0.0, %v1449
        %1451 = vmatmul.f32.gmra.mxu0 %v1341
        %v1452 = vpop.f32.mrf.mxu0
        %v1453 = vadd.f32 0.0, %v1452
        %1454 = vmatmul.f32.gmra.mxu0 %v1342
        %v1455 = vpop.f32.mrf.mxu0
        %v1456 = vadd.f32 0.0, %v1455
        %1457 = vmatmul.f32.gmra.mxu0 %v1343
        %v1458 = vpop.f32.mrf.mxu0
        %v1459 = vadd.f32 0.0, %v1458
        %1460 = vmatmul.f32.gmra.mxu0 %v1344
        %v1461 = vpop.f32.mrf.mxu0
        %v1462 = vadd.f32 0.0, %v1461
        %1463 = vmatmul.f32.gmra.mxu0 %v1345
        %v1464 = vpop.f32.mrf.mxu0
        %v1465 = vadd.f32 0.0, %v1464
        %1466 = vmatmul.f32.gmra.mxu0 %v1346
        %v1467 = vpop.f32.mrf.mxu0
        %v1468 = vadd.f32 0.0, %v1467
        %1469 = vmatmul.f32.gmra.mxu0 %v1347
        %v1470 = vpop.f32.mrf.mxu0
        %v1471 = vadd.f32 0.0, %v1470
        %1472 = vmatmul.f32.gmra.mxu0 %v1348
        %v1473 = vpop.f32.mrf.mxu0
        %v1474 = vadd.f32 0.0, %v1473
        %1475 = vmatmul.f32.gmra.mxu0 %v1349
        %v1476 = vpop.f32.mrf.mxu0
        %v1477 = vadd.f32 0.0, %v1476
        %1478 = vdwg.mxu0
        %v1479 = vadd.f32 %v1286, %v1384
        %v1480 = vadd.f32 %v1287, %v1387
        %v1481 = vadd.f32 %v1288, %v1390
        %v1482 = vadd.f32 %v1289, %v1393
        %v1483 = vadd.f32 %v1290, %v1396
        %v1484 = vadd.f32 %v1291, %v1399
        %v1485 = vadd.f32 %v1292, %v1402
        %v1486 = vadd.f32 %v1293, %v1405
        %v1487 = vadd.f32 %v1294, %v1408
        %v1488 = vadd.f32 %v1295, %v1411
        %v1489 = vadd.f32 %v1296, %v1414
        %v1490 = vadd.f32 %v1297, %v1417
        %v1491 = vadd.f32 %v1298, %v1420
        %v1492 = vadd.f32 %v1299, %v1423
        %v1493 = vadd.f32 %v1300, %v1426
        %v1494 = vadd.f32 %v1301, %v1429
        %v1495 = vadd.f32 %v1302, %v1432
        %v1496 = vadd.f32 %v1303, %v1435
        %v1497 = vadd.f32 %v1304, %v1438
        %v1498 = vadd.f32 %v1305, %v1441
        %v1499 = vadd.f32 %v1306, %v1444
        %v1500 = vadd.f32 %v1307, %v1447
        %v1501 = vadd.f32 %v1308, %v1450
        %v1502 = vadd.f32 %v1309, %v1453
        %v1503 = vadd.f32 %v1310, %v1456
        %v1504 = vadd.f32 %v1311, %v1459
        %v1505 = vadd.f32 %v1312, %v1462
        %v1506 = vadd.f32 %v1313, %v1465
        %v1507 = vadd.f32 %v1314, %v1468
        %v1508 = vadd.f32 %v1315, %v1471
        %v1509 = vadd.f32 %v1316, %v1474
        %v1510 = vadd.f32 %v1317, %v1477
        %s1511 = scalar_lea.vmem [#allocation2], 48
        %v1512 = vld [vmem:[%s1511] sm:$0xff]
        %v1513 = vld [vmem:[%s1511 + $0x8] sm:$0xff]
        %v1514 = vld [vmem:[%s1511 + $0x18] sm:$0xff]
        %v1515 = vld [vmem:[%s1511 + $0x20] sm:$0xff]
        %v1516 = vld [vmem:[%s1511 + $0x30] sm:$0xff]
        %v1517 = vld [vmem:[%s1511 + $0x38] sm:$0xff]
        %v1518 = vld [vmem:[%s1511 + $0x48] sm:$0xff]
        %v1519 = vld [vmem:[%s1511 + $0x50] sm:$0xff]
        %v1520 = vld [vmem:[%s1511 + $0x60] sm:$0xff]
        %v1521 = vld [vmem:[%s1511 + $0x68] sm:$0xff]
        %v1522 = vld [vmem:[%s1511 + $0x78] sm:$0xff]
        %v1523 = vld [vmem:[%s1511 + $0x80] sm:$0xff]
        %v1524 = vld [vmem:[%s1511 + $0x90] sm:$0xff]
        %v1525 = vld [vmem:[%s1511 + $0x98] sm:$0xff]
        %v1526 = vld [vmem:[%s1511 + $0xa8] sm:$0xff]
        %v1527 = vld [vmem:[%s1511 + $0xb0] sm:$0xff]
        %v1528 = vld [vmem:[%s1511 + $0xc0] sm:$0xff]
        %v1529 = vld [vmem:[%s1511 + $0xc8] sm:$0xff]
        %v1530 = vld [vmem:[%s1511 + $0xd8] sm:$0xff]
        %v1531 = vld [vmem:[%s1511 + $0xe0] sm:$0xff]
        %v1532 = vld [vmem:[%s1511 + $0xf0] sm:$0xff]
        %v1533 = vld [vmem:[%s1511 + $0xf8] sm:$0xff]
        %v1534 = vld [vmem:[%s1511 + $0x108] sm:$0xff]
        %v1535 = vld [vmem:[%s1511 + $0x110] sm:$0xff]
        %v1536 = vld [vmem:[%s1511 + $0x120] sm:$0xff]
        %v1537 = vld [vmem:[%s1511 + $0x128] sm:$0xff]
        %v1538 = vld [vmem:[%s1511 + $0x138] sm:$0xff]
        %v1539 = vld [vmem:[%s1511 + $0x140] sm:$0xff]
        %v1540 = vld [vmem:[%s1511 + $0x150] sm:$0xff]
        %v1541 = vld [vmem:[%s1511 + $0x158] sm:$0xff]
        %v1542 = vld [vmem:[%s1511 + $0x168] sm:$0xff]
        %v1543 = vld [vmem:[%s1511 + $0x170] sm:$0xff]
        %v1544 = vld [vmem:[%s2 + $0x300] sm:$0xff]
        %v1545 = vld [vmem:[%s2 + $0x308] sm:$0xff]
        %v1546 = vld [vmem:[%s2 + $0x310] sm:$0xff]
        %v1547 = vld [vmem:[%s2 + $0x318] sm:$0xff]
        %v1548 = vld [vmem:[%s2 + $0x320] sm:$0xff]
        %v1549 = vld [vmem:[%s2 + $0x328] sm:$0xff]
        %v1550 = vld [vmem:[%s2 + $0x330] sm:$0xff]
        %v1551 = vld [vmem:[%s2 + $0x338] sm:$0xff]
        %v1552 = vld [vmem:[%s2 + $0x340] sm:$0xff]
        %v1553 = vld [vmem:[%s2 + $0x348] sm:$0xff]
        %v1554 = vld [vmem:[%s2 + $0x350] sm:$0xff]
        %v1555 = vld [vmem:[%s2 + $0x358] sm:$0xff]
        %v1556 = vld [vmem:[%s2 + $0x360] sm:$0xff]
        %v1557 = vld [vmem:[%s2 + $0x368] sm:$0xff]
        %v1558 = vld [vmem:[%s2 + $0x370] sm:$0xff]
        %v1559 = vld [vmem:[%s2 + $0x378] sm:$0xff]
        %1560 = vmatpush.msra.mxu0 %v1559
        %1561 = vmatpush.msra.mxu0 %v1558
        %1562 = vmatpush.msra.mxu0 %v1557
        %1563 = vmatpush.msra.mxu0 %v1556
        %1564 = vmatpush.msra.mxu0 %v1555
        %1565 = vmatpush.msra.mxu0 %v1554
        %1566 = vmatpush.msra.mxu0 %v1553
        %1567 = vmatpush.msra.mxu0 %v1552
        %1568 = vmatpush.msra.mxu0 %v1551
        %1569 = vmatpush.msra.mxu0 %v1550
        %1570 = vmatpush.msra.mxu0 %v1549
        %1571 = vmatpush.msra.mxu0 %v1548
        %1572 = vmatpush.msra.mxu0 %v1547
        %1573 = vmatpush.msra.mxu0 %v1546
        %1574 = vmatpush.msra.mxu0 %v1545
        %1575 = vmatpush.msra.mxu0 %v1544
        %1576 = vmatmul.f32.gmra.mxu0 %v1512
        %v1577 = vpop.f32.mrf.mxu0
        %v1578 = vadd.f32 0.0, %v1577
        %1579 = vmatmul.f32.gmra.mxu0 %v1513
        %v1580 = vpop.f32.mrf.mxu0
        %v1581 = vadd.f32 0.0, %v1580
        %1582 = vmatmul.f32.gmra.mxu0 %v1514
        %v1583 = vpop.f32.mrf.mxu0
        %v1584 = vadd.f32 0.0, %v1583
        %1585 = vmatmul.f32.gmra.mxu0 %v1515
        %v1586 = vpop.f32.mrf.mxu0
        %v1587 = vadd.f32 0.0, %v1586
        %1588 = vmatmul.f32.gmra.mxu0 %v1516
        %v1589 = vpop.f32.mrf.mxu0
        %v1590 = vadd.f32 0.0, %v1589
        %1591 = vmatmul.f32.gmra.mxu0 %v1517
        %v1592 = vpop.f32.mrf.mxu0
        %v1593 = vadd.f32 0.0, %v1592
        %1594 = vmatmul.f32.gmra.mxu0 %v1518
        %v1595 = vpop.f32.mrf.mxu0
        %v1596 = vadd.f32 0.0, %v1595
        %1597 = vmatmul.f32.gmra.mxu0 %v1519
        %v1598 = vpop.f32.mrf.mxu0
        %v1599 = vadd.f32 0.0, %v1598
        %1600 = vmatmul.f32.gmra.mxu0 %v1520
        %v1601 = vpop.f32.mrf.mxu0
        %v1602 = vadd.f32 0.0, %v1601
        %1603 = vmatmul.f32.gmra.mxu0 %v1521
        %v1604 = vpop.f32.mrf.mxu0
        %v1605 = vadd.f32 0.0, %v1604
        %1606 = vmatmul.f32.gmra.mxu0 %v1522
        %v1607 = vpop.f32.mrf.mxu0
        %v1608 = vadd.f32 0.0, %v1607
        %1609 = vmatmul.f32.gmra.mxu0 %v1523
        %v1610 = vpop.f32.mrf.mxu0
        %v1611 = vadd.f32 0.0, %v1610
        %1612 = vmatmul.f32.gmra.mxu0 %v1524
        %v1613 = vpop.f32.mrf.mxu0
        %v1614 = vadd.f32 0.0, %v1613
        %1615 = vmatmul.f32.gmra.mxu0 %v1525
        %v1616 = vpop.f32.mrf.mxu0
        %v1617 = vadd.f32 0.0, %v1616
        %1618 = vmatmul.f32.gmra.mxu0 %v1526
        %v1619 = vpop.f32.mrf.mxu0
        %v1620 = vadd.f32 0.0, %v1619
        %1621 = vmatmul.f32.gmra.mxu0 %v1527
        %v1622 = vpop.f32.mrf.mxu0
        %v1623 = vadd.f32 0.0, %v1622
        %1624 = vmatmul.f32.gmra.mxu0 %v1528
        %v1625 = vpop.f32.mrf.mxu0
        %v1626 = vadd.f32 0.0, %v1625
        %1627 = vmatmul.f32.gmra.mxu0 %v1529
        %v1628 = vpop.f32.mrf.mxu0
        %v1629 = vadd.f32 0.0, %v1628
        %1630 = vmatmul.f32.gmra.mxu0 %v1530
        %v1631 = vpop.f32.mrf.mxu0
        %v1632 = vadd.f32 0.0, %v1631
        %1633 = vmatmul.f32.gmra.mxu0 %v1531
        %v1634 = vpop.f32.mrf.mxu0
        %v1635 = vadd.f32 0.0, %v1634
        %1636 = vmatmul.f32.gmra.mxu0 %v1532
        %v1637 = vpop.f32.mrf.mxu0
        %v1638 = vadd.f32 0.0, %v1637
        %1639 = vmatmul.f32.gmra.mxu0 %v1533
        %v1640 = vpop.f32.mrf.mxu0
        %v1641 = vadd.f32 0.0, %v1640
        %1642 = vmatmul.f32.gmra.mxu0 %v1534
        %v1643 = vpop.f32.mrf.mxu0
        %v1644 = vadd.f32 0.0, %v1643
        %1645 = vmatmul.f32.gmra.mxu0 %v1535
        %v1646 = vpop.f32.mrf.mxu0
        %v1647 = vadd.f32 0.0, %v1646
        %1648 = vmatmul.f32.gmra.mxu0 %v1536
        %v1649 = vpop.f32.mrf.mxu0
        %v1650 = vadd.f32 0.0, %v1649
        %1651 = vmatmul.f32.gmra.mxu0 %v1537
        %v1652 = vpop.f32.mrf.mxu0
        %v1653 = vadd.f32 0.0, %v1652
        %1654 = vmatmul.f32.gmra.mxu0 %v1538
        %v1655 = vpop.f32.mrf.mxu0
        %v1656 = vadd.f32 0.0, %v1655
        %1657 = vmatmul.f32.gmra.mxu0 %v1539
        %v1658 = vpop.f32.mrf.mxu0
        %v1659 = vadd.f32 0.0, %v1658
        %1660 = vmatmul.f32.gmra.mxu0 %v1540
        %v1661 = vpop.f32.mrf.mxu0
        %v1662 = vadd.f32 0.0, %v1661
        %1663 = vmatmul.f32.gmra.mxu0 %v1541
        %v1664 = vpop.f32.mrf.mxu0
        %v1665 = vadd.f32 0.0, %v1664
        %1666 = vmatmul.f32.gmra.mxu0 %v1542
        %v1667 = vpop.f32.mrf.mxu0
        %v1668 = vadd.f32 0.0, %v1667
        %1669 = vmatmul.f32.gmra.mxu0 %v1543
        %v1670 = vpop.f32.mrf.mxu0
        %v1671 = vadd.f32 0.0, %v1670
        %1672 = vdwg.mxu0
        %v1673 = vadd.f32 %v1479, %v1578
        %v1674 = vadd.f32 %v1480, %v1581
        %v1675 = vadd.f32 %v1481, %v1584
        %v1676 = vadd.f32 %v1482, %v1587
        %v1677 = vadd.f32 %v1483, %v1590
        %v1678 = vadd.f32 %v1484, %v1593
        %v1679 = vadd.f32 %v1485, %v1596
        %v1680 = vadd.f32 %v1486, %v1599
        %v1681 = vadd.f32 %v1487, %v1602
        %v1682 = vadd.f32 %v1488, %v1605
        %v1683 = vadd.f32 %v1489, %v1608
        %v1684 = vadd.f32 %v1490, %v1611
        %v1685 = vadd.f32 %v1491, %v1614
        %v1686 = vadd.f32 %v1492, %v1617
        %v1687 = vadd.f32 %v1493, %v1620
        %v1688 = vadd.f32 %v1494, %v1623
        %v1689 = vadd.f32 %v1495, %v1626
        %v1690 = vadd.f32 %v1496, %v1629
        %v1691 = vadd.f32 %v1497, %v1632
        %v1692 = vadd.f32 %v1498, %v1635
        %v1693 = vadd.f32 %v1499, %v1638
        %v1694 = vadd.f32 %v1500, %v1641
        %v1695 = vadd.f32 %v1501, %v1644
        %v1696 = vadd.f32 %v1502, %v1647
        %v1697 = vadd.f32 %v1503, %v1650
        %v1698 = vadd.f32 %v1504, %v1653
        %v1699 = vadd.f32 %v1505, %v1656
        %v1700 = vadd.f32 %v1506, %v1659
        %v1701 = vadd.f32 %v1507, %v1662
        %v1702 = vadd.f32 %v1508, %v1665
        %v1703 = vadd.f32 %v1509, %v1668
        %v1704 = vadd.f32 %v1510, %v1671
        %v1705 = vld [vmem:[%s1511 + $0x1] sm:$0xff]
        %v1706 = vld [vmem:[%s1511 + $0x9] sm:$0xff]
        %v1707 = vld [vmem:[%s1511 + $0x19] sm:$0xff]
        %v1708 = vld [vmem:[%s1511 + $0x21] sm:$0xff]
        %v1709 = vld [vmem:[%s1511 + $0x31] sm:$0xff]
        %v1710 = vld [vmem:[%s1511 + $0x39] sm:$0xff]
        %v1711 = vld [vmem:[%s1511 + $0x49] sm:$0xff]
        %v1712 = vld [vmem:[%s1511 + $0x51] sm:$0xff]
        %v1713 = vld [vmem:[%s1511 + $0x61] sm:$0xff]
        %v1714 = vld [vmem:[%s1511 + $0x69] sm:$0xff]
        %v1715 = vld [vmem:[%s1511 + $0x79] sm:$0xff]
        %v1716 = vld [vmem:[%s1511 + $0x81] sm:$0xff]
        %v1717 = vld [vmem:[%s1511 + $0x91] sm:$0xff]
        %v1718 = vld [vmem:[%s1511 + $0x99] sm:$0xff]
        %v1719 = vld [vmem:[%s1511 + $0xa9] sm:$0xff]
        %v1720 = vld [vmem:[%s1511 + $0xb1] sm:$0xff]
        %v1721 = vld [vmem:[%s1511 + $0xc1] sm:$0xff]
        %v1722 = vld [vmem:[%s1511 + $0xc9] sm:$0xff]
        %v1723 = vld [vmem:[%s1511 + $0xd9] sm:$0xff]
        %v1724 = vld [vmem:[%s1511 + $0xe1] sm:$0xff]
        %v1725 = vld [vmem:[%s1511 + $0xf1] sm:$0xff]
        %v1726 = vld [vmem:[%s1511 + $0xf9] sm:$0xff]
        %v1727 = vld [vmem:[%s1511 + $0x109] sm:$0xff]
        %v1728 = vld [vmem:[%s1511 + $0x111] sm:$0xff]
        %v1729 = vld [vmem:[%s1511 + $0x121] sm:$0xff]
        %v1730 = vld [vmem:[%s1511 + $0x129] sm:$0xff]
        %v1731 = vld [vmem:[%s1511 + $0x139] sm:$0xff]
        %v1732 = vld [vmem:[%s1511 + $0x141] sm:$0xff]
        %v1733 = vld [vmem:[%s1511 + $0x151] sm:$0xff]
        %v1734 = vld [vmem:[%s1511 + $0x159] sm:$0xff]
        %v1735 = vld [vmem:[%s1511 + $0x169] sm:$0xff]
        %v1736 = vld [vmem:[%s1511 + $0x171] sm:$0xff]
        %v1737 = vld [vmem:[%s2 + $0x380] sm:$0xff]
        %v1738 = vld [vmem:[%s2 + $0x388] sm:$0xff]
        %v1739 = vld [vmem:[%s2 + $0x390] sm:$0xff]
        %v1740 = vld [vmem:[%s2 + $0x398] sm:$0xff]
        %v1741 = vld [vmem:[%s2 + $0x3a0] sm:$0xff]
        %v1742 = vld [vmem:[%s2 + $0x3a8] sm:$0xff]
        %v1743 = vld [vmem:[%s2 + $0x3b0] sm:$0xff]
        %v1744 = vld [vmem:[%s2 + $0x3b8] sm:$0xff]
        %v1745 = vld [vmem:[%s2 + $0x3c0] sm:$0xff]
        %v1746 = vld [vmem:[%s2 + $0x3c8] sm:$0xff]
        %v1747 = vld [vmem:[%s2 + $0x3d0] sm:$0xff]
        %v1748 = vld [vmem:[%s2 + $0x3d8] sm:$0xff]
        %v1749 = vld [vmem:[%s2 + $0x3e0] sm:$0xff]
        %v1750 = vld [vmem:[%s2 + $0x3e8] sm:$0xff]
        %v1751 = vld [vmem:[%s2 + $0x3f0] sm:$0xff]
        %v1752 = vld [vmem:[%s2 + $0x3f8] sm:$0xff]
        %1753 = vmatpush.msra.mxu0 %v1752
        %1754 = vmatpush.msra.mxu0 %v1751
        %1755 = vmatpush.msra.mxu0 %v1750
        %1756 = vmatpush.msra.mxu0 %v1749
        %1757 = vmatpush.msra.mxu0 %v1748
        %1758 = vmatpush.msra.mxu0 %v1747
        %1759 = vmatpush.msra.mxu0 %v1746
        %1760 = vmatpush.msra.mxu0 %v1745
        %1761 = vmatpush.msra.mxu0 %v1744
        %1762 = vmatpush.msra.mxu0 %v1743
        %1763 = vmatpush.msra.mxu0 %v1742
        %1764 = vmatpush.msra.mxu0 %v1741
        %1765 = vmatpush.msra.mxu0 %v1740
        %1766 = vmatpush.msra.mxu0 %v1739
        %1767 = vmatpush.msra.mxu0 %v1738
        %1768 = vmatpush.msra.mxu0 %v1737
        %1769 = vmatmul.f32.gmra.mxu0 %v1705
        %v1770 = vpop.f32.mrf.mxu0
        %v1771 = vadd.f32 0.0, %v1770
        %1772 = vmatmul.f32.gmra.mxu0 %v1706
        %v1773 = vpop.f32.mrf.mxu0
        %v1774 = vadd.f32 0.0, %v1773
        %1775 = vmatmul.f32.gmra.mxu0 %v1707
        %v1776 = vpop.f32.mrf.mxu0
        %v1777 = vadd.f32 0.0, %v1776
        %1778 = vmatmul.f32.gmra.mxu0 %v1708
        %v1779 = vpop.f32.mrf.mxu0
        %v1780 = vadd.f32 0.0, %v1779
        %1781 = vmatmul.f32.gmra.mxu0 %v1709
        %v1782 = vpop.f32.mrf.mxu0
        %v1783 = vadd.f32 0.0, %v1782
        %1784 = vmatmul.f32.gmra.mxu0 %v1710
        %v1785 = vpop.f32.mrf.mxu0
        %v1786 = vadd.f32 0.0, %v1785
        %1787 = vmatmul.f32.gmra.mxu0 %v1711
        %v1788 = vpop.f32.mrf.mxu0
        %v1789 = vadd.f32 0.0, %v1788
        %1790 = vmatmul.f32.gmra.mxu0 %v1712
        %v1791 = vpop.f32.mrf.mxu0
        %v1792 = vadd.f32 0.0, %v1791
        %1793 = vmatmul.f32.gmra.mxu0 %v1713
        %v1794 = vpop.f32.mrf.mxu0
        %v1795 = vadd.f32 0.0, %v1794
        %1796 = vmatmul.f32.gmra.mxu0 %v1714
        %v1797 = vpop.f32.mrf.mxu0
        %v1798 = vadd.f32 0.0, %v1797
        %1799 = vmatmul.f32.gmra.mxu0 %v1715
        %v1800 = vpop.f32.mrf.mxu0
        %v1801 = vadd.f32 0.0, %v1800
        %1802 = vmatmul.f32.gmra.mxu0 %v1716
        %v1803 = vpop.f32.mrf.mxu0
        %v1804 = vadd.f32 0.0, %v1803
        %1805 = vmatmul.f32.gmra.mxu0 %v1717
        %v1806 = vpop.f32.mrf.mxu0
        %v1807 = vadd.f32 0.0, %v1806
        %1808 = vmatmul.f32.gmra.mxu0 %v1718
        %v1809 = vpop.f32.mrf.mxu0
        %v1810 = vadd.f32 0.0, %v1809
        %1811 = vmatmul.f32.gmra.mxu0 %v1719
        %v1812 = vpop.f32.mrf.mxu0
        %v1813 = vadd.f32 0.0, %v1812
        %1814 = vmatmul.f32.gmra.mxu0 %v1720
        %v1815 = vpop.f32.mrf.mxu0
        %v1816 = vadd.f32 0.0, %v1815
        %1817 = vmatmul.f32.gmra.mxu0 %v1721
        %v1818 = vpop.f32.mrf.mxu0
        %v1819 = vadd.f32 0.0, %v1818
        %1820 = vmatmul.f32.gmra.mxu0 %v1722
        %v1821 = vpop.f32.mrf.mxu0
        %v1822 = vadd.f32 0.0, %v1821
        %1823 = vmatmul.f32.gmra.mxu0 %v1723
        %v1824 = vpop.f32.mrf.mxu0
        %v1825 = vadd.f32 0.0, %v1824
        %1826 = vmatmul.f32.gmra.mxu0 %v1724
        %v1827 = vpop.f32.mrf.mxu0
        %v1828 = vadd.f32 0.0, %v1827
        %1829 = vmatmul.f32.gmra.mxu0 %v1725
        %v1830 = vpop.f32.mrf.mxu0
        %v1831 = vadd.f32 0.0, %v1830
        %1832 = vmatmul.f32.gmra.mxu0 %v1726
        %v1833 = vpop.f32.mrf.mxu0
        %v1834 = vadd.f32 0.0, %v1833
        %1835 = vmatmul.f32.gmra.mxu0 %v1727
        %v1836 = vpop.f32.mrf.mxu0
        %v1837 = vadd.f32 0.0, %v1836
        %1838 = vmatmul.f32.gmra.mxu0 %v1728
        %v1839 = vpop.f32.mrf.mxu0
        %v1840 = vadd.f32 0.0, %v1839
        %1841 = vmatmul.f32.gmra.mxu0 %v1729
        %v1842 = vpop.f32.mrf.mxu0
        %v1843 = vadd.f32 0.0, %v1842
        %1844 = vmatmul.f32.gmra.mxu0 %v1730
        %v1845 = vpop.f32.mrf.mxu0
        %v1846 = vadd.f32 0.0, %v1845
        %1847 = vmatmul.f32.gmra.mxu0 %v1731
        %v1848 = vpop.f32.mrf.mxu0
        %v1849 = vadd.f32 0.0, %v1848
        %1850 = vmatmul.f32.gmra.mxu0 %v1732
        %v1851 = vpop.f32.mrf.mxu0
        %v1852 = vadd.f32 0.0, %v1851
        %1853 = vmatmul.f32.gmra.mxu0 %v1733
        %v1854 = vpop.f32.mrf.mxu0
        %v1855 = vadd.f32 0.0, %v1854
        %1856 = vmatmul.f32.gmra.mxu0 %v1734
        %v1857 = vpop.f32.mrf.mxu0
        %v1858 = vadd.f32 0.0, %v1857
        %1859 = vmatmul.f32.gmra.mxu0 %v1735
        %v1860 = vpop.f32.mrf.mxu0
        %v1861 = vadd.f32 0.0, %v1860
        %1862 = vmatmul.f32.gmra.mxu0 %v1736
        %v1863 = vpop.f32.mrf.mxu0
        %v1864 = vadd.f32 0.0, %v1863
        %1865 = vdwg.mxu0
        %v1866 = vadd.f32 %v1673, %v1771
        %v1867 = vadd.f32 %v1674, %v1774
        %v1868 = vadd.f32 %v1675, %v1777
        %v1869 = vadd.f32 %v1676, %v1780
        %v1870 = vadd.f32 %v1677, %v1783
        %v1871 = vadd.f32 %v1678, %v1786
        %v1872 = vadd.f32 %v1679, %v1789
        %v1873 = vadd.f32 %v1680, %v1792
        %v1874 = vadd.f32 %v1681, %v1795
        %v1875 = vadd.f32 %v1682, %v1798
        %v1876 = vadd.f32 %v1683, %v1801
        %v1877 = vadd.f32 %v1684, %v1804
        %v1878 = vadd.f32 %v1685, %v1807
        %v1879 = vadd.f32 %v1686, %v1810
        %v1880 = vadd.f32 %v1687, %v1813
        %v1881 = vadd.f32 %v1688, %v1816
        %v1882 = vadd.f32 %v1689, %v1819
        %v1883 = vadd.f32 %v1690, %v1822
        %v1884 = vadd.f32 %v1691, %v1825
        %v1885 = vadd.f32 %v1692, %v1828
        %v1886 = vadd.f32 %v1693, %v1831
        %v1887 = vadd.f32 %v1694, %v1834
        %v1888 = vadd.f32 %v1695, %v1837
        %v1889 = vadd.f32 %v1696, %v1840
        %v1890 = vadd.f32 %v1697, %v1843
        %v1891 = vadd.f32 %v1698, %v1846
        %v1892 = vadd.f32 %v1699, %v1849
        %v1893 = vadd.f32 %v1700, %v1852
        %v1894 = vadd.f32 %v1701, %v1855
        %v1895 = vadd.f32 %v1702, %v1858
        %v1896 = vadd.f32 %v1703, %v1861
        %v1897 = vadd.f32 %v1704, %v1864
        %v1898 = vld [vmem:[%s1511 + $0x2] sm:$0xff]
        %v1899 = vld [vmem:[%s1511 + $0xa] sm:$0xff]
        %v1900 = vld [vmem:[%s1511 + $0x1a] sm:$0xff]
        %v1901 = vld [vmem:[%s1511 + $0x22] sm:$0xff]
        %v1902 = vld [vmem:[%s1511 + $0x32] sm:$0xff]
        %v1903 = vld [vmem:[%s1511 + $0x3a] sm:$0xff]
        %v1904 = vld [vmem:[%s1511 + $0x4a] sm:$0xff]
        %v1905 = vld [vmem:[%s1511 + $0x52] sm:$0xff]
        %v1906 = vld [vmem:[%s1511 + $0x62] sm:$0xff]
        %v1907 = vld [vmem:[%s1511 + $0x6a] sm:$0xff]
        %v1908 = vld [vmem:[%s1511 + $0x7a] sm:$0xff]
        %v1909 = vld [vmem:[%s1511 + $0x82] sm:$0xff]
        %v1910 = vld [vmem:[%s1511 + $0x92] sm:$0xff]
        %v1911 = vld [vmem:[%s1511 + $0x9a] sm:$0xff]
        %v1912 = vld [vmem:[%s1511 + $0xaa] sm:$0xff]
        %v1913 = vld [vmem:[%s1511 + $0xb2] sm:$0xff]
        %v1914 = vld [vmem:[%s1511 + $0xc2] sm:$0xff]
        %v1915 = vld [vmem:[%s1511 + $0xca] sm:$0xff]
        %v1916 = vld [vmem:[%s1511 + $0xda] sm:$0xff]
        %v1917 = vld [vmem:[%s1511 + $0xe2] sm:$0xff]
        %v1918 = vld [vmem:[%s1511 + $0xf2] sm:$0xff]
        %v1919 = vld [vmem:[%s1511 + $0xfa] sm:$0xff]
        %v1920 = vld [vmem:[%s1511 + $0x10a] sm:$0xff]
        %v1921 = vld [vmem:[%s1511 + $0x112] sm:$0xff]
        %v1922 = vld [vmem:[%s1511 + $0x122] sm:$0xff]
        %v1923 = vld [vmem:[%s1511 + $0x12a] sm:$0xff]
        %v1924 = vld [vmem:[%s1511 + $0x13a] sm:$0xff]
        %v1925 = vld [vmem:[%s1511 + $0x142] sm:$0xff]
        %v1926 = vld [vmem:[%s1511 + $0x152] sm:$0xff]
        %v1927 = vld [vmem:[%s1511 + $0x15a] sm:$0xff]
        %v1928 = vld [vmem:[%s1511 + $0x16a] sm:$0xff]
        %v1929 = vld [vmem:[%s1511 + $0x172] sm:$0xff]
        %v1930 = vld [vmem:[%s2 + $0x400] sm:$0xff]
        %v1931 = vld [vmem:[%s2 + $0x408] sm:$0xff]
        %v1932 = vld [vmem:[%s2 + $0x410] sm:$0xff]
        %v1933 = vld [vmem:[%s2 + $0x418] sm:$0xff]
        %v1934 = vld [vmem:[%s2 + $0x420] sm:$0xff]
        %v1935 = vld [vmem:[%s2 + $0x428] sm:$0xff]
        %v1936 = vld [vmem:[%s2 + $0x430] sm:$0xff]
        %v1937 = vld [vmem:[%s2 + $0x438] sm:$0xff]
        %v1938 = vld [vmem:[%s2 + $0x440] sm:$0xff]
        %v1939 = vld [vmem:[%s2 + $0x448] sm:$0xff]
        %v1940 = vld [vmem:[%s2 + $0x450] sm:$0xff]
        %v1941 = vld [vmem:[%s2 + $0x458] sm:$0xff]
        %v1942 = vld [vmem:[%s2 + $0x460] sm:$0xff]
        %v1943 = vld [vmem:[%s2 + $0x468] sm:$0xff]
        %v1944 = vld [vmem:[%s2 + $0x470] sm:$0xff]
        %v1945 = vld [vmem:[%s2 + $0x478] sm:$0xff]
        %1946 = vmatpush.msra.mxu0 %v1945
        %1947 = vmatpush.msra.mxu0 %v1944
        %1948 = vmatpush.msra.mxu0 %v1943
        %1949 = vmatpush.msra.mxu0 %v1942
        %1950 = vmatpush.msra.mxu0 %v1941
        %1951 = vmatpush.msra.mxu0 %v1940
        %1952 = vmatpush.msra.mxu0 %v1939
        %1953 = vmatpush.msra.mxu0 %v1938
        %1954 = vmatpush.msra.mxu0 %v1937
        %1955 = vmatpush.msra.mxu0 %v1936
        %1956 = vmatpush.msra.mxu0 %v1935
        %1957 = vmatpush.msra.mxu0 %v1934
        %1958 = vmatpush.msra.mxu0 %v1933
        %1959 = vmatpush.msra.mxu0 %v1932
        %1960 = vmatpush.msra.mxu0 %v1931
        %1961 = vmatpush.msra.mxu0 %v1930
        %1962 = vmatmul.f32.gmra.mxu0 %v1898
        %v1963 = vpop.f32.mrf.mxu0
        %v1964 = vadd.f32 0.0, %v1963
        %1965 = vmatmul.f32.gmra.mxu0 %v1899
        %v1966 = vpop.f32.mrf.mxu0
        %v1967 = vadd.f32 0.0, %v1966
        %1968 = vmatmul.f32.gmra.mxu0 %v1900
        %v1969 = vpop.f32.mrf.mxu0
        %v1970 = vadd.f32 0.0, %v1969
        %1971 = vmatmul.f32.gmra.mxu0 %v1901
        %v1972 = vpop.f32.mrf.mxu0
        %v1973 = vadd.f32 0.0, %v1972
        %1974 = vmatmul.f32.gmra.mxu0 %v1902
        %v1975 = vpop.f32.mrf.mxu0
        %v1976 = vadd.f32 0.0, %v1975
        %1977 = vmatmul.f32.gmra.mxu0 %v1903
        %v1978 = vpop.f32.mrf.mxu0
        %v1979 = vadd.f32 0.0, %v1978
        %1980 = vmatmul.f32.gmra.mxu0 %v1904
        %v1981 = vpop.f32.mrf.mxu0
        %v1982 = vadd.f32 0.0, %v1981
        %1983 = vmatmul.f32.gmra.mxu0 %v1905
        %v1984 = vpop.f32.mrf.mxu0
        %v1985 = vadd.f32 0.0, %v1984
        %1986 = vmatmul.f32.gmra.mxu0 %v1906
        %v1987 = vpop.f32.mrf.mxu0
        %v1988 = vadd.f32 0.0, %v1987
        %1989 = vmatmul.f32.gmra.mxu0 %v1907
        %v1990 = vpop.f32.mrf.mxu0
        %v1991 = vadd.f32 0.0, %v1990
        %1992 = vmatmul.f32.gmra.mxu0 %v1908
        %v1993 = vpop.f32.mrf.mxu0
        %v1994 = vadd.f32 0.0, %v1993
        %1995 = vmatmul.f32.gmra.mxu0 %v1909
        %v1996 = vpop.f32.mrf.mxu0
        %v1997 = vadd.f32 0.0, %v1996
        %1998 = vmatmul.f32.gmra.mxu0 %v1910
        %v1999 = vpop.f32.mrf.mxu0
        %v2000 = vadd.f32 0.0, %v1999
        %2001 = vmatmul.f32.gmra.mxu0 %v1911
        %v2002 = vpop.f32.mrf.mxu0
        %v2003 = vadd.f32 0.0, %v2002
        %2004 = vmatmul.f32.gmra.mxu0 %v1912
        %v2005 = vpop.f32.mrf.mxu0
        %v2006 = vadd.f32 0.0, %v2005
        %2007 = vmatmul.f32.gmra.mxu0 %v1913
        %v2008 = vpop.f32.mrf.mxu0
        %v2009 = vadd.f32 0.0, %v2008
        %2010 = vmatmul.f32.gmra.mxu0 %v1914
        %v2011 = vpop.f32.mrf.mxu0
        %v2012 = vadd.f32 0.0, %v2011
        %2013 = vmatmul.f32.gmra.mxu0 %v1915
        %v2014 = vpop.f32.mrf.mxu0
        %v2015 = vadd.f32 0.0, %v2014
        %2016 = vmatmul.f32.gmra.mxu0 %v1916
        %v2017 = vpop.f32.mrf.mxu0
        %v2018 = vadd.f32 0.0, %v2017
        %2019 = vmatmul.f32.gmra.mxu0 %v1917
        %v2020 = vpop.f32.mrf.mxu0
        %v2021 = vadd.f32 0.0, %v2020
        %2022 = vmatmul.f32.gmra.mxu0 %v1918
        %v2023 = vpop.f32.mrf.mxu0
        %v2024 = vadd.f32 0.0, %v2023
        %2025 = vmatmul.f32.gmra.mxu0 %v1919
        %v2026 = vpop.f32.mrf.mxu0
        %v2027 = vadd.f32 0.0, %v2026
        %2028 = vmatmul.f32.gmra.mxu0 %v1920
        %v2029 = vpop.f32.mrf.mxu0
        %v2030 = vadd.f32 0.0, %v2029
        %2031 = vmatmul.f32.gmra.mxu0 %v1921
        %v2032 = vpop.f32.mrf.mxu0
        %v2033 = vadd.f32 0.0, %v2032
        %2034 = vmatmul.f32.gmra.mxu0 %v1922
        %v2035 = vpop.f32.mrf.mxu0
        %v2036 = vadd.f32 0.0, %v2035
        %2037 = vmatmul.f32.gmra.mxu0 %v1923
        %v2038 = vpop.f32.mrf.mxu0
        %v2039 = vadd.f32 0.0, %v2038
        %2040 = vmatmul.f32.gmra.mxu0 %v1924
        %v2041 = vpop.f32.mrf.mxu0
        %v2042 = vadd.f32 0.0, %v2041
        %2043 = vmatmul.f32.gmra.mxu0 %v1925
        %v2044 = vpop.f32.mrf.mxu0
        %v2045 = vadd.f32 0.0, %v2044
        %2046 = vmatmul.f32.gmra.mxu0 %v1926
        %v2047 = vpop.f32.mrf.mxu0
        %v2048 = vadd.f32 0.0, %v2047
        %2049 = vmatmul.f32.gmra.mxu0 %v1927
        %v2050 = vpop.f32.mrf.mxu0
        %v2051 = vadd.f32 0.0, %v2050
        %2052 = vmatmul.f32.gmra.mxu0 %v1928
        %v2053 = vpop.f32.mrf.mxu0
        %v2054 = vadd.f32 0.0, %v2053
        %2055 = vmatmul.f32.gmra.mxu0 %v1929
        %v2056 = vpop.f32.mrf.mxu0
        %v2057 = vadd.f32 0.0, %v2056
        %2058 = vdwg.mxu0
        %v2059 = vadd.f32 %v1866, %v1964
        %v2060 = vadd.f32 %v1867, %v1967
        %v2061 = vadd.f32 %v1868, %v1970
        %v2062 = vadd.f32 %v1869, %v1973
        %v2063 = vadd.f32 %v1870, %v1976
        %v2064 = vadd.f32 %v1871, %v1979
        %v2065 = vadd.f32 %v1872, %v1982
        %v2066 = vadd.f32 %v1873, %v1985
        %v2067 = vadd.f32 %v1874, %v1988
        %v2068 = vadd.f32 %v1875, %v1991
        %v2069 = vadd.f32 %v1876, %v1994
        %v2070 = vadd.f32 %v1877, %v1997
        %v2071 = vadd.f32 %v1878, %v2000
        %v2072 = vadd.f32 %v1879, %v2003
        %v2073 = vadd.f32 %v1880, %v2006
        %v2074 = vadd.f32 %v1881, %v2009
        %v2075 = vadd.f32 %v1882, %v2012
        %v2076 = vadd.f32 %v1883, %v2015
        %v2077 = vadd.f32 %v1884, %v2018
        %v2078 = vadd.f32 %v1885, %v2021
        %v2079 = vadd.f32 %v1886, %v2024
        %v2080 = vadd.f32 %v1887, %v2027
        %v2081 = vadd.f32 %v1888, %v2030
        %v2082 = vadd.f32 %v1889, %v2033
        %v2083 = vadd.f32 %v1890, %v2036
        %v2084 = vadd.f32 %v1891, %v2039
        %v2085 = vadd.f32 %v1892, %v2042
        %v2086 = vadd.f32 %v1893, %v2045
        %v2087 = vadd.f32 %v1894, %v2048
        %v2088 = vadd.f32 %v1895, %v2051
        %v2089 = vadd.f32 %v1896, %v2054
        %v2090 = vadd.f32 %v1897, %v2057
        %v2091 = vld [vmem:[%s3] sm:$0x1]
        %v2093 = vperm.slane %v2091, 0
        %v2095 = vadd.f32 %v2059, %v2093
        %v2096 = vadd.f32 %v2060, %v2093
        %v2097 = vadd.f32 %v2061, %v2093
        %v2098 = vadd.f32 %v2062, %v2093
        %v2099 = vadd.f32 %v2063, %v2093
        %v2100 = vadd.f32 %v2064, %v2093
        %v2101 = vadd.f32 %v2065, %v2093
        %v2102 = vadd.f32 %v2066, %v2093
        %v2103 = vadd.f32 %v2067, %v2093
        %v2104 = vadd.f32 %v2068, %v2093
        %v2105 = vadd.f32 %v2069, %v2093
        %v2106 = vadd.f32 %v2070, %v2093
        %v2107 = vadd.f32 %v2071, %v2093
        %v2108 = vadd.f32 %v2072, %v2093
        %v2109 = vadd.f32 %v2073, %v2093
        %v2110 = vadd.f32 %v2074, %v2093
        %v2111 = vadd.f32 %v2075, %v2093
        %v2112 = vadd.f32 %v2076, %v2093
        %v2113 = vadd.f32 %v2077, %v2093
        %v2114 = vadd.f32 %v2078, %v2093
        %v2115 = vadd.f32 %v2079, %v2093
        %v2116 = vadd.f32 %v2080, %v2093
        %v2117 = vadd.f32 %v2081, %v2093
        %v2118 = vadd.f32 %v2082, %v2093
        %v2119 = vadd.f32 %v2083, %v2093
        %v2120 = vadd.f32 %v2084, %v2093
        %v2121 = vadd.f32 %v2085, %v2093
        %v2122 = vadd.f32 %v2086, %v2093
        %v2123 = vadd.f32 %v2087, %v2093
        %v2124 = vadd.f32 %v2088, %v2093
        %v2125 = vadd.f32 %v2089, %v2093
        %v2126 = vadd.f32 %v2090, %v2093
        %v2127 = vmax.f32 %v2095, 0.0
        %v2128 = vmax.f32 %v2096, 0.0
        %v2129 = vmax.f32 %v2097, 0.0
        %v2130 = vmax.f32 %v2098, 0.0
        %v2131 = vmax.f32 %v2099, 0.0
        %v2132 = vmax.f32 %v2100, 0.0
        %v2133 = vmax.f32 %v2101, 0.0
        %v2134 = vmax.f32 %v2102, 0.0
        %v2135 = vmax.f32 %v2103, 0.0
        %v2136 = vmax.f32 %v2104, 0.0
        %v2137 = vmax.f32 %v2105, 0.0
        %v2138 = vmax.f32 %v2106, 0.0
        %v2139 = vmax.f32 %v2107, 0.0
        %v2140 = vmax.f32 %v2108, 0.0
        %v2141 = vmax.f32 %v2109, 0.0
        %v2142 = vmax.f32 %v2110, 0.0
        %v2143 = vmax.f32 %v2111, 0.0
        %v2144 = vmax.f32 %v2112, 0.0
        %v2145 = vmax.f32 %v2113, 0.0
        %v2146 = vmax.f32 %v2114, 0.0
        %v2147 = vmax.f32 %v2115, 0.0
        %v2148 = vmax.f32 %v2116, 0.0
        %v2149 = vmax.f32 %v2117, 0.0
        %v2150 = vmax.f32 %v2118, 0.0
        %v2151 = vmax.f32 %v2119, 0.0
        %v2152 = vmax.f32 %v2120, 0.0
        %v2153 = vmax.f32 %v2121, 0.0
        %v2154 = vmax.f32 %v2122, 0.0
        %v2155 = vmax.f32 %v2123, 0.0
        %v2156 = vmax.f32 %v2124, 0.0
        %v2157 = vmax.f32 %v2125, 0.0
        %v2158 = vmax.f32 %v2126, 0.0
        %2159 = vst [vmem:[#allocation3] sm:$0xff] 0.0
        %2160 = vst [vmem:[#allocation3 + $0x8] sm:$0xff] 0.0
        %2161 = vst [vmem:[#allocation3 + $0x10] sm:$0x3] 0.0
        %2162 = vst [vmem:[#allocation3 + $0x18] sm:$0xff] 0.0
        %2163 = vst [vmem:[#allocation3 + $0x20] sm:$0xff] 0.0
        %2164 = vst [vmem:[#allocation3 + $0x28] sm:$0x3] 0.0
        %2165 = vst [vmem:[#allocation3 + $0x30] sm:$0xff] 0.0
        %2166 = vst [vmem:[#allocation3 + $0x38] sm:$0xff] 0.0
        %2167 = vst [vmem:[#allocation3 + $0x40] sm:$0x3] 0.0
        %2168 = vst [vmem:[#allocation3 + $0x48] sm:$0xff] 0.0
        %2169 = vst [vmem:[#allocation3 + $0x50] sm:$0xff] 0.0
        %2170 = vst [vmem:[#allocation3 + $0x58] sm:$0x3] 0.0
        %2171 = vst [vmem:[#allocation3 + $0x60] sm:$0xff] 0.0
        %2172 = vst [vmem:[#allocation3 + $0x68] sm:$0xff] 0.0
        %2173 = vst [vmem:[#allocation3 + $0x70] sm:$0x3] 0.0
        %2174 = vst [vmem:[#allocation3 + $0x78] sm:$0xff] 0.0
        %2175 = vst [vmem:[#allocation3 + $0x80] sm:$0xff] 0.0
        %2176 = vst [vmem:[#allocation3 + $0x88] sm:$0x3] 0.0
        %2177 = vst [vmem:[#allocation3 + $0x90] sm:$0xff] 0.0
        %2178 = vst [vmem:[#allocation3 + $0x98] sm:$0xff] 0.0
        %2179 = vst [vmem:[#allocation3 + $0xa0] sm:$0x3] 0.0
        %2180 = vst [vmem:[#allocation3 + $0xa8] sm:$0xff] 0.0
        %2181 = vst [vmem:[#allocation3 + $0xb0] sm:$0xff] 0.0
        %2182 = vst [vmem:[#allocation3 + $0xb8] sm:$0x3] 0.0
        %2183 = vst [vmem:[#allocation3 + $0xc0] sm:$0xff] 0.0
        %2184 = vst [vmem:[#allocation3 + $0xc8] sm:$0xff] 0.0
        %2185 = vst [vmem:[#allocation3 + $0xd0] sm:$0x3] 0.0
        %2186 = vst [vmem:[#allocation3 + $0xd8] sm:$0xff] 0.0
        %2187 = vst [vmem:[#allocation3 + $0xe0] sm:$0xff] 0.0
        %2188 = vst [vmem:[#allocation3 + $0xe8] sm:$0x3] 0.0
        %2189 = vst [vmem:[#allocation3 + $0xf0] sm:$0xff] 0.0
        %2190 = vst [vmem:[#allocation3 + $0xf8] sm:$0xff] 0.0
        %2191 = vst [vmem:[#allocation3 + $0x100] sm:$0x3] 0.0
        %2192 = vst [vmem:[#allocation3 + $0x108] sm:$0xff] 0.0
        %2193 = vst [vmem:[#allocation3 + $0x110] sm:$0xff] 0.0
        %2194 = vst [vmem:[#allocation3 + $0x118] sm:$0x3] 0.0
        %2195 = vst [vmem:[#allocation3 + $0x120] sm:$0xff] 0.0
        %2196 = vst [vmem:[#allocation3 + $0x128] sm:$0xff] 0.0
        %2197 = vst [vmem:[#allocation3 + $0x130] sm:$0x3] 0.0
        %2198 = vst [vmem:[#allocation3 + $0x138] sm:$0xff] 0.0
        %2199 = vst [vmem:[#allocation3 + $0x140] sm:$0xff] 0.0
        %2200 = vst [vmem:[#allocation3 + $0x148] sm:$0x3] 0.0
        %2201 = vst [vmem:[#allocation3 + $0x150] sm:$0xff] 0.0
        %2202 = vst [vmem:[#allocation3 + $0x158] sm:$0xff] 0.0
        %2203 = vst [vmem:[#allocation3 + $0x160] sm:$0x3] 0.0
        %2204 = vst [vmem:[#allocation3 + $0x168] sm:$0xff] 0.0
        %2205 = vst [vmem:[#allocation3 + $0x170] sm:$0xff] 0.0
        %2206 = vst [vmem:[#allocation3 + $0x178] sm:$0x3] 0.0
        %2207 = vst [vmem:[#allocation3 + $0x180] sm:$0xff] 0.0
        %2208 = vst [vmem:[#allocation3 + $0x188] sm:$0xff] 0.0
        %2209 = vst [vmem:[#allocation3 + $0x190] sm:$0x3] 0.0
        %2210 = vst [vmem:[#allocation3 + $0x198] sm:$0xff] 0.0
        %2211 = vst [vmem:[#allocation3 + $0x1a0] sm:$0xff] 0.0
        %2212 = vst [vmem:[#allocation3 + $0x1a8] sm:$0x3] 0.0
        %s2213 = scalar_lea.vmem [#allocation3], 24
        %vm2214 = vcmask 523264
        %2215 = vst.msk [vmem:[%s2213 + $0x1] sm:$0xff] %vm2214, %v2127
        %2216 = vst.msk [vmem:[%s2213 + $0x9] sm:$0xff] %vm2214, %v2128
        %2217 = vst.msk [vmem:[%s2213 + $0x19] sm:$0xff] %vm2214, %v2129
        %2218 = vst.msk [vmem:[%s2213 + $0x21] sm:$0xff] %vm2214, %v2130
        %2219 = vst.msk [vmem:[%s2213 + $0x31] sm:$0xff] %vm2214, %v2131
        %2220 = vst.msk [vmem:[%s2213 + $0x39] sm:$0xff] %vm2214, %v2132
        %2221 = vst.msk [vmem:[%s2213 + $0x49] sm:$0xff] %vm2214, %v2133
        %2222 = vst.msk [vmem:[%s2213 + $0x51] sm:$0xff] %vm2214, %v2134
        %2223 = vst.msk [vmem:[%s2213 + $0x61] sm:$0xff] %vm2214, %v2135
        %2224 = vst.msk [vmem:[%s2213 + $0x69] sm:$0xff] %vm2214, %v2136
        %2225 = vst.msk [vmem:[%s2213 + $0x79] sm:$0xff] %vm2214, %v2137
        %2226 = vst.msk [vmem:[%s2213 + $0x81] sm:$0xff] %vm2214, %v2138
        %2227 = vst.msk [vmem:[%s2213 + $0x91] sm:$0xff] %vm2214, %v2139
        %2228 = vst.msk [vmem:[%s2213 + $0x99] sm:$0xff] %vm2214, %v2140
        %2229 = vst.msk [vmem:[%s2213 + $0xa9] sm:$0xff] %vm2214, %v2141
        %2230 = vst.msk [vmem:[%s2213 + $0xb1] sm:$0xff] %vm2214, %v2142
        %2231 = vst.msk [vmem:[%s2213 + $0xc1] sm:$0xff] %vm2214, %v2143
        %2232 = vst.msk [vmem:[%s2213 + $0xc9] sm:$0xff] %vm2214, %v2144
        %2233 = vst.msk [vmem:[%s2213 + $0xd9] sm:$0xff] %vm2214, %v2145
        %2234 = vst.msk [vmem:[%s2213 + $0xe1] sm:$0xff] %vm2214, %v2146
        %2235 = vst.msk [vmem:[%s2213 + $0xf1] sm:$0xff] %vm2214, %v2147
        %2236 = vst.msk [vmem:[%s2213 + $0xf9] sm:$0xff] %vm2214, %v2148
        %2237 = vst.msk [vmem:[%s2213 + $0x109] sm:$0xff] %vm2214, %v2149
        %2238 = vst.msk [vmem:[%s2213 + $0x111] sm:$0xff] %vm2214, %v2150
        %2239 = vst.msk [vmem:[%s2213 + $0x121] sm:$0xff] %vm2214, %v2151
        %2240 = vst.msk [vmem:[%s2213 + $0x129] sm:$0xff] %vm2214, %v2152
        %2241 = vst.msk [vmem:[%s2213 + $0x139] sm:$0xff] %vm2214, %v2153
        %2242 = vst.msk [vmem:[%s2213 + $0x141] sm:$0xff] %vm2214, %v2154
        %2243 = vst.msk [vmem:[%s2213 + $0x151] sm:$0xff] %vm2214, %v2155
        %2244 = vst.msk [vmem:[%s2213 + $0x159] sm:$0xff] %vm2214, %v2156
        %2245 = vst.msk [vmem:[%s2213 + $0x169] sm:$0xff] %vm2214, %v2157
        %2246 = vst.msk [vmem:[%s2213 + $0x171] sm:$0xff] %vm2214, %v2158
        %v2247 = vld [vmem:[#allocation3] sm:$0xff]
        %v2248 = vld [vmem:[#allocation3 + $0x8] sm:$0xff]
        %v2249 = vld [vmem:[#allocation3 + $0x18] sm:$0xff]
        %v2250 = vld [vmem:[#allocation3 + $0x20] sm:$0xff]
        %v2251 = vld [vmem:[#allocation3 + $0x30] sm:$0xff]
        %v2252 = vld [vmem:[#allocation3 + $0x38] sm:$0xff]
        %v2253 = vld [vmem:[#allocation3 + $0x48] sm:$0xff]
        %v2254 = vld [vmem:[#allocation3 + $0x50] sm:$0xff]
        %v2255 = vld [vmem:[#allocation3 + $0x60] sm:$0xff]
        %v2256 = vld [vmem:[#allocation3 + $0x68] sm:$0xff]
        %v2257 = vld [vmem:[#allocation3 + $0x78] sm:$0xff]
        %v2258 = vld [vmem:[#allocation3 + $0x80] sm:$0xff]
        %v2259 = vld [vmem:[#allocation3 + $0x90] sm:$0xff]
        %v2260 = vld [vmem:[#allocation3 + $0x98] sm:$0xff]
        %v2261 = vld [vmem:[#allocation3 + $0xa8] sm:$0xff]
        %v2262 = vld [vmem:[#allocation3 + $0xb0] sm:$0xff]
        %v2263 = vld [vmem:[#allocation3 + $0xc0] sm:$0xff]
        %v2264 = vld [vmem:[#allocation3 + $0xc8] sm:$0xff]
        %v2265 = vld [vmem:[#allocation3 + $0xd8] sm:$0xff]
        %v2266 = vld [vmem:[#allocation3 + $0xe0] sm:$0xff]
        %v2267 = vld [vmem:[#allocation3 + $0xf0] sm:$0xff]
        %v2268 = vld [vmem:[#allocation3 + $0xf8] sm:$0xff]
        %v2269 = vld [vmem:[#allocation3 + $0x108] sm:$0xff]
        %v2270 = vld [vmem:[#allocation3 + $0x110] sm:$0xff]
        %v2271 = vld [vmem:[#allocation3 + $0x120] sm:$0xff]
        %v2272 = vld [vmem:[#allocation3 + $0x128] sm:$0xff]
        %v2273 = vld [vmem:[#allocation3 + $0x138] sm:$0xff]
        %v2274 = vld [vmem:[#allocation3 + $0x140] sm:$0xff]
        %v2275 = vld [vmem:[#allocation3 + $0x150] sm:$0xff]
        %v2276 = vld [vmem:[#allocation3 + $0x158] sm:$0xff]
        %v2277 = vld [vmem:[#allocation3 + $0x168] sm:$0xff]
        %v2278 = vld [vmem:[#allocation3 + $0x170] sm:$0xff]
        %v2279 = vld [vmem:[%s4] sm:$0xf]
        %v2280 = vld [vmem:[#allocation3 + $0x1] sm:$0xff]
        %v2281 = vld [vmem:[#allocation3 + $0x9] sm:$0xff]
        %v2282 = vld [vmem:[#allocation3 + $0x19] sm:$0xff]
        %v2283 = vld [vmem:[#allocation3 + $0x21] sm:$0xff]
        %v2284 = vld [vmem:[#allocation3 + $0x31] sm:$0xff]
        %v2285 = vld [vmem:[#allocation3 + $0x39] sm:$0xff]
        %v2286 = vld [vmem:[#allocation3 + $0x49] sm:$0xff]
        %v2287 = vld [vmem:[#allocation3 + $0x51] sm:$0xff]
        %v2288 = vld [vmem:[#allocation3 + $0x61] sm:$0xff]
        %v2289 = vld [vmem:[#allocation3 + $0x69] sm:$0xff]
        %v2290 = vld [vmem:[#allocation3 + $0x79] sm:$0xff]
        %v2291 = vld [vmem:[#allocation3 + $0x81] sm:$0xff]
        %v2292 = vld [vmem:[#allocation3 + $0x91] sm:$0xff]
        %v2293 = vld [vmem:[#allocation3 + $0x99] sm:$0xff]
        %v2294 = vld [vmem:[#allocation3 + $0xa9] sm:$0xff]
        %v2295 = vld [vmem:[#allocation3 + $0xb1] sm:$0xff]
        %v2296 = vld [vmem:[#allocation3 + $0xc1] sm:$0xff]
        %v2297 = vld [vmem:[#allocation3 + $0xc9] sm:$0xff]
        %v2298 = vld [vmem:[#allocation3 + $0xd9] sm:$0xff]
        %v2299 = vld [vmem:[#allocation3 + $0xe1] sm:$0xff]
        %v2300 = vld [vmem:[#allocation3 + $0xf1] sm:$0xff]
        %v2301 = vld [vmem:[#allocation3 + $0xf9] sm:$0xff]
        %v2302 = vld [vmem:[#allocation3 + $0x109] sm:$0xff]
        %v2303 = vld [vmem:[#allocation3 + $0x111] sm:$0xff]
        %v2304 = vld [vmem:[#allocation3 + $0x121] sm:$0xff]
        %v2305 = vld [vmem:[#allocation3 + $0x129] sm:$0xff]
        %v2306 = vld [vmem:[#allocation3 + $0x139] sm:$0xff]
        %v2307 = vld [vmem:[#allocation3 + $0x141] sm:$0xff]
        %v2308 = vld [vmem:[#allocation3 + $0x151] sm:$0xff]
        %v2309 = vld [vmem:[#allocation3 + $0x159] sm:$0xff]
        %v2310 = vld [vmem:[#allocation3 + $0x169] sm:$0xff]
        %v2311 = vld [vmem:[#allocation3 + $0x171] sm:$0xff]
        %v2312 = vld [vmem:[%s4 + $0x4] sm:$0xf]
        %2313 = vmatpush.xpose.msra.mxu0 %v2295
        %2314 = vmatpush.xpose.msra.mxu0 %v2294
        %2315 = vmatpush.xpose.msra.mxu0 %v2293
        %2316 = vmatpush.xpose.msra.mxu0 %v2292
        %2317 = vmatpush.xpose.msra.mxu0 %v2291
        %2318 = vmatpush.xpose.msra.mxu0 %v2290
        %2319 = vmatpush.xpose.msra.mxu0 %v2289
        %2320 = vmatpush.xpose.msra.mxu0 %v2288
        %2321 = vmatpush.xpose.msra.mxu0 %v2287
        %2322 = vmatpush.xpose.msra.mxu0 %v2286
        %2323 = vmatpush.xpose.msra.mxu0 %v2285
        %2324 = vmatpush.xpose.msra.mxu0 %v2284
        %2325 = vmatpush.xpose.msra.mxu0 %v2283
        %2326 = vmatpush.xpose.msra.mxu0 %v2282
        %2327 = vmatpush.xpose.msra.mxu0 %v2281
        %2328 = vmatpush.xpose.msra.mxu0 %v2280
        %2329 = vmatmul.f32.gmra.mxu0 %v2312
        %v2330 = vpop.f32.mrf.mxu0
        %v2331 = vadd.f32 0.0, %v2330
        %2332 = vdwg.mxu0
        %2333 = vmatpush.xpose.msra.mxu0 %v2311
        %2334 = vmatpush.xpose.msra.mxu0 %v2310
        %2335 = vmatpush.xpose.msra.mxu0 %v2309
        %2336 = vmatpush.xpose.msra.mxu0 %v2308
        %2337 = vmatpush.xpose.msra.mxu0 %v2307
        %2338 = vmatpush.xpose.msra.mxu0 %v2306
        %2339 = vmatpush.xpose.msra.mxu0 %v2305
        %2340 = vmatpush.xpose.msra.mxu0 %v2304
        %2341 = vmatpush.xpose.msra.mxu0 %v2303
        %2342 = vmatpush.xpose.msra.mxu0 %v2302
        %2343 = vmatpush.xpose.msra.mxu0 %v2301
        %2344 = vmatpush.xpose.msra.mxu0 %v2300
        %2345 = vmatpush.xpose.msra.mxu0 %v2299
        %2346 = vmatpush.xpose.msra.mxu0 %v2298
        %2347 = vmatpush.xpose.msra.mxu0 %v2297
        %2348 = vmatpush.xpose.msra.mxu0 %v2296
        %2349 = vmatmul.f32.gmra.mxu0 %v2312
        %v2350 = vpop.f32.mrf.mxu0
        %v2351 = vadd.f32 0.0, %v2350
        %2352 = vdwg.mxu0
        %2353 = vmatpush.xpose.msra.mxu0 %v2262
        %2354 = vmatpush.xpose.msra.mxu0 %v2261
        %2355 = vmatpush.xpose.msra.mxu0 %v2260
        %2356 = vmatpush.xpose.msra.mxu0 %v2259
        %2357 = vmatpush.xpose.msra.mxu0 %v2258
        %2358 = vmatpush.xpose.msra.mxu0 %v2257
        %2359 = vmatpush.xpose.msra.mxu0 %v2256
        %2360 = vmatpush.xpose.msra.mxu0 %v2255
        %2361 = vmatpush.xpose.msra.mxu0 %v2254
        %2362 = vmatpush.xpose.msra.mxu0 %v2253
        %2363 = vmatpush.xpose.msra.mxu0 %v2252
        %2364 = vmatpush.xpose.msra.mxu0 %v2251
        %2365 = vmatpush.xpose.msra.mxu0 %v2250
        %2366 = vmatpush.xpose.msra.mxu0 %v2249
        %2367 = vmatpush.xpose.msra.mxu0 %v2248
        %2368 = vmatpush.xpose.msra.mxu0 %v2247
        %2369 = vmatmul.f32.gmra.mxu0 %v2279
        %v2370 = vpop.f32.mrf.mxu0
        %v2371 = vadd.f32 %v2331, %v2370
        %2372 = vdwg.mxu0
        %2373 = vmatpush.xpose.msra.mxu0 %v2278
        %2374 = vmatpush.xpose.msra.mxu0 %v2277
        %2375 = vmatpush.xpose.msra.mxu0 %v2276
        %2376 = vmatpush.xpose.msra.mxu0 %v2275
        %2377 = vmatpush.xpose.msra.mxu0 %v2274
        %2378 = vmatpush.xpose.msra.mxu0 %v2273
        %2379 = vmatpush.xpose.msra.mxu0 %v2272
        %2380 = vmatpush.xpose.msra.mxu0 %v2271
        %2381 = vmatpush.xpose.msra.mxu0 %v2270
        %2382 = vmatpush.xpose.msra.mxu0 %v2269
        %2383 = vmatpush.xpose.msra.mxu0 %v2268
        %2384 = vmatpush.xpose.msra.mxu0 %v2267
        %2385 = vmatpush.xpose.msra.mxu0 %v2266
        %2386 = vmatpush.xpose.msra.mxu0 %v2265
        %2387 = vmatpush.xpose.msra.mxu0 %v2264
        %2388 = vmatpush.xpose.msra.mxu0 %v2263
        %2389 = vmatmul.f32.gmra.mxu0 %v2279
        %v2390 = vpop.f32.mrf.mxu0
        %v2391 = vadd.f32 %v2351, %v2390
        %2392 = vdwg.mxu0
        %v2393 = vld [vmem:[#allocation3 + $0x2] sm:$0xff]
        %v2394 = vld [vmem:[#allocation3 + $0xa] sm:$0xff]
        %v2395 = vld [vmem:[#allocation3 + $0x1a] sm:$0xff]
        %v2396 = vld [vmem:[#allocation3 + $0x22] sm:$0xff]
        %v2397 = vld [vmem:[#allocation3 + $0x32] sm:$0xff]
        %v2398 = vld [vmem:[#allocation3 + $0x3a] sm:$0xff]
        %v2399 = vld [vmem:[#allocation3 + $0x4a] sm:$0xff]
        %v2400 = vld [vmem:[#allocation3 + $0x52] sm:$0xff]
        %v2401 = vld [vmem:[#allocation3 + $0x62] sm:$0xff]
        %v2402 = vld [vmem:[#allocation3 + $0x6a] sm:$0xff]
        %v2403 = vld [vmem:[#allocation3 + $0x7a] sm:$0xff]
        %v2404 = vld [vmem:[#allocation3 + $0x82] sm:$0xff]
        %v2405 = vld [vmem:[#allocation3 + $0x92] sm:$0xff]
        %v2406 = vld [vmem:[#allocation3 + $0x9a] sm:$0xff]
        %v2407 = vld [vmem:[#allocation3 + $0xaa] sm:$0xff]
        %v2408 = vld [vmem:[#allocation3 + $0xb2] sm:$0xff]
        %v2409 = vld [vmem:[#allocation3 + $0xc2] sm:$0xff]
        %v2410 = vld [vmem:[#allocation3 + $0xca] sm:$0xff]
        %v2411 = vld [vmem:[#allocation3 + $0xda] sm:$0xff]
        %v2412 = vld [vmem:[#allocation3 + $0xe2] sm:$0xff]
        %v2413 = vld [vmem:[#allocation3 + $0xf2] sm:$0xff]
        %v2414 = vld [vmem:[#allocation3 + $0xfa] sm:$0xff]
        %v2415 = vld [vmem:[#allocation3 + $0x10a] sm:$0xff]
        %v2416 = vld [vmem:[#allocation3 + $0x112] sm:$0xff]
        %v2417 = vld [vmem:[#allocation3 + $0x122] sm:$0xff]
        %v2418 = vld [vmem:[#allocation3 + $0x12a] sm:$0xff]
        %v2419 = vld [vmem:[#allocation3 + $0x13a] sm:$0xff]
        %v2420 = vld [vmem:[#allocation3 + $0x142] sm:$0xff]
        %v2421 = vld [vmem:[#allocation3 + $0x152] sm:$0xff]
        %v2422 = vld [vmem:[#allocation3 + $0x15a] sm:$0xff]
        %v2423 = vld [vmem:[#allocation3 + $0x16a] sm:$0xff]
        %v2424 = vld [vmem:[#allocation3 + $0x172] sm:$0xff]
        %v2425 = vld [vmem:[%s4 + $0x8] sm:$0xf]
        %2426 = vmatpush.xpose.msra.mxu0 %v2408
        %2427 = vmatpush.xpose.msra.mxu0 %v2407
        %2428 = vmatpush.xpose.msra.mxu0 %v2406
        %2429 = vmatpush.xpose.msra.mxu0 %v2405
        %2430 = vmatpush.xpose.msra.mxu0 %v2404
        %2431 = vmatpush.xpose.msra.mxu0 %v2403
        %2432 = vmatpush.xpose.msra.mxu0 %v2402
        %2433 = vmatpush.xpose.msra.mxu0 %v2401
        %2434 = vmatpush.xpose.msra.mxu0 %v2400
        %2435 = vmatpush.xpose.msra.mxu0 %v2399
        %2436 = vmatpush.xpose.msra.mxu0 %v2398
        %2437 = vmatpush.xpose.msra.mxu0 %v2397
        %2438 = vmatpush.xpose.msra.mxu0 %v2396
        %2439 = vmatpush.xpose.msra.mxu0 %v2395
        %2440 = vmatpush.xpose.msra.mxu0 %v2394
        %2441 = vmatpush.xpose.msra.mxu0 %v2393
        %2442 = vmatmul.f32.gmra.mxu0 %v2425
        %v2443 = vpop.f32.mrf.mxu0
        %v2444 = vadd.f32 0.0, %v2443
        %2445 = vdwg.mxu0
        %2446 = vmatpush.xpose.msra.mxu0 %v2424
        %2447 = vmatpush.xpose.msra.mxu0 %v2423
        %2448 = vmatpush.xpose.msra.mxu0 %v2422
        %2449 = vmatpush.xpose.msra.mxu0 %v2421
        %2450 = vmatpush.xpose.msra.mxu0 %v2420
        %2451 = vmatpush.xpose.msra.mxu0 %v2419
        %2452 = vmatpush.xpose.msra.mxu0 %v2418
        %2453 = vmatpush.xpose.msra.mxu0 %v2417
        %2454 = vmatpush.xpose.msra.mxu0 %v2416
        %2455 = vmatpush.xpose.msra.mxu0 %v2415
        %2456 = vmatpush.xpose.msra.mxu0 %v2414
        %2457 = vmatpush.xpose.msra.mxu0 %v2413
        %2458 = vmatpush.xpose.msra.mxu0 %v2412
        %2459 = vmatpush.xpose.msra.mxu0 %v2411
        %2460 = vmatpush.xpose.msra.mxu0 %v2410
        %2461 = vmatpush.xpose.msra.mxu0 %v2409
        %2462 = vmatmul.f32.gmra.mxu0 %v2425
        %v2463 = vpop.f32.mrf.mxu0
        %v2464 = vadd.f32 0.0, %v2463
        %2465 = vdwg.mxu0
        %v2466 = vadd.f32 %v2371, %v2444
        %v2467 = vadd.f32 %v2391, %v2464
        %v2468 = vld [vmem:[%s2213] sm:$0xff]
        %v2469 = vld [vmem:[%s2213 + $0x8] sm:$0xff]
        %v2470 = vld [vmem:[%s2213 + $0x18] sm:$0xff]
        %v2471 = vld [vmem:[%s2213 + $0x20] sm:$0xff]
        %v2472 = vld [vmem:[%s2213 + $0x30] sm:$0xff]
        %v2473 = vld [vmem:[%s2213 + $0x38] sm:$0xff]
        %v2474 = vld [vmem:[%s2213 + $0x48] sm:$0xff]
        %v2475 = vld [vmem:[%s2213 + $0x50] sm:$0xff]
        %v2476 = vld [vmem:[%s2213 + $0x60] sm:$0xff]
        %v2477 = vld [vmem:[%s2213 + $0x68] sm:$0xff]
        %v2478 = vld [vmem:[%s2213 + $0x78] sm:$0xff]
        %v2479 = vld [vmem:[%s2213 + $0x80] sm:$0xff]
        %v2480 = vld [vmem:[%s2213 + $0x90] sm:$0xff]
        %v2481 = vld [vmem:[%s2213 + $0x98] sm:$0xff]
        %v2482 = vld [vmem:[%s2213 + $0xa8] sm:$0xff]
        %v2483 = vld [vmem:[%s2213 + $0xb0] sm:$0xff]
        %v2484 = vld [vmem:[%s2213 + $0xc0] sm:$0xff]
        %v2485 = vld [vmem:[%s2213 + $0xc8] sm:$0xff]
        %v2486 = vld [vmem:[%s2213 + $0xd8] sm:$0xff]
        %v2487 = vld [vmem:[%s2213 + $0xe0] sm:$0xff]
        %v2488 = vld [vmem:[%s2213 + $0xf0] sm:$0xff]
        %v2489 = vld [vmem:[%s2213 + $0xf8] sm:$0xff]
        %v2490 = vld [vmem:[%s2213 + $0x108] sm:$0xff]
        %v2491 = vld [vmem:[%s2213 + $0x110] sm:$0xff]
        %v2492 = vld [vmem:[%s2213 + $0x120] sm:$0xff]
        %v2493 = vld [vmem:[%s2213 + $0x128] sm:$0xff]
        %v2494 = vld [vmem:[%s2213 + $0x138] sm:$0xff]
        %v2495 = vld [vmem:[%s2213 + $0x140] sm:$0xff]
        %v2496 = vld [vmem:[%s2213 + $0x150] sm:$0xff]
        %v2497 = vld [vmem:[%s2213 + $0x158] sm:$0xff]
        %v2498 = vld [vmem:[%s2213 + $0x168] sm:$0xff]
        %v2499 = vld [vmem:[%s2213 + $0x170] sm:$0xff]
        %v2500 = vld [vmem:[%s4 + $0xc] sm:$0xf]
        %2501 = vmatpush.xpose.msra.mxu0 %v2483
        %2502 = vmatpush.xpose.msra.mxu0 %v2482
        %2503 = vmatpush.xpose.msra.mxu0 %v2481
        %2504 = vmatpush.xpose.msra.mxu0 %v2480
        %2505 = vmatpush.xpose.msra.mxu0 %v2479
        %2506 = vmatpush.xpose.msra.mxu0 %v2478
        %2507 = vmatpush.xpose.msra.mxu0 %v2477
        %2508 = vmatpush.xpose.msra.mxu0 %v2476
        %2509 = vmatpush.xpose.msra.mxu0 %v2475
        %2510 = vmatpush.xpose.msra.mxu0 %v2474
        %2511 = vmatpush.xpose.msra.mxu0 %v2473
        %2512 = vmatpush.xpose.msra.mxu0 %v2472
        %2513 = vmatpush.xpose.msra.mxu0 %v2471
        %2514 = vmatpush.xpose.msra.mxu0 %v2470
        %2515 = vmatpush.xpose.msra.mxu0 %v2469
        %2516 = vmatpush.xpose.msra.mxu0 %v2468
        %2517 = vmatmul.f32.gmra.mxu0 %v2500
        %v2518 = vpop.f32.mrf.mxu0
        %v2519 = vadd.f32 0.0, %v2518
        %2520 = vdwg.mxu0
        %2521 = vmatpush.xpose.msra.mxu0 %v2499
        %2522 = vmatpush.xpose.msra.mxu0 %v2498
        %2523 = vmatpush.xpose.msra.mxu0 %v2497
        %2524 = vmatpush.xpose.msra.mxu0 %v2496
        %2525 = vmatpush.xpose.msra.mxu0 %v2495
        %2526 = vmatpush.xpose.msra.mxu0 %v2494
        %2527 = vmatpush.xpose.msra.mxu0 %v2493
        %2528 = vmatpush.xpose.msra.mxu0 %v2492
        %2529 = vmatpush.xpose.msra.mxu0 %v2491
        %2530 = vmatpush.xpose.msra.mxu0 %v2490
        %2531 = vmatpush.xpose.msra.mxu0 %v2489
        %2532 = vmatpush.xpose.msra.mxu0 %v2488
        %2533 = vmatpush.xpose.msra.mxu0 %v2487
        %2534 = vmatpush.xpose.msra.mxu0 %v2486
        %2535 = vmatpush.xpose.msra.mxu0 %v2485
        %2536 = vmatpush.xpose.msra.mxu0 %v2484
        %2537 = vmatmul.f32.gmra.mxu0 %v2500
        %v2538 = vpop.f32.mrf.mxu0
        %v2539 = vadd.f32 0.0, %v2538
        %2540 = vdwg.mxu0
        %v2541 = vadd.f32 %v2466, %v2519
        %v2542 = vadd.f32 %v2467, %v2539
        %v2543 = vld [vmem:[%s2213 + $0x1] sm:$0xff]
        %v2544 = vld [vmem:[%s2213 + $0x9] sm:$0xff]
        %v2545 = vld [vmem:[%s2213 + $0x19] sm:$0xff]
        %v2546 = vld [vmem:[%s2213 + $0x21] sm:$0xff]
        %v2547 = vld [vmem:[%s2213 + $0x31] sm:$0xff]
        %v2548 = vld [vmem:[%s2213 + $0x39] sm:$0xff]
        %v2549 = vld [vmem:[%s2213 + $0x49] sm:$0xff]
        %v2550 = vld [vmem:[%s2213 + $0x51] sm:$0xff]
        %v2551 = vld [vmem:[%s2213 + $0x61] sm:$0xff]
        %v2552 = vld [vmem:[%s2213 + $0x69] sm:$0xff]
        %v2553 = vld [vmem:[%s2213 + $0x79] sm:$0xff]
        %v2554 = vld [vmem:[%s2213 + $0x81] sm:$0xff]
        %v2555 = vld [vmem:[%s2213 + $0x91] sm:$0xff]
        %v2556 = vld [vmem:[%s2213 + $0x99] sm:$0xff]
        %v2557 = vld [vmem:[%s2213 + $0xa9] sm:$0xff]
        %v2558 = vld [vmem:[%s2213 + $0xb1] sm:$0xff]
        %v2559 = vld [vmem:[%s2213 + $0xc1] sm:$0xff]
        %v2560 = vld [vmem:[%s2213 + $0xc9] sm:$0xff]
        %v2561 = vld [vmem:[%s2213 + $0xd9] sm:$0xff]
        %v2562 = vld [vmem:[%s2213 + $0xe1] sm:$0xff]
        %v2563 = vld [vmem:[%s2213 + $0xf1] sm:$0xff]
        %v2564 = vld [vmem:[%s2213 + $0xf9] sm:$0xff]
        %v2565 = vld [vmem:[%s2213 + $0x109] sm:$0xff]
        %v2566 = vld [vmem:[%s2213 + $0x111] sm:$0xff]
        %v2567 = vld [vmem:[%s2213 + $0x121] sm:$0xff]
        %v2568 = vld [vmem:[%s2213 + $0x129] sm:$0xff]
        %v2569 = vld [vmem:[%s2213 + $0x139] sm:$0xff]
        %v2570 = vld [vmem:[%s2213 + $0x141] sm:$0xff]
        %v2571 = vld [vmem:[%s2213 + $0x151] sm:$0xff]
        %v2572 = vld [vmem:[%s2213 + $0x159] sm:$0xff]
        %v2573 = vld [vmem:[%s2213 + $0x169] sm:$0xff]
        %v2574 = vld [vmem:[%s2213 + $0x171] sm:$0xff]
        %v2575 = vld [vmem:[%s4 + $0x10] sm:$0xf]
        %2576 = vmatpush.xpose.msra.mxu0 %v2558
        %2577 = vmatpush.xpose.msra.mxu0 %v2557
        %2578 = vmatpush.xpose.msra.mxu0 %v2556
        %2579 = vmatpush.xpose.msra.mxu0 %v2555
        %2580 = vmatpush.xpose.msra.mxu0 %v2554
        %2581 = vmatpush.xpose.msra.mxu0 %v2553
        %2582 = vmatpush.xpose.msra.mxu0 %v2552
        %2583 = vmatpush.xpose.msra.mxu0 %v2551
        %2584 = vmatpush.xpose.msra.mxu0 %v2550
        %2585 = vmatpush.xpose.msra.mxu0 %v2549
        %2586 = vmatpush.xpose.msra.mxu0 %v2548
        %2587 = vmatpush.xpose.msra.mxu0 %v2547
        %2588 = vmatpush.xpose.msra.mxu0 %v2546
        %2589 = vmatpush.xpose.msra.mxu0 %v2545
        %2590 = vmatpush.xpose.msra.mxu0 %v2544
        %2591 = vmatpush.xpose.msra.mxu0 %v2543
        %2592 = vmatmul.f32.gmra.mxu0 %v2575
        %v2593 = vpop.f32.mrf.mxu0
        %v2594 = vadd.f32 0.0, %v2593
        %2595 = vdwg.mxu0
        %2596 = vmatpush.xpose.msra.mxu0 %v2574
        %2597 = vmatpush.xpose.msra.mxu0 %v2573
        %2598 = vmatpush.xpose.msra.mxu0 %v2572
        %2599 = vmatpush.xpose.msra.mxu0 %v2571
        %2600 = vmatpush.xpose.msra.mxu0 %v2570
        %2601 = vmatpush.xpose.msra.mxu0 %v2569
        %2602 = vmatpush.xpose.msra.mxu0 %v2568
        %2603 = vmatpush.xpose.msra.mxu0 %v2567
        %2604 = vmatpush.xpose.msra.mxu0 %v2566
        %2605 = vmatpush.xpose.msra.mxu0 %v2565
        %2606 = vmatpush.xpose.msra.mxu0 %v2564
        %2607 = vmatpush.xpose.msra.mxu0 %v2563
        %2608 = vmatpush.xpose.msra.mxu0 %v2562
        %2609 = vmatpush.xpose.msra.mxu0 %v2561
        %2610 = vmatpush.xpose.msra.mxu0 %v2560
        %2611 = vmatpush.xpose.msra.mxu0 %v2559
        %2612 = vmatmul.f32.gmra.mxu0 %v2575
        %v2613 = vpop.f32.mrf.mxu0
        %v2614 = vadd.f32 0.0, %v2613
        %2615 = vdwg.mxu0
        %v2616 = vadd.f32 %v2541, %v2594
        %v2617 = vadd.f32 %v2542, %v2614
        %v2618 = vld [vmem:[%s2213 + $0x2] sm:$0xff]
        %v2619 = vld [vmem:[%s2213 + $0xa] sm:$0xff]
        %v2620 = vld [vmem:[%s2213 + $0x1a] sm:$0xff]
        %v2621 = vld [vmem:[%s2213 + $0x22] sm:$0xff]
        %v2622 = vld [vmem:[%s2213 + $0x32] sm:$0xff]
        %v2623 = vld [vmem:[%s2213 + $0x3a] sm:$0xff]
        %v2624 = vld [vmem:[%s2213 + $0x4a] sm:$0xff]
        %v2625 = vld [vmem:[%s2213 + $0x52] sm:$0xff]
        %v2626 = vld [vmem:[%s2213 + $0x62] sm:$0xff]
        %v2627 = vld [vmem:[%s2213 + $0x6a] sm:$0xff]
        %v2628 = vld [vmem:[%s2213 + $0x7a] sm:$0xff]
        %v2629 = vld [vmem:[%s2213 + $0x82] sm:$0xff]
        %v2630 = vld [vmem:[%s2213 + $0x92] sm:$0xff]
        %v2631 = vld [vmem:[%s2213 + $0x9a] sm:$0xff]
        %v2632 = vld [vmem:[%s2213 + $0xaa] sm:$0xff]
        %v2633 = vld [vmem:[%s2213 + $0xb2] sm:$0xff]
        %v2634 = vld [vmem:[%s2213 + $0xc2] sm:$0xff]
        %v2635 = vld [vmem:[%s2213 + $0xca] sm:$0xff]
        %v2636 = vld [vmem:[%s2213 + $0xda] sm:$0xff]
        %v2637 = vld [vmem:[%s2213 + $0xe2] sm:$0xff]
        %v2638 = vld [vmem:[%s2213 + $0xf2] sm:$0xff]
        %v2639 = vld [vmem:[%s2213 + $0xfa] sm:$0xff]
        %v2640 = vld [vmem:[%s2213 + $0x10a] sm:$0xff]
        %v2641 = vld [vmem:[%s2213 + $0x112] sm:$0xff]
        %v2642 = vld [vmem:[%s2213 + $0x122] sm:$0xff]
        %v2643 = vld [vmem:[%s2213 + $0x12a] sm:$0xff]
        %v2644 = vld [vmem:[%s2213 + $0x13a] sm:$0xff]
        %v2645 = vld [vmem:[%s2213 + $0x142] sm:$0xff]
        %v2646 = vld [vmem:[%s2213 + $0x152] sm:$0xff]
        %v2647 = vld [vmem:[%s2213 + $0x15a] sm:$0xff]
        %v2648 = vld [vmem:[%s2213 + $0x16a] sm:$0xff]
        %v2649 = vld [vmem:[%s2213 + $0x172] sm:$0xff]
        %v2650 = vld [vmem:[%s4 + $0x14] sm:$0xf]
        %2651 = vmatpush.xpose.msra.mxu0 %v2633
        %2652 = vmatpush.xpose.msra.mxu0 %v2632
        %2653 = vmatpush.xpose.msra.mxu0 %v2631
        %2654 = vmatpush.xpose.msra.mxu0 %v2630
        %2655 = vmatpush.xpose.msra.mxu0 %v2629
        %2656 = vmatpush.xpose.msra.mxu0 %v2628
        %2657 = vmatpush.xpose.msra.mxu0 %v2627
        %2658 = vmatpush.xpose.msra.mxu0 %v2626
        %2659 = vmatpush.xpose.msra.mxu0 %v2625
        %2660 = vmatpush.xpose.msra.mxu0 %v2624
        %2661 = vmatpush.xpose.msra.mxu0 %v2623
        %2662 = vmatpush.xpose.msra.mxu0 %v2622
        %2663 = vmatpush.xpose.msra.mxu0 %v2621
        %2664 = vmatpush.xpose.msra.mxu0 %v2620
        %2665 = vmatpush.xpose.msra.mxu0 %v2619
        %2666 = vmatpush.xpose.msra.mxu0 %v2618
        %2667 = vmatmul.f32.gmra.mxu0 %v2650
        %v2668 = vpop.f32.mrf.mxu0
        %v2669 = vadd.f32 0.0, %v2668
        %2670 = vdwg.mxu0
        %2671 = vmatpush.xpose.msra.mxu0 %v2649
        %2672 = vmatpush.xpose.msra.mxu0 %v2648
        %2673 = vmatpush.xpose.msra.mxu0 %v2647
        %2674 = vmatpush.xpose.msra.mxu0 %v2646
        %2675 = vmatpush.xpose.msra.mxu0 %v2645
        %2676 = vmatpush.xpose.msra.mxu0 %v2644
        %2677 = vmatpush.xpose.msra.mxu0 %v2643
        %2678 = vmatpush.xpose.msra.mxu0 %v2642
        %2679 = vmatpush.xpose.msra.mxu0 %v2641
        %2680 = vmatpush.xpose.msra.mxu0 %v2640
        %2681 = vmatpush.xpose.msra.mxu0 %v2639
        %2682 = vmatpush.xpose.msra.mxu0 %v2638
        %2683 = vmatpush.xpose.msra.mxu0 %v2637
        %2684 = vmatpush.xpose.msra.mxu0 %v2636
        %2685 = vmatpush.xpose.msra.mxu0 %v2635
        %2686 = vmatpush.xpose.msra.mxu0 %v2634
        %2687 = vmatmul.f32.gmra.mxu0 %v2650
        %v2688 = vpop.f32.mrf.mxu0
        %v2689 = vadd.f32 0.0, %v2688
        %2690 = vdwg.mxu0
        %v2691 = vadd.f32 %v2616, %v2669
        %v2692 = vadd.f32 %v2617, %v2689
        %s2693 = scalar_lea.vmem [#allocation3], 48
        %v2694 = vld [vmem:[%s2693] sm:$0xff]
        %v2695 = vld [vmem:[%s2693 + $0x8] sm:$0xff]
        %v2696 = vld [vmem:[%s2693 + $0x18] sm:$0xff]
        %v2697 = vld [vmem:[%s2693 + $0x20] sm:$0xff]
        %v2698 = vld [vmem:[%s2693 + $0x30] sm:$0xff]
        %v2699 = vld [vmem:[%s2693 + $0x38] sm:$0xff]
        %v2700 = vld [vmem:[%s2693 + $0x48] sm:$0xff]
        %v2701 = vld [vmem:[%s2693 + $0x50] sm:$0xff]
        %v2702 = vld [vmem:[%s2693 + $0x60] sm:$0xff]
        %v2703 = vld [vmem:[%s2693 + $0x68] sm:$0xff]
        %v2704 = vld [vmem:[%s2693 + $0x78] sm:$0xff]
        %v2705 = vld [vmem:[%s2693 + $0x80] sm:$0xff]
        %v2706 = vld [vmem:[%s2693 + $0x90] sm:$0xff]
        %v2707 = vld [vmem:[%s2693 + $0x98] sm:$0xff]
        %v2708 = vld [vmem:[%s2693 + $0xa8] sm:$0xff]
        %v2709 = vld [vmem:[%s2693 + $0xb0] sm:$0xff]
        %v2710 = vld [vmem:[%s2693 + $0xc0] sm:$0xff]
        %v2711 = vld [vmem:[%s2693 + $0xc8] sm:$0xff]
        %v2712 = vld [vmem:[%s2693 + $0xd8] sm:$0xff]
        %v2713 = vld [vmem:[%s2693 + $0xe0] sm:$0xff]
        %v2714 = vld [vmem:[%s2693 + $0xf0] sm:$0xff]
        %v2715 = vld [vmem:[%s2693 + $0xf8] sm:$0xff]
        %v2716 = vld [vmem:[%s2693 + $0x108] sm:$0xff]
        %v2717 = vld [vmem:[%s2693 + $0x110] sm:$0xff]
        %v2718 = vld [vmem:[%s2693 + $0x120] sm:$0xff]
        %v2719 = vld [vmem:[%s2693 + $0x128] sm:$0xff]
        %v2720 = vld [vmem:[%s2693 + $0x138] sm:$0xff]
        %v2721 = vld [vmem:[%s2693 + $0x140] sm:$0xff]
        %v2722 = vld [vmem:[%s2693 + $0x150] sm:$0xff]
        %v2723 = vld [vmem:[%s2693 + $0x158] sm:$0xff]
        %v2724 = vld [vmem:[%s2693 + $0x168] sm:$0xff]
        %v2725 = vld [vmem:[%s2693 + $0x170] sm:$0xff]
        %v2726 = vld [vmem:[%s4 + $0x18] sm:$0xf]
        %2727 = vmatpush.xpose.msra.mxu0 %v2709
        %2728 = vmatpush.xpose.msra.mxu0 %v2708
        %2729 = vmatpush.xpose.msra.mxu0 %v2707
        %2730 = vmatpush.xpose.msra.mxu0 %v2706
        %2731 = vmatpush.xpose.msra.mxu0 %v2705
        %2732 = vmatpush.xpose.msra.mxu0 %v2704
        %2733 = vmatpush.xpose.msra.mxu0 %v2703
        %2734 = vmatpush.xpose.msra.mxu0 %v2702
        %2735 = vmatpush.xpose.msra.mxu0 %v2701
        %2736 = vmatpush.xpose.msra.mxu0 %v2700
        %2737 = vmatpush.xpose.msra.mxu0 %v2699
        %2738 = vmatpush.xpose.msra.mxu0 %v2698
        %2739 = vmatpush.xpose.msra.mxu0 %v2697
        %2740 = vmatpush.xpose.msra.mxu0 %v2696
        %2741 = vmatpush.xpose.msra.mxu0 %v2695
        %2742 = vmatpush.xpose.msra.mxu0 %v2694
        %2743 = vmatmul.f32.gmra.mxu0 %v2726
        %v2744 = vpop.f32.mrf.mxu0
        %v2745 = vadd.f32 0.0, %v2744
        %2746 = vdwg.mxu0
        %2747 = vmatpush.xpose.msra.mxu0 %v2725
        %2748 = vmatpush.xpose.msra.mxu0 %v2724
        %2749 = vmatpush.xpose.msra.mxu0 %v2723
        %2750 = vmatpush.xpose.msra.mxu0 %v2722
        %2751 = vmatpush.xpose.msra.mxu0 %v2721
        %2752 = vmatpush.xpose.msra.mxu0 %v2720
        %2753 = vmatpush.xpose.msra.mxu0 %v2719
        %2754 = vmatpush.xpose.msra.mxu0 %v2718
        %2755 = vmatpush.xpose.msra.mxu0 %v2717
        %2756 = vmatpush.xpose.msra.mxu0 %v2716
        %2757 = vmatpush.xpose.msra.mxu0 %v2715
        %2758 = vmatpush.xpose.msra.mxu0 %v2714
        %2759 = vmatpush.xpose.msra.mxu0 %v2713
        %2760 = vmatpush.xpose.msra.mxu0 %v2712
        %2761 = vmatpush.xpose.msra.mxu0 %v2711
        %2762 = vmatpush.xpose.msra.mxu0 %v2710
        %2763 = vmatmul.f32.gmra.mxu0 %v2726
        %v2764 = vpop.f32.mrf.mxu0
        %v2765 = vadd.f32 0.0, %v2764
        %2766 = vdwg.mxu0
        %v2767 = vadd.f32 %v2691, %v2745
        %v2768 = vadd.f32 %v2692, %v2765
        %v2769 = vld [vmem:[%s2693 + $0x1] sm:$0xff]
        %v2770 = vld [vmem:[%s2693 + $0x9] sm:$0xff]
        %v2771 = vld [vmem:[%s2693 + $0x19] sm:$0xff]
        %v2772 = vld [vmem:[%s2693 + $0x21] sm:$0xff]
        %v2773 = vld [vmem:[%s2693 + $0x31] sm:$0xff]
        %v2774 = vld [vmem:[%s2693 + $0x39] sm:$0xff]
        %v2775 = vld [vmem:[%s2693 + $0x49] sm:$0xff]
        %v2776 = vld [vmem:[%s2693 + $0x51] sm:$0xff]
        %v2777 = vld [vmem:[%s2693 + $0x61] sm:$0xff]
        %v2778 = vld [vmem:[%s2693 + $0x69] sm:$0xff]
        %v2779 = vld [vmem:[%s2693 + $0x79] sm:$0xff]
        %v2780 = vld [vmem:[%s2693 + $0x81] sm:$0xff]
        %v2781 = vld [vmem:[%s2693 + $0x91] sm:$0xff]
        %v2782 = vld [vmem:[%s2693 + $0x99] sm:$0xff]
        %v2783 = vld [vmem:[%s2693 + $0xa9] sm:$0xff]
        %v2784 = vld [vmem:[%s2693 + $0xb1] sm:$0xff]
        %v2785 = vld [vmem:[%s2693 + $0xc1] sm:$0xff]
        %v2786 = vld [vmem:[%s2693 + $0xc9] sm:$0xff]
        %v2787 = vld [vmem:[%s2693 + $0xd9] sm:$0xff]
        %v2788 = vld [vmem:[%s2693 + $0xe1] sm:$0xff]
        %v2789 = vld [vmem:[%s2693 + $0xf1] sm:$0xff]
        %v2790 = vld [vmem:[%s2693 + $0xf9] sm:$0xff]
        %v2791 = vld [vmem:[%s2693 + $0x109] sm:$0xff]
        %v2792 = vld [vmem:[%s2693 + $0x111] sm:$0xff]
        %v2793 = vld [vmem:[%s2693 + $0x121] sm:$0xff]
        %v2794 = vld [vmem:[%s2693 + $0x129] sm:$0xff]
        %v2795 = vld [vmem:[%s2693 + $0x139] sm:$0xff]
        %v2796 = vld [vmem:[%s2693 + $0x141] sm:$0xff]
        %v2797 = vld [vmem:[%s2693 + $0x151] sm:$0xff]
        %v2798 = vld [vmem:[%s2693 + $0x159] sm:$0xff]
        %v2799 = vld [vmem:[%s2693 + $0x169] sm:$0xff]
        %v2800 = vld [vmem:[%s2693 + $0x171] sm:$0xff]
        %v2801 = vld [vmem:[%s4 + $0x1c] sm:$0xf]
        %2802 = vmatpush.xpose.msra.mxu0 %v2784
        %2803 = vmatpush.xpose.msra.mxu0 %v2783
        %2804 = vmatpush.xpose.msra.mxu0 %v2782
        %2805 = vmatpush.xpose.msra.mxu0 %v2781
        %2806 = vmatpush.xpose.msra.mxu0 %v2780
        %2807 = vmatpush.xpose.msra.mxu0 %v2779
        %2808 = vmatpush.xpose.msra.mxu0 %v2778
        %2809 = vmatpush.xpose.msra.mxu0 %v2777
        %2810 = vmatpush.xpose.msra.mxu0 %v2776
        %2811 = vmatpush.xpose.msra.mxu0 %v2775
        %2812 = vmatpush.xpose.msra.mxu0 %v2774
        %2813 = vmatpush.xpose.msra.mxu0 %v2773
        %2814 = vmatpush.xpose.msra.mxu0 %v2772
        %2815 = vmatpush.xpose.msra.mxu0 %v2771
        %2816 = vmatpush.xpose.msra.mxu0 %v2770
        %2817 = vmatpush.xpose.msra.mxu0 %v2769
        %2818 = vmatmul.f32.gmra.mxu0 %v2801
        %v2819 = vpop.f32.mrf.mxu0
        %v2820 = vadd.f32 0.0, %v2819
        %2821 = vdwg.mxu0
        %2822 = vmatpush.xpose.msra.mxu0 %v2800
        %2823 = vmatpush.xpose.msra.mxu0 %v2799
        %2824 = vmatpush.xpose.msra.mxu0 %v2798
        %2825 = vmatpush.xpose.msra.mxu0 %v2797
        %2826 = vmatpush.xpose.msra.mxu0 %v2796
        %2827 = vmatpush.xpose.msra.mxu0 %v2795
        %2828 = vmatpush.xpose.msra.mxu0 %v2794
        %2829 = vmatpush.xpose.msra.mxu0 %v2793
        %2830 = vmatpush.xpose.msra.mxu0 %v2792
        %2831 = vmatpush.xpose.msra.mxu0 %v2791
        %2832 = vmatpush.xpose.msra.mxu0 %v2790
        %2833 = vmatpush.xpose.msra.mxu0 %v2789
        %2834 = vmatpush.xpose.msra.mxu0 %v2788
        %2835 = vmatpush.xpose.msra.mxu0 %v2787
        %2836 = vmatpush.xpose.msra.mxu0 %v2786
        %2837 = vmatpush.xpose.msra.mxu0 %v2785
        %2838 = vmatmul.f32.gmra.mxu0 %v2801
        %v2839 = vpop.f32.mrf.mxu0
        %v2840 = vadd.f32 0.0, %v2839
        %2841 = vdwg.mxu0
        %v2842 = vadd.f32 %v2767, %v2820
        %v2843 = vadd.f32 %v2768, %v2840
        %v2844 = vld [vmem:[%s2693 + $0x2] sm:$0xff]
        %v2845 = vld [vmem:[%s2693 + $0xa] sm:$0xff]
        %v2846 = vld [vmem:[%s2693 + $0x1a] sm:$0xff]
        %v2847 = vld [vmem:[%s2693 + $0x22] sm:$0xff]
        %v2848 = vld [vmem:[%s2693 + $0x32] sm:$0xff]
        %v2849 = vld [vmem:[%s2693 + $0x3a] sm:$0xff]
        %v2850 = vld [vmem:[%s2693 + $0x4a] sm:$0xff]
        %v2851 = vld [vmem:[%s2693 + $0x52] sm:$0xff]
        %v2852 = vld [vmem:[%s2693 + $0x62] sm:$0xff]
        %v2853 = vld [vmem:[%s2693 + $0x6a] sm:$0xff]
        %v2854 = vld [vmem:[%s2693 + $0x7a] sm:$0xff]
        %v2855 = vld [vmem:[%s2693 + $0x82] sm:$0xff]
        %v2856 = vld [vmem:[%s2693 + $0x92] sm:$0xff]
        %v2857 = vld [vmem:[%s2693 + $0x9a] sm:$0xff]
        %v2858 = vld [vmem:[%s2693 + $0xaa] sm:$0xff]
        %v2859 = vld [vmem:[%s2693 + $0xb2] sm:$0xff]
        %v2860 = vld [vmem:[%s2693 + $0xc2] sm:$0xff]
        %v2861 = vld [vmem:[%s2693 + $0xca] sm:$0xff]
        %v2862 = vld [vmem:[%s2693 + $0xda] sm:$0xff]
        %v2863 = vld [vmem:[%s2693 + $0xe2] sm:$0xff]
        %v2864 = vld [vmem:[%s2693 + $0xf2] sm:$0xff]
        %v2865 = vld [vmem:[%s2693 + $0xfa] sm:$0xff]
        %v2866 = vld [vmem:[%s2693 + $0x10a] sm:$0xff]
        %v2867 = vld [vmem:[%s2693 + $0x112] sm:$0xff]
        %v2868 = vld [vmem:[%s2693 + $0x122] sm:$0xff]
        %v2869 = vld [vmem:[%s2693 + $0x12a] sm:$0xff]
        %v2870 = vld [vmem:[%s2693 + $0x13a] sm:$0xff]
        %v2871 = vld [vmem:[%s2693 + $0x142] sm:$0xff]
        %v2872 = vld [vmem:[%s2693 + $0x152] sm:$0xff]
        %v2873 = vld [vmem:[%s2693 + $0x15a] sm:$0xff]
        %v2874 = vld [vmem:[%s2693 + $0x16a] sm:$0xff]
        %v2875 = vld [vmem:[%s2693 + $0x172] sm:$0xff]
        %v2876 = vld [vmem:[%s4 + $0x20] sm:$0xf]
        %2877 = vmatpush.xpose.msra.mxu0 %v2859
        %2878 = vmatpush.xpose.msra.mxu0 %v2858
        %2879 = vmatpush.xpose.msra.mxu0 %v2857
        %2880 = vmatpush.xpose.msra.mxu0 %v2856
        %2881 = vmatpush.xpose.msra.mxu0 %v2855
        %2882 = vmatpush.xpose.msra.mxu0 %v2854
        %2883 = vmatpush.xpose.msra.mxu0 %v2853
        %2884 = vmatpush.xpose.msra.mxu0 %v2852
        %2885 = vmatpush.xpose.msra.mxu0 %v2851
        %2886 = vmatpush.xpose.msra.mxu0 %v2850
        %2887 = vmatpush.xpose.msra.mxu0 %v2849
        %2888 = vmatpush.xpose.msra.mxu0 %v2848
        %2889 = vmatpush.xpose.msra.mxu0 %v2847
        %2890 = vmatpush.xpose.msra.mxu0 %v2846
        %2891 = vmatpush.xpose.msra.mxu0 %v2845
        %2892 = vmatpush.xpose.msra.mxu0 %v2844
        %2893 = vmatmul.f32.gmra.mxu0 %v2876
        %v2894 = vpop.f32.mrf.mxu0
        %v2895 = vadd.f32 0.0, %v2894
        %2896 = vdwg.mxu0
        %2897 = vmatpush.xpose.msra.mxu0 %v2875
        %2898 = vmatpush.xpose.msra.mxu0 %v2874
        %2899 = vmatpush.xpose.msra.mxu0 %v2873
        %2900 = vmatpush.xpose.msra.mxu0 %v2872
        %2901 = vmatpush.xpose.msra.mxu0 %v2871
        %2902 = vmatpush.xpose.msra.mxu0 %v2870
        %2903 = vmatpush.xpose.msra.mxu0 %v2869
        %2904 = vmatpush.xpose.msra.mxu0 %v2868
        %2905 = vmatpush.xpose.msra.mxu0 %v2867
        %2906 = vmatpush.xpose.msra.mxu0 %v2866
        %2907 = vmatpush.xpose.msra.mxu0 %v2865
        %2908 = vmatpush.xpose.msra.mxu0 %v2864
        %2909 = vmatpush.xpose.msra.mxu0 %v2863
        %2910 = vmatpush.xpose.msra.mxu0 %v2862
        %2911 = vmatpush.xpose.msra.mxu0 %v2861
        %2912 = vmatpush.xpose.msra.mxu0 %v2860
        %2913 = vmatmul.f32.gmra.mxu0 %v2876
        %v2914 = vpop.f32.mrf.mxu0
        %v2915 = vadd.f32 0.0, %v2914
        %2916 = vdwg.mxu0
        %v2917 = vadd.f32 %v2842, %v2895
        %v2918 = vadd.f32 %v2843, %v2915
        %v2919 = vld [vmem:[%s296] sm:$0xff]
        %v2920 = vld [vmem:[%s5] sm:$0xf]
        %2922 = vset.pattern.permute.xlu0 0
        %2923 = vperm.xlu0 %2922, %v2920
        %v2924 = vpop.permute.xlu0 %2923
        %v2927 = vperm.slane %v2919, 0
        %v2928 = vperm.slane %v2919, 4
        %v2931 = vperm.slane %v2927, 0
        %v2932 = vperm.slane %v2928, 0
        %v2933 = vmul.f32 %v2924, %v2931
        %v2934 = vmul.f32 %v2924, %v2932
        %v2935 = vadd.f32 %v2933, 0.0
        %v2936 = vadd.f32 %v2934, 0.0
        %2937 = vset.pattern.permute.xlu0 1
        %2938 = vperm.xlu0 %2937, %v2920
        %v2939 = vpop.permute.xlu0 %2938
        %v2941 = vperm.slane %v2919, 1
        %v2942 = vperm.slane %v2919, 5
        %v2945 = vperm.slane %v2941, 1
        %v2946 = vperm.slane %v2942, 1
        %v2947 = vmul.f32 %v2939, %v2945
        %v2948 = vmul.f32 %v2939, %v2946
        %v2949 = vadd.f32 %v2935, %v2947
        %v2950 = vadd.f32 %v2936, %v2948
        %2951 = vset.pattern.permute.xlu0 2
        %2952 = vperm.xlu0 %2951, %v2920
        %v2953 = vpop.permute.xlu0 %2952
        %v2955 = vperm.slane %v2919, 2
        %v2956 = vperm.slane %v2919, 6
        %v2959 = vperm.slane %v2955, 2
        %v2960 = vperm.slane %v2956, 2
        %v2961 = vmul.f32 %v2953, %v2959
        %v2962 = vmul.f32 %v2953, %v2960
        %v2963 = vadd.f32 %v2949, %v2961
        %v2964 = vadd.f32 %v2950, %v2962
        %2965 = vset.pattern.permute.xlu0 3
        %2966 = vperm.xlu0 %2965, %v2920
        %v2967 = vpop.permute.xlu0 %2966
        %v2969 = vperm.slane %v2919, 3
        %v2970 = vperm.slane %v2919, 7
        %v2973 = vperm.slane %v2969, 3
        %v2974 = vperm.slane %v2970, 3
        %v2975 = vmul.f32 %v2967, %v2973
        %v2976 = vmul.f32 %v2967, %v2974
        %v2977 = vadd.f32 %v2963, %v2975
        %v2978 = vadd.f32 %v2964, %v2976
        %v2979 = vadd.f32 %v2917, %v2977
        %v2980 = vadd.f32 %v2918, %v2978
        %v2981 = vld [vmem:[%s6] sm:$0xf]
        %2983 = vset.pattern.permute.xlu0 0
        %2984 = vperm.xlu0 %2983, %v2981
        %v2985 = vpop.permute.xlu0 %2984
        %v2987 = vadd.f32 %v2979, %v2985
        %v2988 = vadd.f32 %v2980, %v2985
        %v2991 = vrot.slane %v2988, 4
        %vm2992 = vcmask 1043456
        %v2993 = vsel %vm2992, %v2987, %v2991
        %2995 = vst [vmem:[%s286] sm:$0xff] %v2993
        %s2996 = sand.u32 %s186, 1
        %s2997 = scalar_lea.sflag [#allocation5], %s2996
        %s2998 = sand.u32 %s186, 1
        %s2999 = smul.addr %s2998, 8
        %s3000 = scalar_lea.vmem [#allocation4], %s2999
        // Predicated region
        $region49: #{tpu_custom_call.1} parent=47 // pred_check
          %p3001 = pneg %p196
        $region50: #{tpu_custom_call.1} parent=47 // pred_check_branch
          %3003 = sbr.rel (%p3001) target = $region52
        $region51: #{tpu_custom_call.1} parent=47 // pred_region
          %3005 = vsyncadd %s2997, 0
          %s3006 = smul.addr %s21, 2
          %s3007 = smul.addr %s3006, 4
          %s3008 = scalar_lea.hbm %s7, %s3007
          %s3010 = sshll.u32 %s3000, 4
          %s3011 = int_to_ptr.vmem [resolvable:$true] %s3010
          %s3012 = sshll.u32 %s3008, 4
          %s3013 = int_to_ptr.hbm [resolvable:$true] %s3012
          %3015 = dma.vmem_to_hbm [thread:$0]  %s3011, 128, %s3013, %s2997
        $region52: #{tpu_custom_call.1} parent=47 // pred_fallthru
          _
      $region48: #{tpu_custom_call.1} parent=5 // pred_fallthru
        _
      %p3016 = scmp.le.s32.totalorder 2, %s16
      // Predicated region
      $region53: #{tpu_custom_call.1} parent=5 // pred_check
        %p3017 = pneg %p3016
      $region54: #{tpu_custom_call.1} parent=5 // pred_check_branch
        %3019 = sbr.rel (%p3017) target = $region56
      $region55: #{tpu_custom_call.1} parent=5 // pred_region
        %s3020 = ssub.s32 %s16, 2
        // Predicated region
        $region57: #{tpu_custom_call.1} parent=55 // pred_check
          %p3021 = pneg %p202
        $region58: #{tpu_custom_call.1} parent=55 // pred_check_branch
          %3023 = sbr.rel (%p3021) target = $region60
        $region59: #{tpu_custom_call.1} parent=55 // pred_region
          %s3024 = sand.u32 %s187, 1
          %s3025 = scalar_lea.sflag [#allocation5], %s3024
          %s3026 = sand.u32 %s187, 1
          %s3027 = smul.addr %s3026, 8
          %s3028 = scalar_lea.vmem [#allocation4], %s3027
          %3030 = dma.done %s3025, 128
        $region60: #{tpu_custom_call.1} parent=55 // pred_fallthru
          _
      $region56: #{tpu_custom_call.1} parent=5 // pred_fallthru
        _
    $region6: #{tpu_custom_call.1} parent=1 // loop_footer
      %s20 = sadd.s32 1, %s16
    $region7: #{tpu_custom_call.1} parent=1 // loop_footer_branch
      %15 = sbr.rel target = $region3
    $region8: #{tpu_custom_call.1} parent=1 // loop_exit
      _
    %3031 = vsyncpa [#allocation5], 1
    %s3032 = scalar_lea.sflag [#allocation5], 1
    %3033 = vsyncpa %s3032, 1

</llo_original>
